<compile_context>
chip_gen: v5e
topology: v5e:2x2
jax: 0.10.0
libtpu: 0.0.40
codegen_flags: <defaults>
</compile_context>

<pallas_src>
import functools

import jax
import jax.numpy as jnp
import numpy as np
from jax import lax
from jax.experimental import pallas as pl
from jax.experimental.pallas import tpu as pltpu


def cbam3d_kernel(x_ref, w1_ref, w2_ref, taps_ref, o_ref, pool_scr, *, ksize):
    """One batch element per grid step.

    x_ref    : (C, D, HW)          bf16  input tile (batch dim squeezed away)
    w1_ref   : (Ch, C)             f32   first 1x1x1 conv of the channel MLP
    w2_ref   : (C, Ch)             f32   second 1x1x1 conv of the channel MLP
    taps_ref : (ksize, 2*HW, HW)   bf16  per-depth-tap Toeplitz blocks
    o_ref    : (C, D, HW)          f32   output tile
    pool_scr : (D + 2*pad, 2*HW)   f32   zero-depth-padded pooled maps (VMEM)
    """
    pad = ksize // 2
    C, D, HW = x_ref.shape

    # Load the tile once (bf16 DMA), upcast for all VPU math.
    xf = x_ref[...].astype(jnp.float32)                         # (C, D, HW)

    # ---- Channel attention (avg & max batched into one (C, 2) RHS) ---------
    avg_c = jnp.mean(xf, axis=2).mean(axis=1, keepdims=True)    # (C, 1)
    max_c = jnp.max(xf, axis=2).max(axis=1, keepdims=True)      # (C, 1)
    stats = jnp.concatenate([avg_c, max_c], axis=1)             # (C, 2)
    # Tiny MLP: two MXU dots (M=N=2).  Accepted as serial latency per review.
    h = jnp.maximum(
        jnp.dot(w1_ref[...], stats, preferred_element_type=jnp.float32), 0.0)  # (Ch, 2)
    z = jnp.dot(w2_ref[...], h, preferred_element_type=jnp.float32)            # (C, 2)
    attn_c = jax.nn.sigmoid(jnp.sum(z, axis=1, keepdims=True))  # (C, 1)

    # ---- Channel-scaled tensor, reused for pooling AND the output write ----
    # (x1 is never stored to / reloaded from memory; xf is dead after this.)
    wx = xf * attn_c[:, :, None]                                 # (C, D, HW)
    avg_s = jnp.mean(wx, axis=0)                                 # (D, HW)
    max_s = jnp.max(wx, axis=0)                                  # (D, HW)

    # ---- Spatial attention: 7x7x7 "same" conv over [avg-pool, max-pool] ----
    # Write pooled maps once into the zero-depth-padded scratch, then run
    # ksize accumulating matmuls on static slices — no concat/shift copies.
    zero_rows = jnp.zeros((pad, 2 * HW), pool_scr.dtype)
    pool_scr[0:pad, :] = zero_rows                      # zeroed every step so the
    pool_scr[pad + D:pad + D + pad, :] = zero_rows      # megacore grid split stays safe
    pool_scr[pad:pad + D, 0:HW] = avg_s                 # conv input channel 0 = avg
    pool_scr[pad:pad + D, HW:2 * HW] = max_s            # conv input channel 1 = max

    acc = jnp.zeros((D, HW), jnp.float32)
    for kd in range(ksize):                             # static unroll, ksize = 7
        lhs = pool_scr[kd:kd + D, :].astype(jnp.bfloat16)        # (D, 2*HW)
        acc = acc + jnp.dot(lhs, taps_ref[kd],
                            preferred_element_type=jnp.float32)  # MXU bf16 -> f32
    attn_s = jax.nn.sigmoid(acc)                        # (D, HW)

    # ---- Fused output: o = x * attn_c * attn_s = wx * attn_s ---------------
    o_ref[...] = (wx * attn_s[None, :, :]).astype(o_ref.dtype)


def precompute_spatial_taps(w_conv, H, W, dtype=jnp.bfloat16):
    """Turn the (1, 2, k, k, k) 'same'-padded conv3d weight into (k, 2*HW, HW)
    per-depth-tap 2-D Toeplitz blocks.

    Row block [kd, c] at row (h'*W + w'), column (h*W + w) holds
    w_conv[0, c, kd, h'-h+pad, w'-w+pad] (zero when the tap falls outside the
    kernel).  Built host-side in numpy with CONCRETE weights; call this ONCE
    per weight (outside jit) and reuse the result — do not rebuild per forward.
    """
    w = np.asarray(jax.device_get(w_conv), dtype=np.float32)    # (1, 2, k, k, k)
    k = w.shape[-1]
    pad = k // 2

    def sel(n):
        src = np.arange(n)[:, None]
        dst = np.arange(n)[None, :]
        off = src - dst + pad                                   # tap index on this axis
        valid = (off >= 0) & (off < k)
        return np.where(valid, off, 0), valid

    oh, vh = sel(H)
    ow, vw = sel(W)
    mask = vh[:, None, :, None] & vw[None, :, None, :]          # (H, W, H, W)
    HW = H * W
    blocks = np.zeros((k, 2, HW, HW), np.float32)
    for kd in range(k):
        for c in range(2):
            wc = w[0, c, kd]                                    # (k, k)
            m = wc[oh[:, None, :, None], ow[None, :, None, :]]  # (H, W, H, W)
            blocks[kd, c] = np.where(mask, m, 0.0).reshape(HW, HW)
    return jnp.asarray(blocks.reshape(k, 2 * HW, HW), dtype=dtype)


def _build_cbam3d_call(B, C, D, HW, Ch, ksize, single_buffer_consts):
    pad = ksize // 2
    const_kw = {"pipeline_mode": pl.Buffered(1)} if single_buffer_consts else {}
    grid_spec = pltpu.PrefetchScalarGridSpec(
        num_scalar_prefetch=0,
        grid=(B,),
        in_specs=[
            pl.BlockSpec((None, C, D, HW), lambda b: (b, 0, 0, 0)),
            pl.BlockSpec((Ch, C), lambda b: (0, 0), **const_kw),
            pl.BlockSpec((C, Ch), lambda b: (0, 0), **const_kw),
            pl.BlockSpec((ksize, 2 * HW, HW), lambda b: (0, 0, 0), **const_kw),
        ],
        out_specs=pl.BlockSpec((None, C, D, HW), lambda b: (b, 0, 0, 0)),
        scratch_shapes=[pltpu.VMEM((D + 2 * pad, 2 * HW), jnp.float32)],
    )
    return pl.pallas_call(
        functools.partial(cbam3d_kernel, ksize=ksize),
        out_shape=jax.ShapeDtypeStruct((B, C, D, HW), jnp.float32),
        grid_spec=grid_spec,
        compiler_params=pltpu.CompilerParams(
            dimension_semantics=("parallel",),
        ),
    )


def cbam3d_pallas(x, w1, w2, taps):
    """x: (B, C, D, H, W); w1: (C//r, C); w2: (C, C//r); taps from
    precompute_spatial_taps (computed once per conv weight)."""
    B, C, D, H, W = x.shape
    HW = H * W
    ksize = taps.shape[0]
    Ch = w1.shape[0]

    # bf16 input halves the dominant HBM read (the kernel is DMA-bound).  In a
    # real model the producer should hand bf16 directly; the cast stands in.
    x4 = x.reshape(B, C, D, HW)
    if x4.dtype != jnp.bfloat16:
        x4 = x4.astype(jnp.bfloat16)
    w1f = w1.astype(jnp.float32)
    w2f = w2.astype(jnp.float32)

    try:
        out = _build_cbam3d_call(B, C, D, HW, Ch, ksize, True)(x4, w1f, w2f, taps)
    except Exception:
        # pipeline_mode=pl.Buffered(1) not supported by this JAX/Mosaic build:
        # fall back to default (double-buffered) constants.
        out = _build_cbam3d_call(B, C, D, HW, Ch, ksize, False)(x4, w1f, w2f, taps)
    return out.reshape(B, C, D, H, W)


def cbam3d_ref(x, w1, w2, w_conv):
    """Pure-JAX reference mirroring the PyTorch forward exactly (f32, HIGHEST)."""
    hp = lax.Precision.HIGHEST
    avg = jnp.mean(x, axis=(2, 3, 4))                           # (B, C)
    mx = jnp.max(x, axis=(2, 3, 4))                             # (B, C)

    def mlp(v):
        h = jnp.maximum(jnp.dot(v, w1.T, precision=hp), 0.0)
        return jnp.dot(h, w2.T, precision=hp)

    attn_c = jax.nn.sigmoid(mlp(avg) + mlp(mx))[:, :, None, None, None]
    x1 = x * attn_c

    avg_s = jnp.mean(x1, axis=1, keepdims=True)
    max_s = jnp.max(x1, axis=1, keepdims=True)
    a = jnp.concatenate([avg_s, max_s], axis=1)                 # (B, 2, D, H, W)
    pad = w_conv.shape[-1] // 2
    conv = lax.conv_general_dilated(
        a, w_conv, window_strides=(1, 1, 1),
        padding=[(pad, pad)] * 3,
        dimension_numbers=("NCDHW", "OIDHW", "NCDHW"),
        precision=hp)
    return x1 * jax.nn.sigmoid(conv)


if __name__ == "__main__":
    # Shapes consistent with CBAM3D(in_channels=32, reduction=16, kernel_size=7).
    # H*W = 128 keeps the lane axis dense; D = 8 fills the sublane axis.
    B, C, D, H, W = 2, 32, 8, 8, 16
    reduction, ksize = 16, 7
    Ch = C // reduction

    key = jax.random.PRNGKey(0)
    kx, k1, k2, k3 = jax.random.split(key, 4)
    x = jax.random.normal(kx, (B, C, D, H, W), jnp.float32)
    # Deterministic synthetic parameters (shapes from the module __init__):
    w1 = jax.random.normal(k1, (Ch, C), jnp.float32) * 0.1      # Conv3d(C, C//r, 1, bias=False)
    w2 = jax.random.normal(k2, (C, Ch), jnp.float32) * 0.1      # Conv3d(C//r, C, 1, bias=False)
    w_conv = jax.random.normal(k3, (1, 2, ksize, ksize, ksize),
                               jnp.float32) * 0.05              # Conv3d(2, 1, 7, pad=3, bias=False)

    # Build the Toeplitz taps ONCE per conv weight (cached constant).
    taps = precompute_spatial_taps(w_conv, H, W)

    out = jax.block_until_ready(cbam3d_pallas(x, w1, w2, taps))
    ref = jax.block_until_ready(cbam3d_ref(x, w1, w2, w_conv))

    assert out.shape == (B, C, D, H, W)
    max_err = float(jnp.max(jnp.abs(out - ref)))
    # bf16 input + bf16 MXU operands (f32 accumulation) vs the all-f32 HIGHEST ref.
    assert jnp.allclose(out, ref, atol=2.5e-2, rtol=2.5e-2), f"max abs err {max_err}"
    print("KERNEL_OK")
</pallas_src>

<mosaic_0001>
module attributes {stable_mosaic.version = 11 : i64} {
  func.func @cbam3d_kernel(%arg0: i32, %arg1: memref<1x32x8x128xbf16, #tpu.memory_space<vmem>>, %arg2: memref<2x32xf32, #tpu.memory_space<vmem>>, %arg3: memref<32x2xf32, #tpu.memory_space<vmem>>, %arg4: memref<7x256x128xbf16, #tpu.memory_space<vmem>>, %arg5: memref<1x32x8x128xf32, #tpu.memory_space<vmem>>, %arg6: memref<14x256xf32, #tpu.memory_space<vmem>>) attributes {dimension_semantics = [#tpu.dimension_semantics<parallel>], iteration_bounds = array<i64: 2>, scalar_prefetch = 0 : i64, scratch_operands = 1 : i64, tpu.core_type = #tpu.core_type<tc>, window_params = [{transform_indices = @transform_0, window_bounds = array<i64: 1, 32, 8, 128>}, {pipeline_mode = #tpu.pipeline_mode<synchronous>, transform_indices = @transform_1, window_bounds = array<i64: 2, 32>}, {pipeline_mode = #tpu.pipeline_mode<synchronous>, transform_indices = @transform_2, window_bounds = array<i64: 32, 2>}, {pipeline_mode = #tpu.pipeline_mode<synchronous>, transform_indices = @transform_3, window_bounds = array<i64: 7, 256, 128>}, {transform_indices = @transform_4, window_bounds = array<i64: 1, 32, 8, 128>}]} {
    %c0 = arith.constant 0 : index
    %c0_0 = arith.constant 0 : index
    %c0_1 = arith.constant 0 : index
    %c0_2 = arith.constant 0 : index
    %0 = vector.load %arg1[%c0, %c0_0, %c0_1, %c0_2] : memref<1x32x8x128xbf16, #tpu.memory_space<vmem>>, vector<1x32x8x128xbf16>
    %1 = vector.shape_cast %0 : vector<1x32x8x128xbf16> to vector<32x8x128xbf16>
    %2 = arith.extf %1 : vector<32x8x128xbf16> to vector<32x8x128xf32>
    %cst = arith.constant dense<0.000000e+00> : vector<32x8xf32>
    %3 = vector.multi_reduction <add>, %2, %cst [2] : vector<32x8x128xf32> to vector<32x8xf32>
    %cst_3 = arith.constant 1.280000e+02 : f32
    %4 = vector.broadcast %cst_3 : f32 to vector<32x8xf32>
    %5 = arith.divf %3, %4 : vector<32x8xf32>
    %cst_4 = arith.constant dense<0.000000e+00> : vector<32xf32>
    %6 = vector.multi_reduction <add>, %5, %cst_4 [1] : vector<32x8xf32> to vector<32xf32>
    %7 = vector.shape_cast %6 : vector<32xf32> to vector<32x1xf32>
    %cst_5 = arith.constant 8.000000e+00 : f32
    %8 = vector.broadcast %cst_5 : f32 to vector<32x1xf32>
    %9 = arith.divf %7, %8 : vector<32x1xf32>
    %cst_6 = arith.constant dense<0xFF800000> : vector<32x8xf32>
    %10 = vector.multi_reduction <maximumf>, %2, %cst_6 [2] : vector<32x8x128xf32> to vector<32x8xf32>
    %cst_7 = arith.constant dense<0xFF800000> : vector<32xf32>
    %11 = vector.multi_reduction <maximumf>, %10, %cst_7 [1] : vector<32x8xf32> to vector<32xf32>
    %12 = vector.shape_cast %11 : vector<32xf32> to vector<32x1xf32>
    %13 = tpu.concatenate %9, %12 in 1 : vector<32x1xf32>, vector<32x1xf32> -> vector<32x2xf32>
    %c0_8 = arith.constant 0 : index
    %c0_9 = arith.constant 0 : index
    %14 = vector.load %arg2[%c0_8, %c0_9] : memref<2x32xf32, #tpu.memory_space<vmem>>, vector<2x32xf32>
    %cst_10 = arith.constant dense<0.000000e+00> : vector<2x2xf32>
    %15 = tpu.matmul %14, %13, %cst_10 {dimension_numbers = #tpu.dot_dimension_numbers<[1], [0], [0], [1], [0, 0, 1, 1], [], []>} : vector<2x32xf32>, vector<32x2xf32>, vector<2x2xf32> -> vector<2x2xf32>
    %cst_11 = arith.constant 0.000000e+00 : f32
    %16 = vector.broadcast %cst_11 : f32 to vector<2x2xf32>
    %17 = arith.maximumf %15, %16 : vector<2x2xf32>
    %c0_12 = arith.constant 0 : index
    %c0_13 = arith.constant 0 : index
    %18 = vector.load %arg3[%c0_12, %c0_13] : memref<32x2xf32, #tpu.memory_space<vmem>>, vector<32x2xf32>
    %cst_14 = arith.constant dense<0.000000e+00> : vector<32x2xf32>
    %19 = tpu.matmul %18, %17, %cst_14 {dimension_numbers = #tpu.dot_dimension_numbers<[1], [0], [0], [1], [0, 0, 1, 1], [], []>} : vector<32x2xf32>, vector<2x2xf32>, vector<32x2xf32> -> vector<32x2xf32>
    %cst_15 = arith.constant dense<0.000000e+00> : vector<32xf32>
    %20 = vector.multi_reduction <add>, %19, %cst_15 [1] : vector<32x2xf32> to vector<32xf32>
    %21 = vector.shape_cast %20 : vector<32xf32> to vector<32x1xf32>
    %22 = arith.negf %21 : vector<32x1xf32>
    %23 = math.exp %22 : vector<32x1xf32>
    %cst_16 = arith.constant 1.000000e+00 : f32
    %24 = vector.broadcast %cst_16 : f32 to vector<32x1xf32>
    %25 = arith.addf %24, %23 : vector<32x1xf32>
    %26 = arith.divf %24, %25 : vector<32x1xf32>
    %27 = vector.shape_cast %26 : vector<32x1xf32> to vector<32x1x1xf32>
    %28 = vector.broadcast %27 : vector<32x1x1xf32> to vector<32x8x128xf32>
    %29 = arith.mulf %2, %28 : vector<32x8x128xf32>
    %cst_17 = arith.constant dense<0.000000e+00> : vector<8x128xf32>
    %30 = vector.multi_reduction <add>, %29, %cst_17 [0] : vector<32x8x128xf32> to vector<8x128xf32>
    %cst_18 = arith.constant 3.200000e+01 : f32
    %31 = vector.broadcast %cst_18 : f32 to vector<8x128xf32>
    %32 = arith.divf %30, %31 : vector<8x128xf32>
    %cst_19 = arith.constant dense<0xFF800000> : vector<8x128xf32>
    %33 = vector.multi_reduction <maximumf>, %29, %cst_19 [0] : vector<32x8x128xf32> to vector<8x128xf32>
    %cst_20 = arith.constant 0.000000e+00 : f32
    %34 = vector.broadcast %cst_20 : f32 to vector<3x256xf32>
    %c0_21 = arith.constant 0 : index
    %c0_22 = arith.constant 0 : index
    %35 = vector.load %arg6[%c0_21, %c0_22] : memref<14x256xf32, #tpu.memory_space<vmem>>, vector<3x256xf32>
    tpu.vector_store %arg6[%c0_21, %c0_22], %34 {strides = array<i32>} : memref<14x256xf32, #tpu.memory_space<vmem>>, vector<3x256xf32>,
    %c11 = arith.constant 11 : index
    %c0_23 = arith.constant 0 : index
    %36 = vector.load %arg6[%c11, %c0_23] : memref<14x256xf32, #tpu.memory_space<vmem>>, vector<3x256xf32>
    tpu.vector_store %arg6[%c11, %c0_23], %34 {strides = array<i32>} : memref<14x256xf32, #tpu.memory_space<vmem>>, vector<3x256xf32>,
    %c3 = arith.constant 3 : index
    %c0_24 = arith.constant 0 : index
    %37 = vector.load %arg6[%c3, %c0_24] : memref<14x256xf32, #tpu.memory_space<vmem>>, vector<8x128xf32>
    tpu.vector_store %arg6[%c3, %c0_24], %32 {strides = array<i32>} : memref<14x256xf32, #tpu.memory_space<vmem>>, vector<8x128xf32>,
    %c3_25 = arith.constant 3 : index
    %c128 = arith.constant 128 : index
    %38 = vector.load %arg6[%c3_25, %c128] : memref<14x256xf32, #tpu.memory_space<vmem>>, vector<8x128xf32>
    tpu.vector_store %arg6[%c3_25, %c128], %33 {strides = array<i32>} : memref<14x256xf32, #tpu.memory_space<vmem>>, vector<8x128xf32>,
    %cst_26 = arith.constant 0.000000e+00 : f32
    %39 = vector.broadcast %cst_26 : f32 to vector<8x128xf32>
    %c0_27 = arith.constant 0 : index
    %c0_28 = arith.constant 0 : index
    %40 = vector.load %arg6[%c0_27, %c0_28] : memref<14x256xf32, #tpu.memory_space<vmem>>, vector<8x256xf32>
    %41 = arith.truncf %40 : vector<8x256xf32> to vector<8x256xbf16>
    %c0_29 = arith.constant 0 : index
    %c0_30 = arith.constant 0 : index
    %c0_31 = arith.constant 0 : index
    %42 = vector.load %arg4[%c0_29, %c0_30, %c0_31] : memref<7x256x128xbf16, #tpu.memory_space<vmem>>, vector<1x256x128xbf16>
    %43 = vector.shape_cast %42 : vector<1x256x128xbf16> to vector<256x128xbf16>
    %cst_32 = arith.constant dense<0.000000e+00> : vector<8x128xf32>
    %44 = tpu.matmul %41, %43, %cst_32 {dimension_numbers = #tpu.dot_dimension_numbers<[1], [0], [0], [1], [0, 0, 1, 1], [], []>} : vector<8x256xbf16>, vector<256x128xbf16>, vector<8x128xf32> -> vector<8x128xf32>
    %45 = arith.addf %39, %44 : vector<8x128xf32>
    %c1 = arith.constant 1 : index
    %c0_33 = arith.constant 0 : index
    %46 = vector.load %arg6[%c1, %c0_33] : memref<14x256xf32, #tpu.memory_space<vmem>>, vector<8x256xf32>
    %47 = arith.truncf %46 : vector<8x256xf32> to vector<8x256xbf16>
    %c1_34 = arith.constant 1 : index
    %c0_35 = arith.constant 0 : index
    %c0_36 = arith.constant 0 : index
    %48 = vector.load %arg4[%c1_34, %c0_35, %c0_36] : memref<7x256x128xbf16, #tpu.memory_space<vmem>>, vector<1x256x128xbf16>
    %49 = vector.shape_cast %48 : vector<1x256x128xbf16> to vector<256x128xbf16>
    %cst_37 = arith.constant dense<0.000000e+00> : vector<8x128xf32>
    %50 = tpu.matmul %47, %49, %cst_37 {dimension_numbers = #tpu.dot_dimension_numbers<[1], [0], [0], [1], [0, 0, 1, 1], [], []>} : vector<8x256xbf16>, vector<256x128xbf16>, vector<8x128xf32> -> vector<8x128xf32>
    %51 = arith.addf %45, %50 : vector<8x128xf32>
    %c2 = arith.constant 2 : index
    %c0_38 = arith.constant 0 : index
    %52 = vector.load %arg6[%c2, %c0_38] : memref<14x256xf32, #tpu.memory_space<vmem>>, vector<8x256xf32>
    %53 = arith.truncf %52 : vector<8x256xf32> to vector<8x256xbf16>
    %c2_39 = arith.constant 2 : index
    %c0_40 = arith.constant 0 : index
    %c0_41 = arith.constant 0 : index
    %54 = vector.load %arg4[%c2_39, %c0_40, %c0_41] : memref<7x256x128xbf16, #tpu.memory_space<vmem>>, vector<1x256x128xbf16>
    %55 = vector.shape_cast %54 : vector<1x256x128xbf16> to vector<256x128xbf16>
    %cst_42 = arith.constant dense<0.000000e+00> : vector<8x128xf32>
    %56 = tpu.matmul %53, %55, %cst_42 {dimension_numbers = #tpu.dot_dimension_numbers<[1], [0], [0], [1], [0, 0, 1, 1], [], []>} : vector<8x256xbf16>, vector<256x128xbf16>, vector<8x128xf32> -> vector<8x128xf32>
    %57 = arith.addf %51, %56 : vector<8x128xf32>
    %c3_43 = arith.constant 3 : index
    %c0_44 = arith.constant 0 : index
    %58 = vector.load %arg6[%c3_43, %c0_44] : memref<14x256xf32, #tpu.memory_space<vmem>>, vector<8x256xf32>
    %59 = arith.truncf %58 : vector<8x256xf32> to vector<8x256xbf16>
    %c3_45 = arith.constant 3 : index
    %c0_46 = arith.constant 0 : index
    %c0_47 = arith.constant 0 : index
    %60 = vector.load %arg4[%c3_45, %c0_46, %c0_47] : memref<7x256x128xbf16, #tpu.memory_space<vmem>>, vector<1x256x128xbf16>
    %61 = vector.shape_cast %60 : vector<1x256x128xbf16> to vector<256x128xbf16>
    %cst_48 = arith.constant dense<0.000000e+00> : vector<8x128xf32>
    %62 = tpu.matmul %59, %61, %cst_48 {dimension_numbers = #tpu.dot_dimension_numbers<[1], [0], [0], [1], [0, 0, 1, 1], [], []>} : vector<8x256xbf16>, vector<256x128xbf16>, vector<8x128xf32> -> vector<8x128xf32>
    %63 = arith.addf %57, %62 : vector<8x128xf32>
    %c4 = arith.constant 4 : index
    %c0_49 = arith.constant 0 : index
    %64 = vector.load %arg6[%c4, %c0_49] : memref<14x256xf32, #tpu.memory_space<vmem>>, vector<8x256xf32>
    %65 = arith.truncf %64 : vector<8x256xf32> to vector<8x256xbf16>
    %c4_50 = arith.constant 4 : index
    %c0_51 = arith.constant 0 : index
    %c0_52 = arith.constant 0 : index
    %66 = vector.load %arg4[%c4_50, %c0_51, %c0_52] : memref<7x256x128xbf16, #tpu.memory_space<vmem>>, vector<1x256x128xbf16>
    %67 = vector.shape_cast %66 : vector<1x256x128xbf16> to vector<256x128xbf16>
    %cst_53 = arith.constant dense<0.000000e+00> : vector<8x128xf32>
    %68 = tpu.matmul %65, %67, %cst_53 {dimension_numbers = #tpu.dot_dimension_numbers<[1], [0], [0], [1], [0, 0, 1, 1], [], []>} : vector<8x256xbf16>, vector<256x128xbf16>, vector<8x128xf32> -> vector<8x128xf32>
    %69 = arith.addf %63, %68 : vector<8x128xf32>
    %c5 = arith.constant 5 : index
    %c0_54 = arith.constant 0 : index
    %70 = vector.load %arg6[%c5, %c0_54] : memref<14x256xf32, #tpu.memory_space<vmem>>, vector<8x256xf32>
    %71 = arith.truncf %70 : vector<8x256xf32> to vector<8x256xbf16>
    %c5_55 = arith.constant 5 : index
    %c0_56 = arith.constant 0 : index
    %c0_57 = arith.constant 0 : index
    %72 = vector.load %arg4[%c5_55, %c0_56, %c0_57] : memref<7x256x128xbf16, #tpu.memory_space<vmem>>, vector<1x256x128xbf16>
    %73 = vector.shape_cast %72 : vector<1x256x128xbf16> to vector<256x128xbf16>
    %cst_58 = arith.constant dense<0.000000e+00> : vector<8x128xf32>
    %74 = tpu.matmul %71, %73, %cst_58 {dimension_numbers = #tpu.dot_dimension_numbers<[1], [0], [0], [1], [0, 0, 1, 1], [], []>} : vector<8x256xbf16>, vector<256x128xbf16>, vector<8x128xf32> -> vector<8x128xf32>
    %75 = arith.addf %69, %74 : vector<8x128xf32>
    %c6 = arith.constant 6 : index
    %c0_59 = arith.constant 0 : index
    %76 = vector.load %arg6[%c6, %c0_59] : memref<14x256xf32, #tpu.memory_space<vmem>>, vector<8x256xf32>
    %77 = arith.truncf %76 : vector<8x256xf32> to vector<8x256xbf16>
    %c6_60 = arith.constant 6 : index
    %c0_61 = arith.constant 0 : index
    %c0_62 = arith.constant 0 : index
    %78 = vector.load %arg4[%c6_60, %c0_61, %c0_62] : memref<7x256x128xbf16, #tpu.memory_space<vmem>>, vector<1x256x128xbf16>
    %79 = vector.shape_cast %78 : vector<1x256x128xbf16> to vector<256x128xbf16>
    %cst_63 = arith.constant dense<0.000000e+00> : vector<8x128xf32>
    %80 = tpu.matmul %77, %79, %cst_63 {dimension_numbers = #tpu.dot_dimension_numbers<[1], [0], [0], [1], [0, 0, 1, 1], [], []>} : vector<8x256xbf16>, vector<256x128xbf16>, vector<8x128xf32> -> vector<8x128xf32>
    %81 = arith.addf %75, %80 : vector<8x128xf32>
    %82 = arith.negf %81 : vector<8x128xf32>
    %83 = math.exp %82 : vector<8x128xf32>
    %cst_64 = arith.constant 1.000000e+00 : f32
    %84 = vector.broadcast %cst_64 : f32 to vector<8x128xf32>
    %85 = arith.addf %84, %83 : vector<8x128xf32>
    %86 = arith.divf %84, %85 : vector<8x128xf32>
    %87 = vector.shape_cast %86 : vector<8x128xf32> to vector<1x8x128xf32>
    %88 = vector.broadcast %87 : vector<1x8x128xf32> to vector<32x8x128xf32>
    %89 = arith.mulf %29, %88 : vector<32x8x128xf32>
    %c0_65 = arith.constant 0 : index
    %c0_66 = arith.constant 0 : index
    %c0_67 = arith.constant 0 : index
    %c0_68 = arith.constant 0 : index
    %90 = vector.load %arg5[%c0_65, %c0_66, %c0_67, %c0_68] : memref<1x32x8x128xf32, #tpu.memory_space<vmem>>, vector<1x32x8x128xf32>
    %91 = vector.shape_cast %90 : vector<1x32x8x128xf32> to vector<32x8x128xf32>
    %92 = vector.shape_cast %89 : vector<32x8x128xf32> to vector<1x32x8x128xf32>
    tpu.vector_store %arg5[%c0_65, %c0_66, %c0_67, %c0_68], %92 {strides = array<i32>} : memref<1x32x8x128xf32, #tpu.memory_space<vmem>>, vector<1x32x8x128xf32>,
    return
  }
  func.func @transform_0(%arg0: i32) -> (i32, i32, i32, i32) {
    %c0_i32 = arith.constant 0 : i32
    %c0_i32_0 = arith.constant 0 : i32
    %c0_i32_1 = arith.constant 0 : i32
    %c0_i32_2 = arith.constant 0 : i32
    return %arg0, %c0_i32, %c0_i32_0, %c0_i32_1 : i32, i32, i32, i32
  }
  func.func @transform_1(%arg0: i32) -> (i32, i32) {
    %c0_i32 = arith.constant 0 : i32
    %c0_i32_0 = arith.constant 0 : i32
    %c0_i32_1 = arith.constant 0 : i32
    return %c0_i32, %c0_i32_0 : i32, i32
  }
  func.func @transform_2(%arg0: i32) -> (i32, i32) {
    %c0_i32 = arith.constant 0 : i32
    %c0_i32_0 = arith.constant 0 : i32
    %c0_i32_1 = arith.constant 0 : i32
    return %c0_i32, %c0_i32_0 : i32, i32
  }
  func.func @transform_3(%arg0: i32) -> (i32, i32, i32) {
    %c0_i32 = arith.constant 0 : i32
    %c0_i32_0 = arith.constant 0 : i32
    %c0_i32_1 = arith.constant 0 : i32
    %c0_i32_2 = arith.constant 0 : i32
    return %c0_i32, %c0_i32_0, %c0_i32_1 : i32, i32, i32
  }
  func.func @transform_4(%arg0: i32) -> (i32, i32, i32, i32) {
    %c0_i32 = arith.constant 0 : i32
    %c0_i32_0 = arith.constant 0 : i32
    %c0_i32_1 = arith.constant 0 : i32
    %c0_i32_2 = arith.constant 0 : i32
    return %arg0, %c0_i32, %c0_i32_0, %c0_i32_1 : i32, i32, i32, i32
  }
}

module attributes {stable_mosaic.version = 11 : i64} {
  func.func @cbam3d_kernel(%arg0: i32, %arg1: memref<1x32x8x128xbf16, #tpu.memory_space<vmem>>, %arg2: memref<2x32xf32, #tpu.memory_space<vmem>>, %arg3: memref<32x2xf32, #tpu.memory_space<vmem>>, %arg4: memref<7x256x128xbf16, #tpu.memory_space<vmem>>, %arg5: memref<1x32x8x128xf32, #tpu.memory_space<vmem>>, %arg6: memref<14x256xf32, #tpu.memory_space<vmem>>) attributes {dimension_semantics = [#tpu.dimension_semantics<parallel>], iteration_bounds = array<i64: 2>, scalar_prefetch = 0 : i64, scratch_operands = 1 : i64, tpu.core_type = #tpu.core_type<tc>, window_params = [{transform_indices = @transform_0, window_bounds = array<i64: 1, 32, 8, 128>}, {pipeline_mode = #tpu.pipeline_mode<synchronous>, transform_indices = @transform_1, window_bounds = array<i64: 2, 32>}, {pipeline_mode = #tpu.pipeline_mode<synchronous>, transform_indices = @transform_2, window_bounds = array<i64: 32, 2>}, {pipeline_mode = #tpu.pipeline_mode<synchronous>, transform_indices = @transform_3, window_bounds = array<i64: 7, 256, 128>}, {transform_indices = @transform_4, window_bounds = array<i64: 1, 32, 8, 128>}]} {
    %c0 = arith.constant 0 : index
    %c0_0 = arith.constant 0 : index
    %c0_1 = arith.constant 0 : index
    %c0_2 = arith.constant 0 : index
    %0 = vector.load %arg1[%c0, %c0_0, %c0_1, %c0_2] : memref<1x32x8x128xbf16, #tpu.memory_space<vmem>>, vector<1x32x8x128xbf16>
    %1 = vector.shape_cast %0 : vector<1x32x8x128xbf16> to vector<32x8x128xbf16>
    %2 = arith.extf %1 : vector<32x8x128xbf16> to vector<32x8x128xf32>
    %cst = arith.constant dense<0.000000e+00> : vector<32x8xf32>
    %3 = vector.multi_reduction <add>, %2, %cst [2] : vector<32x8x128xf32> to vector<32x8xf32>
    %cst_3 = arith.constant 1.280000e+02 : f32
    %4 = vector.broadcast %cst_3 : f32 to vector<32x8xf32>
    %5 = arith.divf %3, %4 : vector<32x8xf32>
    %cst_4 = arith.constant dense<0.000000e+00> : vector<32xf32>
    %6 = vector.multi_reduction <add>, %5, %cst_4 [1] : vector<32x8xf32> to vector<32xf32>
    %7 = vector.shape_cast %6 : vector<32xf32> to vector<32x1xf32>
    %cst_5 = arith.constant 8.000000e+00 : f32
    %8 = vector.broadcast %cst_5 : f32 to vector<32x1xf32>
    %9 = arith.divf %7, %8 : vector<32x1xf32>
    %cst_6 = arith.constant dense<0xFF800000> : vector<32x8xf32>
    %10 = vector.multi_reduction <maximumf>, %2, %cst_6 [2] : vector<32x8x128xf32> to vector<32x8xf32>
    %cst_7 = arith.constant dense<0xFF800000> : vector<32xf32>
    %11 = vector.multi_reduction <maximumf>, %10, %cst_7 [1] : vector<32x8xf32> to vector<32xf32>
    %12 = vector.shape_cast %11 : vector<32xf32> to vector<32x1xf32>
    %13 = tpu.concatenate %9, %12 in 1 : vector<32x1xf32>, vector<32x1xf32> -> vector<32x2xf32>
    %c0_8 = arith.constant 0 : index
    %c0_9 = arith.constant 0 : index
    %14 = vector.load %arg2[%c0_8, %c0_9] : memref<2x32xf32, #tpu.memory_space<vmem>>, vector<2x32xf32>
    %cst_10 = arith.constant dense<0.000000e+00> : vector<2x2xf32>
    %15 = tpu.matmul %14, %13, %cst_10 {dimension_numbers = #tpu.dot_dimension_numbers<[1], [0], [0], [1], [0, 0, 1, 1], [], []>} : vector<2x32xf32>, vector<32x2xf32>, vector<2x2xf32> -> vector<2x2xf32>
    %cst_11 = arith.constant 0.000000e+00 : f32
    %16 = vector.broadcast %cst_11 : f32 to vector<2x2xf32>
    %17 = arith.maximumf %15, %16 : vector<2x2xf32>
    %c0_12 = arith.constant 0 : index
    %c0_13 = arith.constant 0 : index
    %18 = vector.load %arg3[%c0_12, %c0_13] : memref<32x2xf32, #tpu.memory_space<vmem>>, vector<32x2xf32>
    %cst_14 = arith.constant dense<0.000000e+00> : vector<32x2xf32>
    %19 = tpu.matmul %18, %17, %cst_14 {dimension_numbers = #tpu.dot_dimension_numbers<[1], [0], [0], [1], [0, 0, 1, 1], [], []>} : vector<32x2xf32>, vector<2x2xf32>, vector<32x2xf32> -> vector<32x2xf32>
    %cst_15 = arith.constant dense<0.000000e+00> : vector<32xf32>
    %20 = vector.multi_reduction <add>, %19, %cst_15 [1] : vector<32x2xf32> to vector<32xf32>
    %21 = vector.shape_cast %20 : vector<32xf32> to vector<32x1xf32>
    %22 = arith.negf %21 : vector<32x1xf32>
    %23 = math.exp %22 : vector<32x1xf32>
    %cst_16 = arith.constant 1.000000e+00 : f32
    %24 = vector.broadcast %cst_16 : f32 to vector<32x1xf32>
    %25 = arith.addf %24, %23 : vector<32x1xf32>
    %26 = arith.divf %24, %25 : vector<32x1xf32>
    %27 = vector.shape_cast %26 : vector<32x1xf32> to vector<32x1x1xf32>
    %28 = vector.broadcast %27 : vector<32x1x1xf32> to vector<32x8x128xf32>
    %29 = arith.mulf %2, %28 : vector<32x8x128xf32>
    %cst_17 = arith.constant dense<0.000000e+00> : vector<8x128xf32>
    %30 = vector.multi_reduction <add>, %29, %cst_17 [0] : vector<32x8x128xf32> to vector<8x128xf32>
    %cst_18 = arith.constant 3.200000e+01 : f32
    %31 = vector.broadcast %cst_18 : f32 to vector<8x128xf32>
    %32 = arith.divf %30, %31 : vector<8x128xf32>
    %cst_19 = arith.constant dense<0xFF800000> : vector<8x128xf32>
    %33 = vector.multi_reduction <maximumf>, %29, %cst_19 [0] : vector<32x8x128xf32> to vector<8x128xf32>
    %cst_20 = arith.constant 0.000000e+00 : f32
    %34 = vector.broadcast %cst_20 : f32 to vector<3x256xf32>
    %c0_21 = arith.constant 0 : index
    %c0_22 = arith.constant 0 : index
    %35 = vector.load %arg6[%c0_21, %c0_22] : memref<14x256xf32, #tpu.memory_space<vmem>>, vector<3x256xf32>
    tpu.vector_store %arg6[%c0_21, %c0_22], %34 {strides = array<i32>} : memref<14x256xf32, #tpu.memory_space<vmem>>, vector<3x256xf32>,
    %c11 = arith.constant 11 : index
    %c0_23 = arith.constant 0 : index
    %36 = vector.load %arg6[%c11, %c0_23] : memref<14x256xf32, #tpu.memory_space<vmem>>, vector<3x256xf32>
    tpu.vector_store %arg6[%c11, %c0_23], %34 {strides = array<i32>} : memref<14x256xf32, #tpu.memory_space<vmem>>, vector<3x256xf32>,
    %c3 = arith.constant 3 : index
    %c0_24 = arith.constant 0 : index
    %37 = vector.load %arg6[%c3, %c0_24] : memref<14x256xf32, #tpu.memory_space<vmem>>, vector<8x128xf32>
    tpu.vector_store %arg6[%c3, %c0_24], %32 {strides = array<i32>} : memref<14x256xf32, #tpu.memory_space<vmem>>, vector<8x128xf32>,
    %c3_25 = arith.constant 3 : index
    %c128 = arith.constant 128 : index
    %38 = vector.load %arg6[%c3_25, %c128] : memref<14x256xf32, #tpu.memory_space<vmem>>, vector<8x128xf32>
    tpu.vector_store %arg6[%c3_25, %c128], %33 {strides = array<i32>} : memref<14x256xf32, #tpu.memory_space<vmem>>, vector<8x128xf32>,
    %cst_26 = arith.constant 0.000000e+00 : f32
    %39 = vector.broadcast %cst_26 : f32 to vector<8x128xf32>
    %c0_27 = arith.constant 0 : index
    %c0_28 = arith.constant 0 : index
    %40 = vector.load %arg6[%c0_27, %c0_28] : memref<14x256xf32, #tpu.memory_space<vmem>>, vector<8x256xf32>
    %41 = arith.truncf %40 : vector<8x256xf32> to vector<8x256xbf16>
    %c0_29 = arith.constant 0 : index
    %c0_30 = arith.constant 0 : index
    %c0_31 = arith.constant 0 : index
    %42 = vector.load %arg4[%c0_29, %c0_30, %c0_31] : memref<7x256x128xbf16, #tpu.memory_space<vmem>>, vector<1x256x128xbf16>
    %43 = vector.shape_cast %42 : vector<1x256x128xbf16> to vector<256x128xbf16>
    %cst_32 = arith.constant dense<0.000000e+00> : vector<8x128xf32>
    %44 = tpu.matmul %41, %43, %cst_32 {dimension_numbers = #tpu.dot_dimension_numbers<[1], [0], [0], [1], [0, 0, 1, 1], [], []>} : vector<8x256xbf16>, vector<256x128xbf16>, vector<8x128xf32> -> vector<8x128xf32>
    %45 = arith.addf %39, %44 : vector<8x128xf32>
    %c1 = arith.constant 1 : index
    %c0_33 = arith.constant 0 : index
    %46 = vector.load %arg6[%c1, %c0_33] : memref<14x256xf32, #tpu.memory_space<vmem>>, vector<8x256xf32>
    %47 = arith.truncf %46 : vector<8x256xf32> to vector<8x256xbf16>
    %c1_34 = arith.constant 1 : index
    %c0_35 = arith.constant 0 : index
    %c0_36 = arith.constant 0 : index
    %48 = vector.load %arg4[%c1_34, %c0_35, %c0_36] : memref<7x256x128xbf16, #tpu.memory_space<vmem>>, vector<1x256x128xbf16>
    %49 = vector.shape_cast %48 : vector<1x256x128xbf16> to vector<256x128xbf16>
    %cst_37 = arith.constant dense<0.000000e+00> : vector<8x128xf32>
    %50 = tpu.matmul %47, %49, %cst_37 {dimension_numbers = #tpu.dot_dimension_numbers<[1], [0], [0], [1], [0, 0, 1, 1], [], []>} : vector<8x256xbf16>, vector<256x128xbf16>, vector<8x128xf32> -> vector<8x128xf32>
    %51 = arith.addf %45, %50 : vector<8x128xf32>
    %c2 = arith.constant 2 : index
    %c0_38 = arith.constant 0 : index
    %52 = vector.load %arg6[%c2, %c0_38] : memref<14x256xf32, #tpu.memory_space<vmem>>, vector<8x256xf32>
    %53 = arith.truncf %52 : vector<8x256xf32> to vector<8x256xbf16>
    %c2_39 = arith.constant 2 : index
    %c0_40 = arith.constant 0 : index
    %c0_41 = arith.constant 0 : index
    %54 = vector.load %arg4[%c2_39, %c0_40, %c0_41] : memref<7x256x128xbf16, #tpu.memory_space<vmem>>, vector<1x256x128xbf16>
    %55 = vector.shape_cast %54 : vector<1x256x128xbf16> to vector<256x128xbf16>
    %cst_42 = arith.constant dense<0.000000e+00> : vector<8x128xf32>
    %56 = tpu.matmul %53, %55, %cst_42 {dimension_numbers = #tpu.dot_dimension_numbers<[1], [0], [0], [1], [0, 0, 1, 1], [], []>} : vector<8x256xbf16>, vector<256x128xbf16>, vector<8x128xf32> -> vector<8x128xf32>
    %57 = arith.addf %51, %56 : vector<8x128xf32>
    %c3_43 = arith.constant 3 : index
    %c0_44 = arith.constant 0 : index
    %58 = vector.load %arg6[%c3_43, %c0_44] : memref<14x256xf32, #tpu.memory_space<vmem>>, vector<8x256xf32>
    %59 = arith.truncf %58 : vector<8x256xf32> to vector<8x256xbf16>
    %c3_45 = arith.constant 3 : index
    %c0_46 = arith.constant 0 : index
    %c0_47 = arith.constant 0 : index
    %60 = vector.load %arg4[%c3_45, %c0_46, %c0_47] : memref<7x256x128xbf16, #tpu.memory_space<vmem>>, vector<1x256x128xbf16>
    %61 = vector.shape_cast %60 : vector<1x256x128xbf16> to vector<256x128xbf16>
    %cst_48 = arith.constant dense<0.000000e+00> : vector<8x128xf32>
    %62 = tpu.matmul %59, %61, %cst_48 {dimension_numbers = #tpu.dot_dimension_numbers<[1], [0], [0], [1], [0, 0, 1, 1], [], []>} : vector<8x256xbf16>, vector<256x128xbf16>, vector<8x128xf32> -> vector<8x128xf32>
    %63 = arith.addf %57, %62 : vector<8x128xf32>
    %c4 = arith.constant 4 : index
    %c0_49 = arith.constant 0 : index
    %64 = vector.load %arg6[%c4, %c0_49] : memref<14x256xf32, #tpu.memory_space<vmem>>, vector<8x256xf32>
    %65 = arith.truncf %64 : vector<8x256xf32> to vector<8x256xbf16>
    %c4_50 = arith.constant 4 : index
    %c0_51 = arith.constant 0 : index
    %c0_52 = arith.constant 0 : index
    %66 = vector.load %arg4[%c4_50, %c0_51, %c0_52] : memref<7x256x128xbf16, #tpu.memory_space<vmem>>, vector<1x256x128xbf16>
    %67 = vector.shape_cast %66 : vector<1x256x128xbf16> to vector<256x128xbf16>
    %cst_53 = arith.constant dense<0.000000e+00> : vector<8x128xf32>
    %68 = tpu.matmul %65, %67, %cst_53 {dimension_numbers = #tpu.dot_dimension_numbers<[1], [0], [0], [1], [0, 0, 1, 1], [], []>} : vector<8x256xbf16>, vector<256x128xbf16>, vector<8x128xf32> -> vector<8x128xf32>
    %69 = arith.addf %63, %68 : vector<8x128xf32>
    %c5 = arith.constant 5 : index
    %c0_54 = arith.constant 0 : index
    %70 = vector.load %arg6[%c5, %c0_54] : memref<14x256xf32, #tpu.memory_space<vmem>>, vector<8x256xf32>
    %71 = arith.truncf %70 : vector<8x256xf32> to vector<8x256xbf16>
    %c5_55 = arith.constant 5 : index
    %c0_56 = arith.constant 0 : index
    %c0_57 = arith.constant 0 : index
    %72 = vector.load %arg4[%c5_55, %c0_56, %c0_57] : memref<7x256x128xbf16, #tpu.memory_space<vmem>>, vector<1x256x128xbf16>
    %73 = vector.shape_cast %72 : vector<1x256x128xbf16> to vector<256x128xbf16>
    %cst_58 = arith.constant dense<0.000000e+00> : vector<8x128xf32>
    %74 = tpu.matmul %71, %73, %cst_58 {dimension_numbers = #tpu.dot_dimension_numbers<[1], [0], [0], [1], [0, 0, 1, 1], [], []>} : vector<8x256xbf16>, vector<256x128xbf16>, vector<8x128xf32> -> vector<8x128xf32>
    %75 = arith.addf %69, %74 : vector<8x128xf32>
    %c6 = arith.constant 6 : index
    %c0_59 = arith.constant 0 : index
    %76 = vector.load %arg6[%c6, %c0_59] : memref<14x256xf32, #tpu.memory_space<vmem>>, vector<8x256xf32>
    %77 = arith.truncf %76 : vector<8x256xf32> to vector<8x256xbf16>
    %c6_60 = arith.constant 6 : index
    %c0_61 = arith.constant 0 : index
    %c0_62 = arith.constant 0 : index
    %78 = vector.load %arg4[%c6_60, %c0_61, %c0_62] : memref<7x256x128xbf16, #tpu.memory_space<vmem>>, vector<1x256x128xbf16>
    %79 = vector.shape_cast %78 : vector<1x256x128xbf16> to vector<256x128xbf16>
    %cst_63 = arith.constant dense<0.000000e+00> : vector<8x128xf32>
    %80 = tpu.matmul %77, %79, %cst_63 {dimension_numbers = #tpu.dot_dimension_numbers<[1], [0], [0], [1], [0, 0, 1, 1], [], []>} : vector<8x256xbf16>, vector<256x128xbf16>, vector<8x128xf32> -> vector<8x128xf32>
    %81 = arith.addf %75, %80 : vector<8x128xf32>
    %82 = arith.negf %81 : vector<8x128xf32>
    %83 = math.exp %82 : vector<8x128xf32>
    %cst_64 = arith.constant 1.000000e+00 : f32
    %84 = vector.broadcast %cst_64 : f32 to vector<8x128xf32>
    %85 = arith.addf %84, %83 : vector<8x128xf32>
    %86 = arith.divf %84, %85 : vector<8x128xf32>
    %87 = vector.shape_cast %86 : vector<8x128xf32> to vector<1x8x128xf32>
    %88 = vector.broadcast %87 : vector<1x8x128xf32> to vector<32x8x128xf32>
    %89 = arith.mulf %29, %88 : vector<32x8x128xf32>
    %c0_65 = arith.constant 0 : index
    %c0_66 = arith.constant 0 : index
    %c0_67 = arith.constant 0 : index
    %c0_68 = arith.constant 0 : index
    %90 = vector.load %arg5[%c0_65, %c0_66, %c0_67, %c0_68] : memref<1x32x8x128xf32, #tpu.memory_space<vmem>>, vector<1x32x8x128xf32>
    %91 = vector.shape_cast %90 : vector<1x32x8x128xf32> to vector<32x8x128xf32>
    %92 = vector.shape_cast %89 : vector<32x8x128xf32> to vector<1x32x8x128xf32>
    tpu.vector_store %arg5[%c0_65, %c0_66, %c0_67, %c0_68], %92 {strides = array<i32>} : memref<1x32x8x128xf32, #tpu.memory_space<vmem>>, vector<1x32x8x128xf32>,
    return
  }
  func.func @transform_0(%arg0: i32) -> (i32, i32, i32, i32) {
    %c0_i32 = arith.constant 0 : i32
    %c0_i32_0 = arith.constant 0 : i32
    %c0_i32_1 = arith.constant 0 : i32
    %c0_i32_2 = arith.constant 0 : i32
    return %arg0, %c0_i32, %c0_i32_0, %c0_i32_1 : i32, i32, i32, i32
  }
  func.func @transform_1(%arg0: i32) -> (i32, i32) {
    %c0_i32 = arith.constant 0 : i32
    %c0_i32_0 = arith.constant 0 : i32
    %c0_i32_1 = arith.constant 0 : i32
    return %c0_i32, %c0_i32_0 : i32, i32
  }
  func.func @transform_2(%arg0: i32) -> (i32, i32) {
    %c0_i32 = arith.constant 0 : i32
    %c0_i32_0 = arith.constant 0 : i32
    %c0_i32_1 = arith.constant 0 : i32
    return %c0_i32, %c0_i32_0 : i32, i32
  }
  func.func @transform_3(%arg0: i32) -> (i32, i32, i32) {
    %c0_i32 = arith.constant 0 : i32
    %c0_i32_0 = arith.constant 0 : i32
    %c0_i32_1 = arith.constant 0 : i32
    %c0_i32_2 = arith.constant 0 : i32
    return %c0_i32, %c0_i32_0, %c0_i32_1 : i32, i32, i32
  }
  func.func @transform_4(%arg0: i32) -> (i32, i32, i32, i32) {
    %c0_i32 = arith.constant 0 : i32
    %c0_i32_0 = arith.constant 0 : i32
    %c0_i32_1 = arith.constant 0 : i32
    %c0_i32_2 = arith.constant 0 : i32
    return %arg0, %c0_i32, %c0_i32_0, %c0_i32_1 : i32, i32, i32, i32
  }
}

</mosaic_0001>

<llo_original>
// kernel: tpu_custom_call.1
$region0: #{tpu_custom_call.1}
  #allocation0 [shape = 'u32[]', space=smem, size = 0x4, offset = 0x4, fixed_abs, tag = 'smem constant byte address 0x4 - core index']
  #allocation1 [shape = 'u32[72,128]{1,0:T(1,128)}', space=vmem, size = 0x9000, scoped, tag = 'internal scratch']
  #allocation2 [shape = 'f32[14,256]{1,0:T(8,128)}', space=vmem, size = 0x4000, scoped, tag = 'scratch operand']
  %s0 = inlined_call_operand.hbm [shape: bf16[2,32,8,128], index: 0, kind: input, shape index: {}]
  %s1 = inlined_call_operand.vmem [shape: f32[2,32], index: 1, kind: input, shape index: {}]
  %s2 = inlined_call_operand.vmem [shape: f32[32,2], index: 2, kind: input, shape index: {}]
  %s3 = inlined_call_operand.hbm [shape: bf16[7,256,128], index: 3, kind: input, shape index: {}]
  %s4 = inlined_call_operand.hbm [shape: f32[2,32,8,128], index: 4, kind: output, shape index: {}]
  %s5 = sld [smem:[#allocation0]]
  $region57: #{tpu_custom_call.1} parent=0
    _
  %s7 = ssub.s32 1, %s5
  %s8 = scalar_select 0, %s7, %s5
  $region1: #{tpu_custom_call.1} parent=0
    #allocation3 [shape = 'u8[131072]{0}', space=vmem, size = 0x20000, scoped, tag = 'input window, operand 0']
    #allocation4 [shape = 's32[2]{0}', space=sflag, size = 0x8, scoped, tag = 'scoped memory for tpu_custom_call.1']
    #allocation5 [shape = 's32[2]{0}', space=sflag, size = 0x8, scoped, tag = 'scoped memory for tpu_custom_call.1']
    #allocation6 [shape = 'u8[458752]{0}', space=vmem, size = 0x70000, scoped, tag = 'input window, operand 3, single buffered']
    #allocation7 [shape = 's32[1]{0}', space=sflag, size = 0x4, scoped, tag = 'scoped memory for tpu_custom_call.1']
    #allocation8 [shape = 'u8[262144]{0}', space=vmem, size = 0x40000, scoped, tag = 'output window, operand 0']
    %9 = vsyncpa [#allocation4], 0
    %s10 = scalar_lea.sflag [#allocation4], 1
    %11 = vsyncpa %s10, 0
    %12 = vsyncpa [#allocation7], 0
    %13 = vsyncpa [#allocation5], 0
    %s14 = scalar_lea.sflag [#allocation5], 1
    %15 = vsyncpa %s14, 0
    loop: start=0, step=1, limit=4
    $region2: #{tpu_custom_call.1} parent=1 // loop_pre_header
      _
    $region3: #{tpu_custom_call.1} parent=1 // loop_header
      %s17 = sphi 0, %s21
      %p18 = scmp.ge.s32.totalorder %s17, 4
      %s27 = sphi 0, %s29
      %s30 = sphi 0, %s27
      %s31 = sphi 0, %s30
      %s47 = sphi 0, %s31
      %s51 = sphi 0, %s51
      %s53 = sphi 0, %s51
      %s54 = sphi 0, %s53
      %s68 = sphi 0, %s54
      %s72 = sphi 0, %s72
      %s74 = sphi 0, %s72
      %s75 = sphi 0, %s74
      %s89 = sphi 0, %s75
      %s93 = sphi 0, %s93
      %s95 = sphi 0, %s93
      %s96 = sphi 0, %s95
      %s110 = sphi 0, %s96
      %s116 = sphi 0, %s118
      %s119 = sphi 0, %s116
      %s120 = sphi 0, %s119
      %s136 = sphi 0, %s120
    $region4: #{tpu_custom_call.1} parent=1 // loop_header_branch
      %20 = sbr.rel (%p18) target = $region8
    $region5: #{tpu_custom_call.1} parent=1 // loop_body
      %s22 = ssub.s32 %s17, 1
      %s23 = ssub.s32 %s17, 2
      %s24 = sadd.s32 %s17, 1
      %s25 = ssub.s32 %s17, %s24
      %p26 = scmp.eq.s32.totalorder %s25, 0
      %s28 = sadd.s32 %s27, 1
      %s29 = scalar_select %p26, %s27, %s28
      %p32 = pneg %p26
      %p33 = scmp.eq.s32.totalorder %s17, 1
      %p34 = por %p32, %p33
      %p35 = scmp.ne.s32.totalorder %s27, %s30
      %p36 = scmp.eq.s32.totalorder %s17, 0
      %p37 = por %p35, %p36
      %p38 = scmp.ne.s32.totalorder %s27, %s30
      %p39 = scmp.eq.s32.totalorder %s22, 1
      %p40 = por %p38, %p39
      %p41 = scmp.ne.s32.totalorder %s30, %s31
      %p42 = scmp.eq.s32.totalorder %s22, 0
      %p43 = por %p41, %p42
      %p44 = scmp.ne.s32.totalorder %s30, %s31
      %p45 = scmp.eq.s32.totalorder %s23, 1
      %p46 = por %p44, %p45
      %p48 = scmp.ne.s32.totalorder %s31, %s47
      %p49 = scmp.eq.s32.totalorder %s23, 0
      %p50 = por %p48, %p49
      %s52 = sadd.s32 %s51, 1
      %p55 = scmp.eq.s32.totalorder %s17, 1
      %p56 = scmp.ne.s32.totalorder %s51, %s53
      %p57 = scmp.eq.s32.totalorder %s17, 0
      %p58 = por %p56, %p57
      %p59 = scmp.ne.s32.totalorder %s51, %s53
      %p60 = scmp.eq.s32.totalorder %s22, 1
      %p61 = por %p59, %p60
      %p62 = scmp.ne.s32.totalorder %s53, %s54
      %p63 = scmp.eq.s32.totalorder %s22, 0
      %p64 = por %p62, %p63
      %p65 = scmp.ne.s32.totalorder %s53, %s54
      %p66 = scmp.eq.s32.totalorder %s23, 1
      %p67 = por %p65, %p66
      %p69 = scmp.ne.s32.totalorder %s54, %s68
      %p70 = scmp.eq.s32.totalorder %s23, 0
      %p71 = por %p69, %p70
      %s73 = sadd.s32 %s72, 1
      %p76 = scmp.eq.s32.totalorder %s17, 1
      %p77 = scmp.ne.s32.totalorder %s72, %s74
      %p78 = scmp.eq.s32.totalorder %s17, 0
      %p79 = por %p77, %p78
      %p80 = scmp.ne.s32.totalorder %s72, %s74
      %p81 = scmp.eq.s32.totalorder %s22, 1
      %p82 = por %p80, %p81
      %p83 = scmp.ne.s32.totalorder %s74, %s75
      %p84 = scmp.eq.s32.totalorder %s22, 0
      %p85 = por %p83, %p84
      %p86 = scmp.ne.s32.totalorder %s74, %s75
      %p87 = scmp.eq.s32.totalorder %s23, 1
      %p88 = por %p86, %p87
      %p90 = scmp.ne.s32.totalorder %s75, %s89
      %p91 = scmp.eq.s32.totalorder %s23, 0
      %p92 = por %p90, %p91
      %s94 = sadd.s32 %s93, 1
      %p97 = scmp.eq.s32.totalorder %s17, 1
      %p98 = scmp.ne.s32.totalorder %s93, %s95
      %p99 = scmp.eq.s32.totalorder %s17, 0
      %p100 = por %p98, %p99
      %p101 = scmp.ne.s32.totalorder %s93, %s95
      %p102 = scmp.eq.s32.totalorder %s22, 1
      %p103 = por %p101, %p102
      %p104 = scmp.ne.s32.totalorder %s95, %s96
      %p105 = scmp.eq.s32.totalorder %s22, 0
      %p106 = por %p104, %p105
      %p107 = scmp.ne.s32.totalorder %s95, %s96
      %p108 = scmp.eq.s32.totalorder %s23, 1
      %p109 = por %p107, %p108
      %p111 = scmp.ne.s32.totalorder %s96, %s110
      %p112 = scmp.eq.s32.totalorder %s23, 0
      %p113 = por %p111, %p112
      %s114 = ssub.s32 %s17, %s24
      %p115 = scmp.eq.s32.totalorder %s114, 0
      %s117 = sadd.s32 %s116, 1
      %s118 = scalar_select %p115, %s116, %s117
      %p121 = pneg %p115
      %p122 = scmp.eq.s32.totalorder %s17, 1
      %p123 = por %p121, %p122
      %p124 = scmp.ne.s32.totalorder %s116, %s119
      %p125 = scmp.eq.s32.totalorder %s17, 0
      %p126 = por %p124, %p125
      %p127 = scmp.ne.s32.totalorder %s116, %s119
      %p128 = scmp.eq.s32.totalorder %s22, 1
      %p129 = por %p127, %p128
      %p130 = scmp.ne.s32.totalorder %s119, %s120
      %p131 = scmp.eq.s32.totalorder %s22, 0
      %p132 = por %p130, %p131
      %p133 = scmp.ne.s32.totalorder %s119, %s120
      %p134 = scmp.eq.s32.totalorder %s23, 1
      %p135 = por %p133, %p134
      %p137 = scmp.ne.s32.totalorder %s120, %s136
      %p138 = scmp.eq.s32.totalorder %s23, 0
      %p139 = por %p137, %p138
      %p140 = scmp.le.s32.totalorder 1, %s17
      %p141 = scmp.lt.s32.totalorder %s17, 3
      %p142 = pnand %p140, %p141
      %p143 = pneg %p142
      // Predicated region
      $region9: #{tpu_custom_call.1} parent=5 // pred_check
        _
      $region10: #{tpu_custom_call.1} parent=5 // pred_check_branch
        %145 = sbr.rel (%p142) target = $region12
      $region11: #{tpu_custom_call.1} parent=5 // pred_region
        %s146 = ssub.s32 %s17, 1
        // Predicated region
        $region13: #{tpu_custom_call.1} parent=11 // pred_check
          %p147 = pneg %p64
        $region14: #{tpu_custom_call.1} parent=11 // pred_check_branch
          %149 = sbr.rel (%p147) target = $region16
        $region15: #{tpu_custom_call.1} parent=11 // pred_region
          _
        $region16: #{tpu_custom_call.1} parent=11 // pred_fallthru
          _
        // Predicated region
        $region17: #{tpu_custom_call.1} parent=11 // pred_check
          %p150 = pneg %p85
        $region18: #{tpu_custom_call.1} parent=11 // pred_check_branch
          %152 = sbr.rel (%p150) target = $region20
        $region19: #{tpu_custom_call.1} parent=11 // pred_region
          _
        $region20: #{tpu_custom_call.1} parent=11 // pred_fallthru
          _
        // Predicated region
        $region21: #{tpu_custom_call.1} parent=11 // pred_check
          %p153 = pneg %p106
        $region22: #{tpu_custom_call.1} parent=11 // pred_check_branch
          %155 = sbr.rel (%p153) target = $region24
        $region23: #{tpu_custom_call.1} parent=11 // pred_region
          %157 = vsyncadd [#allocation7], 0
          %s158 = sshll.u32 %s3, 4
          %s159 = int_to_ptr.hbm [resolvable:$true] %s158
          %s160 = sshll.u32 [#allocation6], 4
          %s161 = int_to_ptr.vmem [resolvable:$true] %s160
          %166 = dma.hbm_to_vmem [thread:$0]  %s159, 14336, %s161, [#allocation7], 64, 64, 4
        $region24: #{tpu_custom_call.1} parent=11 // pred_fallthru
          _
      $region12: #{tpu_custom_call.1} parent=5 // pred_fallthru
        _
      %p167 = scmp.lt.s32.totalorder %s17, 2
      // Predicated region
      $region25: #{tpu_custom_call.1} parent=5 // pred_check
        %p168 = pneg %p167
      $region26: #{tpu_custom_call.1} parent=5 // pred_check_branch
        %170 = sbr.rel (%p168) target = $region28
      $region27: #{tpu_custom_call.1} parent=5 // pred_region
        // Predicated region
        $region29: #{tpu_custom_call.1} parent=27 // pred_check
          %p171 = pneg %p37
        $region30: #{tpu_custom_call.1} parent=27 // pred_check_branch
          %173 = sbr.rel (%p171) target = $region32
        $region31: #{tpu_custom_call.1} parent=27 // pred_region
          %s174 = sand.u32 %s27, 1
          %s175 = scalar_lea.sflag [#allocation4], %s174
          %s176 = sand.u32 %s27, 1
          %s177 = smul.addr %s176, 128
          %s178 = scalar_lea.vmem [#allocation3], %s177
          %180 = vsyncadd %s175, 0
          %s181 = smul.addr %s17, 32
          %s182 = smul.addr %s181, 4
          %s183 = scalar_lea.hbm %s0, %s182
          %s184 = sshll.u32 %s183, 4
          %s185 = int_to_ptr.hbm [resolvable:$true] %s184
          %s186 = sshll.u32 %s178, 4
          %s187 = int_to_ptr.vmem [resolvable:$true] %s186
          %192 = dma.hbm_to_vmem [thread:$0]  %s185, 2048, %s187, %s175, 64, 64, 4
        $region32: #{tpu_custom_call.1} parent=27 // pred_fallthru
          _
      $region28: #{tpu_custom_call.1} parent=5 // pred_fallthru
        _
      %p193 = scmp.le.s32.totalorder 1, %s17
      %p194 = scmp.lt.s32.totalorder %s17, 3
      %p195 = pnand %p193, %p194
      %p196 = pneg %p195
      // Predicated region
      $region33: #{tpu_custom_call.1} parent=5 // pred_check
        _
      $region34: #{tpu_custom_call.1} parent=5 // pred_check_branch
        %198 = sbr.rel (%p195) target = $region36
      $region35: #{tpu_custom_call.1} parent=5 // pred_region
        %s199 = ssub.s32 %s17, 1
        %s200 = sand.u32 %s30, 1
        %s201 = scalar_lea.sflag [#allocation4], %s200
        %s202 = sand.u32 %s30, 1
        %s203 = smul.addr %s202, 128
        %s204 = scalar_lea.vmem [#allocation3], %s203
        // Predicated region
        $region37: #{tpu_custom_call.1} parent=35 // pred_check
          %p205 = pneg %p43
        $region38: #{tpu_custom_call.1} parent=35 // pred_check_branch
          %207 = sbr.rel (%p205) target = $region40
        $region39: #{tpu_custom_call.1} parent=35 // pred_region
          %209 = dma.done %s201, 2048
        $region40: #{tpu_custom_call.1} parent=35 // pred_fallthru
          _
        // Predicated region
        $region41: #{tpu_custom_call.1} parent=35 // pred_check
          %p210 = pneg %p106
        $region42: #{tpu_custom_call.1} parent=35 // pred_check_branch
          %212 = sbr.rel (%p210) target = $region44
        $region43: #{tpu_custom_call.1} parent=35 // pred_region
          %214 = dma.done [#allocation7], 14336
        $region44: #{tpu_custom_call.1} parent=35 // pred_fallthru
          _
        %s215 = sand.u32 %s30, 1
        %s216 = scalar_lea.sflag [#allocation4], %s215
        %s217 = sand.u32 %s30, 1
        %s218 = smul.addr %s217, 128
        %s219 = scalar_lea.vmem [#allocation3], %s218
        %p220 = pneg %p43
        %p221 = pneg %p40
        %p222 = pneg %p64
        %p223 = pneg %p61
        %p224 = pneg %p85
        %p225 = pneg %p82
        %p226 = pneg %p106
        %p227 = pneg %p103
        %p228 = pneg %p132
        %p229 = pneg %p129
        %s230 = sand.u32 %s119, 1
        %s231 = scalar_lea.sflag [#allocation5], %s230
        %s232 = sand.u32 %s119, 1
        %s233 = smul.addr %s232, 256
        %s234 = scalar_lea.vmem [#allocation8], %s233
        %v235 = vld [vmem:[%s204] sm:$0xf]
        %v236 = vld [vmem:[%s204 + $0x4] sm:$0xf]
        %v237 = vld [vmem:[%s204 + $0x8] sm:$0xf]
        %v238 = vld [vmem:[%s204 + $0xc] sm:$0xf]
        %v239 = vld [vmem:[%s204 + $0x10] sm:$0xf]
        %v240 = vld [vmem:[%s204 + $0x14] sm:$0xf]
        %v241 = vld [vmem:[%s204 + $0x18] sm:$0xf]
        %v242 = vld [vmem:[%s204 + $0x1c] sm:$0xf]
        %v243 = vld [vmem:[%s204 + $0x20] sm:$0xf]
        %v244 = vld [vmem:[%s204 + $0x24] sm:$0xf]
        %v245 = vld [vmem:[%s204 + $0x28] sm:$0xf]
        %v246 = vld [vmem:[%s204 + $0x2c] sm:$0xf]
        %v247 = vld [vmem:[%s204 + $0x30] sm:$0xf]
        %v248 = vld [vmem:[%s204 + $0x34] sm:$0xf]
        %v249 = vld [vmem:[%s204 + $0x38] sm:$0xf]
        %v250 = vld [vmem:[%s204 + $0x3c] sm:$0xf]
        %v251 = vld [vmem:[%s204 + $0x40] sm:$0xf]
        %v252 = vld [vmem:[%s204 + $0x44] sm:$0xf]
        %v253 = vld [vmem:[%s204 + $0x48] sm:$0xf]
        %v254 = vld [vmem:[%s204 + $0x4c] sm:$0xf]
        %v255 = vld [vmem:[%s204 + $0x50] sm:$0xf]
        %v256 = vld [vmem:[%s204 + $0x54] sm:$0xf]
        %v257 = vld [vmem:[%s204 + $0x58] sm:$0xf]
        %v258 = vld [vmem:[%s204 + $0x5c] sm:$0xf]
        %v259 = vld [vmem:[%s204 + $0x60] sm:$0xf]
        %v260 = vld [vmem:[%s204 + $0x64] sm:$0xf]
        %v261 = vld [vmem:[%s204 + $0x68] sm:$0xf]
        %v262 = vld [vmem:[%s204 + $0x6c] sm:$0xf]
        %v263 = vld [vmem:[%s204 + $0x70] sm:$0xf]
        %v264 = vld [vmem:[%s204 + $0x74] sm:$0xf]
        %v265 = vld [vmem:[%s204 + $0x78] sm:$0xf]
        %v266 = vld [vmem:[%s204 + $0x7c] sm:$0xf]
        %v267 = vunpack.c.l.bf16 %v235
        %v268 = vunpack.c.l.bf16 %v236
        %v269 = vunpack.c.l.bf16 %v237
        %v270 = vunpack.c.l.bf16 %v238
        %v271 = vunpack.c.l.bf16 %v239
        %v272 = vunpack.c.l.bf16 %v240
        %v273 = vunpack.c.l.bf16 %v241
        %v274 = vunpack.c.l.bf16 %v242
        %v275 = vunpack.c.l.bf16 %v243
        %v276 = vunpack.c.l.bf16 %v244
        %v277 = vunpack.c.l.bf16 %v245
        %v278 = vunpack.c.l.bf16 %v246
        %v279 = vunpack.c.l.bf16 %v247
        %v280 = vunpack.c.l.bf16 %v248
        %v281 = vunpack.c.l.bf16 %v249
        %v282 = vunpack.c.l.bf16 %v250
        %v283 = vunpack.c.l.bf16 %v251
        %v284 = vunpack.c.l.bf16 %v252
        %v285 = vunpack.c.l.bf16 %v253
        %v286 = vunpack.c.l.bf16 %v254
        %v287 = vunpack.c.l.bf16 %v255
        %v288 = vunpack.c.l.bf16 %v256
        %v289 = vunpack.c.l.bf16 %v257
        %v290 = vunpack.c.l.bf16 %v258
        %v291 = vunpack.c.l.bf16 %v259
        %v292 = vunpack.c.l.bf16 %v260
        %v293 = vunpack.c.l.bf16 %v261
        %v294 = vunpack.c.l.bf16 %v262
        %v295 = vunpack.c.l.bf16 %v263
        %v296 = vunpack.c.l.bf16 %v264
        %v297 = vunpack.c.l.bf16 %v265
        %v298 = vunpack.c.l.bf16 %v266
        %299 = vadd.xlane.f32.xlu0 %v267
        %v300 = vpop.xlane.xlu0 %299
        %301 = vadd.xlane.f32.xlu0 %v268
        %v302 = vpop.xlane.xlu0 %301
        %303 = vadd.xlane.f32.xlu0 %v269
        %v304 = vpop.xlane.xlu0 %303
        %305 = vadd.xlane.f32.xlu0 %v270
        %v306 = vpop.xlane.xlu0 %305
        %307 = vadd.xlane.f32.xlu0 %v271
        %v308 = vpop.xlane.xlu0 %307
        %309 = vadd.xlane.f32.xlu0 %v272
        %v310 = vpop.xlane.xlu0 %309
        %311 = vadd.xlane.f32.xlu0 %v273
        %v312 = vpop.xlane.xlu0 %311
        %313 = vadd.xlane.f32.xlu0 %v274
        %v314 = vpop.xlane.xlu0 %313
        %315 = vadd.xlane.f32.xlu0 %v275
        %v316 = vpop.xlane.xlu0 %315
        %317 = vadd.xlane.f32.xlu0 %v276
        %v318 = vpop.xlane.xlu0 %317
        %319 = vadd.xlane.f32.xlu0 %v277
        %v320 = vpop.xlane.xlu0 %319
        %321 = vadd.xlane.f32.xlu0 %v278
        %v322 = vpop.xlane.xlu0 %321
        %323 = vadd.xlane.f32.xlu0 %v279
        %v324 = vpop.xlane.xlu0 %323
        %325 = vadd.xlane.f32.xlu0 %v280
        %v326 = vpop.xlane.xlu0 %325
        %327 = vadd.xlane.f32.xlu0 %v281
        %v328 = vpop.xlane.xlu0 %327
        %329 = vadd.xlane.f32.xlu0 %v282
        %v330 = vpop.xlane.xlu0 %329
        %331 = vadd.xlane.f32.xlu0 %v283
        %v332 = vpop.xlane.xlu0 %331
        %333 = vadd.xlane.f32.xlu0 %v284
        %v334 = vpop.xlane.xlu0 %333
        %335 = vadd.xlane.f32.xlu0 %v285
        %v336 = vpop.xlane.xlu0 %335
        %337 = vadd.xlane.f32.xlu0 %v286
        %v338 = vpop.xlane.xlu0 %337
        %339 = vadd.xlane.f32.xlu0 %v287
        %v340 = vpop.xlane.xlu0 %339
        %341 = vadd.xlane.f32.xlu0 %v288
        %v342 = vpop.xlane.xlu0 %341
        %343 = vadd.xlane.f32.xlu0 %v289
        %v344 = vpop.xlane.xlu0 %343
        %345 = vadd.xlane.f32.xlu0 %v290
        %v346 = vpop.xlane.xlu0 %345
        %347 = vadd.xlane.f32.xlu0 %v291
        %v348 = vpop.xlane.xlu0 %347
        %349 = vadd.xlane.f32.xlu0 %v292
        %v350 = vpop.xlane.xlu0 %349
        %351 = vadd.xlane.f32.xlu0 %v293
        %v352 = vpop.xlane.xlu0 %351
        %353 = vadd.xlane.f32.xlu0 %v294
        %v354 = vpop.xlane.xlu0 %353
        %355 = vadd.xlane.f32.xlu0 %v295
        %v356 = vpop.xlane.xlu0 %355
        %357 = vadd.xlane.f32.xlu0 %v296
        %v358 = vpop.xlane.xlu0 %357
        %359 = vadd.xlane.f32.xlu0 %v297
        %v360 = vpop.xlane.xlu0 %359
        %361 = vadd.xlane.f32.xlu0 %v298
        %v362 = vpop.xlane.xlu0 %361
        %v363 = vrcp.pop 128.0
        %v364 = vmul.f32 128.0, %v363
        %v365 = vsub.f32 1.0, %v364
        %v366 = vmul.f32 %v363, %v365
        %v367 = vadd.f32 %v363, %v366
        %vm368 = vweird.f32 %v363
        %v369 = vsel %vm368, %v363, %v367
        %v370 = vmul.f32 %v300, %v369
        %v371 = vmul.f32 %v302, %v369
        %v372 = vmul.f32 %v304, %v369
        %v373 = vmul.f32 %v306, %v369
        %v374 = vmul.f32 %v308, %v369
        %v375 = vmul.f32 %v310, %v369
        %v376 = vmul.f32 %v312, %v369
        %v377 = vmul.f32 %v314, %v369
        %v378 = vmul.f32 %v316, %v369
        %v379 = vmul.f32 %v318, %v369
        %v380 = vmul.f32 %v320, %v369
        %v381 = vmul.f32 %v322, %v369
        %v382 = vmul.f32 %v324, %v369
        %v383 = vmul.f32 %v326, %v369
        %v384 = vmul.f32 %v328, %v369
        %v385 = vmul.f32 %v330, %v369
        %v386 = vmul.f32 %v332, %v369
        %v387 = vmul.f32 %v334, %v369
        %v388 = vmul.f32 %v336, %v369
        %v389 = vmul.f32 %v338, %v369
        %v390 = vmul.f32 %v340, %v369
        %v391 = vmul.f32 %v342, %v369
        %v392 = vmul.f32 %v344, %v369
        %v393 = vmul.f32 %v346, %v369
        %v394 = vmul.f32 %v348, %v369
        %v395 = vmul.f32 %v350, %v369
        %v396 = vmul.f32 %v352, %v369
        %v397 = vmul.f32 %v354, %v369
        %v398 = vmul.f32 %v356, %v369
        %v399 = vmul.f32 %v358, %v369
        %v400 = vmul.f32 %v360, %v369
        %v401 = vmul.f32 %v362, %v369
        %v434 = vlaneseq
        %v435 = vand.u32 %v434, 127
        %v436 = vperm.slane %v370, %v435
        %v437 = vperm.slane %v371, %v435
        %v438 = vperm.slane %v372, %v435
        %v439 = vperm.slane %v373, %v435
        %v440 = vperm.slane %v374, %v435
        %v441 = vperm.slane %v375, %v435
        %v442 = vperm.slane %v376, %v435
        %v443 = vperm.slane %v377, %v435
        %v444 = vperm.slane %v378, %v435
        %v445 = vperm.slane %v379, %v435
        %v446 = vperm.slane %v380, %v435
        %v447 = vperm.slane %v381, %v435
        %v448 = vperm.slane %v382, %v435
        %v449 = vperm.slane %v383, %v435
        %v450 = vperm.slane %v384, %v435
        %v451 = vperm.slane %v385, %v435
        %v452 = vperm.slane %v386, %v435
        %v453 = vperm.slane %v387, %v435
        %v454 = vperm.slane %v388, %v435
        %v455 = vperm.slane %v389, %v435
        %v456 = vperm.slane %v390, %v435
        %v457 = vperm.slane %v391, %v435
        %v458 = vperm.slane %v392, %v435
        %v459 = vperm.slane %v393, %v435
        %v460 = vperm.slane %v394, %v435
        %v461 = vperm.slane %v395, %v435
        %v462 = vperm.slane %v396, %v435
        %v463 = vperm.slane %v397, %v435
        %v464 = vperm.slane %v398, %v435
        %v465 = vperm.slane %v399, %v435
        %v466 = vperm.slane %v400, %v435
        %v467 = vperm.slane %v401, %v435
        %vm468 = vcmask 1041409
        %v469 = vsel %vm468, %v437, %v436
        %vm470 = vcmask 1042434
        %v471 = vsel %vm470, %v438, %v469
        %vm472 = vcmask 1043459
        %v473 = vsel %vm472, %v439, %v471
        %vm474 = vcmask 1044484
        %v475 = vsel %vm474, %v440, %v473
        %vm476 = vcmask 1045509
        %v477 = vsel %vm476, %v441, %v475
        %vm478 = vcmask 1046534
        %v479 = vsel %vm478, %v442, %v477
        %vm480 = vcmask 1047559
        %v481 = vsel %vm480, %v443, %v479
        %v482 = vsel %vm468, %v445, %v444
        %v483 = vsel %vm470, %v446, %v482
        %v484 = vsel %vm472, %v447, %v483
        %v485 = vsel %vm474, %v448, %v484
        %v486 = vsel %vm476, %v449, %v485
        %v487 = vsel %vm478, %v450, %v486
        %v488 = vsel %vm480, %v451, %v487
        %v489 = vsel %vm468, %v453, %v452
        %v490 = vsel %vm470, %v454, %v489
        %v491 = vsel %vm472, %v455, %v490
        %v492 = vsel %vm474, %v456, %v491
        %v493 = vsel %vm476, %v457, %v492
        %v494 = vsel %vm478, %v458, %v493
        %v495 = vsel %vm480, %v459, %v494
        %v496 = vsel %vm468, %v461, %v460
        %v497 = vsel %vm470, %v462, %v496
        %v498 = vsel %vm472, %v463, %v497
        %v499 = vsel %vm474, %v464, %v498
        %v500 = vsel %vm476, %v465, %v499
        %v501 = vsel %vm478, %v466, %v500
        %v502 = vsel %vm480, %v467, %v501
        %vm507 = vcmask 64512
        %v508 = vsel %vm507, %v481, 0.0
        %509 = vadd.xlane.f32.xlu0 %v508
        %v510 = vpop.xlane.xlu0 %509
        %v511 = vsel %vm507, %v488, 0.0
        %512 = vadd.xlane.f32.xlu0 %v511
        %v513 = vpop.xlane.xlu0 %512
        %v514 = vsel %vm507, %v495, 0.0
        %515 = vadd.xlane.f32.xlu0 %v514
        %v516 = vpop.xlane.xlu0 %515
        %v517 = vsel %vm507, %v502, 0.0
        %518 = vadd.xlane.f32.xlu0 %v517
        %v519 = vpop.xlane.xlu0 %518
        %v520 = vrcp.pop 8.0
        %v521 = vmul.f32 8.0, %v520
        %v522 = vsub.f32 1.0, %v521
        %v523 = vmul.f32 %v520, %v522
        %v524 = vadd.f32 %v520, %v523
        %vm525 = vweird.f32 %v520
        %v526 = vsel %vm525, %v520, %v524
        %v527 = vmul.f32 %v510, %v526
        %v528 = vmul.f32 %v513, %v526
        %v529 = vmul.f32 %v516, %v526
        %v530 = vmul.f32 %v519, %v526
        %531 = vmax.xlane.f32.xlu0 %v267
        %v532 = vpop.xlane.xlu0 %531
        %533 = vmax.xlane.f32.xlu0 %v268
        %v534 = vpop.xlane.xlu0 %533
        %535 = vmax.xlane.f32.xlu0 %v269
        %v536 = vpop.xlane.xlu0 %535
        %537 = vmax.xlane.f32.xlu0 %v270
        %v538 = vpop.xlane.xlu0 %537
        %539 = vmax.xlane.f32.xlu0 %v271
        %v540 = vpop.xlane.xlu0 %539
        %541 = vmax.xlane.f32.xlu0 %v272
        %v542 = vpop.xlane.xlu0 %541
        %543 = vmax.xlane.f32.xlu0 %v273
        %v544 = vpop.xlane.xlu0 %543
        %545 = vmax.xlane.f32.xlu0 %v274
        %v546 = vpop.xlane.xlu0 %545
        %547 = vmax.xlane.f32.xlu0 %v275
        %v548 = vpop.xlane.xlu0 %547
        %549 = vmax.xlane.f32.xlu0 %v276
        %v550 = vpop.xlane.xlu0 %549
        %551 = vmax.xlane.f32.xlu0 %v277
        %v552 = vpop.xlane.xlu0 %551
        %553 = vmax.xlane.f32.xlu0 %v278
        %v554 = vpop.xlane.xlu0 %553
        %555 = vmax.xlane.f32.xlu0 %v279
        %v556 = vpop.xlane.xlu0 %555
        %557 = vmax.xlane.f32.xlu0 %v280
        %v558 = vpop.xlane.xlu0 %557
        %559 = vmax.xlane.f32.xlu0 %v281
        %v560 = vpop.xlane.xlu0 %559
        %561 = vmax.xlane.f32.xlu0 %v282
        %v562 = vpop.xlane.xlu0 %561
        %563 = vmax.xlane.f32.xlu0 %v283
        %v564 = vpop.xlane.xlu0 %563
        %565 = vmax.xlane.f32.xlu0 %v284
        %v566 = vpop.xlane.xlu0 %565
        %567 = vmax.xlane.f32.xlu0 %v285
        %v568 = vpop.xlane.xlu0 %567
        %569 = vmax.xlane.f32.xlu0 %v286
        %v570 = vpop.xlane.xlu0 %569
        %571 = vmax.xlane.f32.xlu0 %v287
        %v572 = vpop.xlane.xlu0 %571
        %573 = vmax.xlane.f32.xlu0 %v288
        %v574 = vpop.xlane.xlu0 %573
        %575 = vmax.xlane.f32.xlu0 %v289
        %v576 = vpop.xlane.xlu0 %575
        %577 = vmax.xlane.f32.xlu0 %v290
        %v578 = vpop.xlane.xlu0 %577
        %579 = vmax.xlane.f32.xlu0 %v291
        %v580 = vpop.xlane.xlu0 %579
        %581 = vmax.xlane.f32.xlu0 %v292
        %v582 = vpop.xlane.xlu0 %581
        %583 = vmax.xlane.f32.xlu0 %v293
        %v584 = vpop.xlane.xlu0 %583
        %585 = vmax.xlane.f32.xlu0 %v294
        %v586 = vpop.xlane.xlu0 %585
        %587 = vmax.xlane.f32.xlu0 %v295
        %v588 = vpop.xlane.xlu0 %587
        %589 = vmax.xlane.f32.xlu0 %v296
        %v590 = vpop.xlane.xlu0 %589
        %591 = vmax.xlane.f32.xlu0 %v297
        %v592 = vpop.xlane.xlu0 %591
        %593 = vmax.xlane.f32.xlu0 %v298
        %v594 = vpop.xlane.xlu0 %593
        %v627 = vperm.slane %v532, %v435
        %v628 = vperm.slane %v534, %v435
        %v629 = vperm.slane %v536, %v435
        %v630 = vperm.slane %v538, %v435
        %v631 = vperm.slane %v540, %v435
        %v632 = vperm.slane %v542, %v435
        %v633 = vperm.slane %v544, %v435
        %v634 = vperm.slane %v546, %v435
        %v635 = vperm.slane %v548, %v435
        %v636 = vperm.slane %v550, %v435
        %v637 = vperm.slane %v552, %v435
        %v638 = vperm.slane %v554, %v435
        %v639 = vperm.slane %v556, %v435
        %v640 = vperm.slane %v558, %v435
        %v641 = vperm.slane %v560, %v435
        %v642 = vperm.slane %v562, %v435
        %v643 = vperm.slane %v564, %v435
        %v644 = vperm.slane %v566, %v435
        %v645 = vperm.slane %v568, %v435
        %v646 = vperm.slane %v570, %v435
        %v647 = vperm.slane %v572, %v435
        %v648 = vperm.slane %v574, %v435
        %v649 = vperm.slane %v576, %v435
        %v650 = vperm.slane %v578, %v435
        %v651 = vperm.slane %v580, %v435
        %v652 = vperm.slane %v582, %v435
        %v653 = vperm.slane %v584, %v435
        %v654 = vperm.slane %v586, %v435
        %v655 = vperm.slane %v588, %v435
        %v656 = vperm.slane %v590, %v435
        %v657 = vperm.slane %v592, %v435
        %v658 = vperm.slane %v594, %v435
        %v659 = vsel %vm468, %v628, %v627
        %v660 = vsel %vm470, %v629, %v659
        %v661 = vsel %vm472, %v630, %v660
        %v662 = vsel %vm474, %v631, %v661
        %v663 = vsel %vm476, %v632, %v662
        %v664 = vsel %vm478, %v633, %v663
        %v665 = vsel %vm480, %v634, %v664
        %v666 = vsel %vm468, %v636, %v635
        %v667 = vsel %vm470, %v637, %v666
        %v668 = vsel %vm472, %v638, %v667
        %v669 = vsel %vm474, %v639, %v668
        %v670 = vsel %vm476, %v640, %v669
        %v671 = vsel %vm478, %v641, %v670
        %v672 = vsel %vm480, %v642, %v671
        %v673 = vsel %vm468, %v644, %v643
        %v674 = vsel %vm470, %v645, %v673
        %v675 = vsel %vm472, %v646, %v674
        %v676 = vsel %vm474, %v647, %v675
        %v677 = vsel %vm476, %v648, %v676
        %v678 = vsel %vm478, %v649, %v677
        %v679 = vsel %vm480, %v650, %v678
        %v680 = vsel %vm468, %v652, %v651
        %v681 = vsel %vm470, %v653, %v680
        %v682 = vsel %vm472, %v654, %v681
        %v683 = vsel %vm474, %v655, %v682
        %v684 = vsel %vm476, %v656, %v683
        %v685 = vsel %vm478, %v657, %v684
        %v686 = vsel %vm480, %v658, %v685
        %v691 = vsel %vm507, %v665, -inf
        %692 = vmax.xlane.f32.xlu0 %v691
        %v693 = vpop.xlane.xlu0 %692
        %v694 = vsel %vm507, %v672, -inf
        %695 = vmax.xlane.f32.xlu0 %v694
        %v696 = vpop.xlane.xlu0 %695
        %v697 = vsel %vm507, %v679, -inf
        %698 = vmax.xlane.f32.xlu0 %v697
        %v699 = vpop.xlane.xlu0 %698
        %v700 = vsel %vm507, %v686, -inf
        %701 = vmax.xlane.f32.xlu0 %v700
        %v702 = vpop.xlane.xlu0 %701
        %vm703 = vcmask 7168
        %v704 = vsel %vm703, %v527, %v693
        %v705 = vsel %vm703, %v528, %v696
        %v706 = vsel %vm703, %v529, %v699
        %v707 = vsel %vm703, %v530, %v702
        %v708 = vld [vmem:[%s1] sm:$0x3]
        %vm709 = vcmask 261120
        %v711 = vsel %vm709, %v708, 0
        %713 = vmatpush.msra.mxu0 0.0
        %714 = vmatpush.msra.mxu0 0.0
        %715 = vmatpush.msra.mxu0 0.0
        %716 = vmatpush.msra.mxu0 0.0
        %717 = vmatpush.msra.mxu0 0.0
        %718 = vmatpush.msra.mxu0 0.0
        %719 = vmatpush.msra.mxu0 0.0
        %720 = vmatpush.msra.mxu0 0.0
        %721 = vmatpush.msra.mxu0 0.0
        %722 = vmatpush.msra.mxu0 0.0
        %723 = vmatpush.msra.mxu0 0.0
        %724 = vmatpush.msra.mxu0 0.0
        %725 = vmatpush.msra.mxu0 %v707
        %726 = vmatpush.msra.mxu0 %v706
        %727 = vmatpush.msra.mxu0 %v705
        %728 = vmatpush.msra.mxu0 %v704
        %729 = vmatmul.f32.gmra.mxu0 %v711
        %v730 = vpop.f32.mrf.mxu0
        %v731 = vadd.f32 0.0, %v730
        %732 = vdwg.mxu0
        %v733 = vmax.f32 %v731, 0.0
        %v734 = vld [vmem:[%s2] sm:$0xff]
        %v735 = vld [vmem:[%s2 + $0x8] sm:$0xff]
        %v736 = vld [vmem:[%s2 + $0x10] sm:$0xff]
        %v737 = vld [vmem:[%s2 + $0x18] sm:$0xff]
        %vm738 = vcmask 15360
        %v740 = vsel %vm738, %v734, 0
        %v743 = vsel %vm738, %v735, 0
        %v746 = vsel %vm738, %v736, 0
        %v749 = vsel %vm738, %v737, 0
        %vm751 = vcmask 1041408
        %v753 = vsel %vm751, %v733, 0
        %755 = vmatpush.msra.mxu0 0.0
        %756 = vmatpush.msra.mxu0 0.0
        %757 = vmatpush.msra.mxu0 0.0
        %758 = vmatpush.msra.mxu0 0.0
        %759 = vmatpush.msra.mxu0 0.0
        %760 = vmatpush.msra.mxu0 0.0
        %761 = vmatpush.msra.mxu0 0.0
        %762 = vmatpush.msra.mxu0 0.0
        %763 = vmatpush.msra.mxu0 0.0
        %764 = vmatpush.msra.mxu0 0.0
        %765 = vmatpush.msra.mxu0 0.0
        %766 = vmatpush.msra.mxu0 0.0
        %767 = vmatpush.msra.mxu0 0.0
        %768 = vmatpush.msra.mxu0 0.0
        %769 = vmatpush.msra.mxu0 0.0
        %770 = vmatpush.msra.mxu0 %v753
        %771 = vmatmul.f32.gmra.mxu0 %v740
        %v772 = vpop.f32.mrf.mxu0
        %v773 = vadd.f32 0.0, %v772
        %774 = vmatmul.f32.gmra.mxu0 %v743
        %v775 = vpop.f32.mrf.mxu0
        %v776 = vadd.f32 0.0, %v775
        %777 = vmatmul.f32.gmra.mxu0 %v746
        %v778 = vpop.f32.mrf.mxu0
        %v779 = vadd.f32 0.0, %v778
        %780 = vmatmul.f32.gmra.mxu0 %v749
        %v781 = vpop.f32.mrf.mxu0
        %v782 = vadd.f32 0.0, %v781
        %783 = vdwg.mxu0
        %v784 = vsel %vm738, %v773, 0.0
        %785 = vadd.xlane.f32.xlu0 %v784
        %v786 = vpop.xlane.xlu0 %785
        %v787 = vsel %vm738, %v776, 0.0
        %788 = vadd.xlane.f32.xlu0 %v787
        %v789 = vpop.xlane.xlu0 %788
        %v790 = vsel %vm738, %v779, 0.0
        %791 = vadd.xlane.f32.xlu0 %v790
        %v792 = vpop.xlane.xlu0 %791
        %v793 = vsel %vm738, %v782, 0.0
        %794 = vadd.xlane.f32.xlu0 %v793
        %v795 = vpop.xlane.xlu0 %794
        %v796 = vxor.u32 %v786, 2147483648
        %v797 = vxor.u32 %v789, 2147483648
        %v798 = vxor.u32 %v792, 2147483648
        %v799 = vxor.u32 %v795, 2147483648
        %v800 = vmul.f32 %v796, 1.442695
        %v801 = vpow.pop %v800
        %v802 = vmul.f32 %v797, 1.442695
        %v803 = vpow.pop %v802
        %v804 = vmul.f32 %v798, 1.442695
        %v805 = vpow.pop %v804
        %v806 = vmul.f32 %v799, 1.442695
        %v807 = vpow.pop %v806
        %v808 = vadd.f32 %v801, 1.0
        %v809 = vadd.f32 %v803, 1.0
        %v810 = vadd.f32 %v805, 1.0
        %v811 = vadd.f32 %v807, 1.0
        %v812 = vrcp.pop %v808
        %v813 = vmul.f32 %v808, %v812
        %v814 = vsub.f32 1.0, %v813
        %v815 = vmul.f32 %v812, %v814
        %v816 = vadd.f32 %v812, %v815
        %vm817 = vweird.f32 %v808
        %vm818 = vweird.f32 %v812
        %vm819 = vmor %vm817, %vm818
        %v820 = vsel %vm819, %v812, %v816
        %v821 = vand.u32 2147483647, %v808
        %vm822 = vcmp.eq.f32.partialorder %v821, 8.507059e+37
        %v823 = vand.u32 %v808, 2147483648
        %v824 = vor.u32 1.1754944e-38, %v823
        %v825 = vsel %vm822, %v824, %v820
        %v826 = vmul.f32 1.0, %v825
        %v827 = vrcp.pop %v809
        %v828 = vmul.f32 %v809, %v827
        %v829 = vsub.f32 1.0, %v828
        %v830 = vmul.f32 %v827, %v829
        %v831 = vadd.f32 %v827, %v830
        %vm832 = vweird.f32 %v809
        %vm833 = vweird.f32 %v827
        %vm834 = vmor %vm832, %vm833
        %v835 = vsel %vm834, %v827, %v831
        %v836 = vand.u32 2147483647, %v809
        %vm837 = vcmp.eq.f32.partialorder %v836, 8.507059e+37
        %v838 = vand.u32 %v809, 2147483648
        %v839 = vor.u32 1.1754944e-38, %v838
        %v840 = vsel %vm837, %v839, %v835
        %v841 = vmul.f32 1.0, %v840
        %v842 = vrcp.pop %v810
        %v843 = vmul.f32 %v810, %v842
        %v844 = vsub.f32 1.0, %v843
        %v845 = vmul.f32 %v842, %v844
        %v846 = vadd.f32 %v842, %v845
        %vm847 = vweird.f32 %v810
        %vm848 = vweird.f32 %v842
        %vm849 = vmor %vm847, %vm848
        %v850 = vsel %vm849, %v842, %v846
        %v851 = vand.u32 2147483647, %v810
        %vm852 = vcmp.eq.f32.partialorder %v851, 8.507059e+37
        %v853 = vand.u32 %v810, 2147483648
        %v854 = vor.u32 1.1754944e-38, %v853
        %v855 = vsel %vm852, %v854, %v850
        %v856 = vmul.f32 1.0, %v855
        %v857 = vrcp.pop %v811
        %v858 = vmul.f32 %v811, %v857
        %v859 = vsub.f32 1.0, %v858
        %v860 = vmul.f32 %v857, %v859
        %v861 = vadd.f32 %v857, %v860
        %vm862 = vweird.f32 %v811
        %vm863 = vweird.f32 %v857
        %vm864 = vmor %vm862, %vm863
        %v865 = vsel %vm864, %v857, %v861
        %v866 = vand.u32 2147483647, %v811
        %vm867 = vcmp.eq.f32.partialorder %v866, 8.507059e+37
        %v868 = vand.u32 %v811, 2147483648
        %v869 = vor.u32 1.1754944e-38, %v868
        %v870 = vsel %vm867, %v869, %v865
        %v871 = vmul.f32 1.0, %v870
        %v876 = vperm.slane %v826, 0
        %v877 = vperm.slane %v826, 1
        %v878 = vperm.slane %v826, 2
        %v879 = vperm.slane %v826, 3
        %v880 = vperm.slane %v826, 4
        %v881 = vperm.slane %v826, 5
        %v882 = vperm.slane %v826, 6
        %v883 = vperm.slane %v826, 7
        %v884 = vperm.slane %v841, 0
        %v885 = vperm.slane %v841, 1
        %v886 = vperm.slane %v841, 2
        %v887 = vperm.slane %v841, 3
        %v888 = vperm.slane %v841, 4
        %v889 = vperm.slane %v841, 5
        %v890 = vperm.slane %v841, 6
        %v891 = vperm.slane %v841, 7
        %v892 = vperm.slane %v856, 0
        %v893 = vperm.slane %v856, 1
        %v894 = vperm.slane %v856, 2
        %v895 = vperm.slane %v856, 3
        %v896 = vperm.slane %v856, 4
        %v897 = vperm.slane %v856, 5
        %v898 = vperm.slane %v856, 6
        %v899 = vperm.slane %v856, 7
        %v900 = vperm.slane %v871, 0
        %v901 = vperm.slane %v871, 1
        %v902 = vperm.slane %v871, 2
        %v903 = vperm.slane %v871, 3
        %v904 = vperm.slane %v871, 4
        %v905 = vperm.slane %v871, 5
        %v906 = vperm.slane %v871, 6
        %v907 = vperm.slane %v871, 7
        %v940 = vmul.f32 %v267, %v876
        %v941 = vmul.f32 %v268, %v877
        %v942 = vmul.f32 %v269, %v878
        %v943 = vmul.f32 %v270, %v879
        %v944 = vmul.f32 %v271, %v880
        %v945 = vmul.f32 %v272, %v881
        %v946 = vmul.f32 %v273, %v882
        %v947 = vmul.f32 %v274, %v883
        %v948 = vmul.f32 %v275, %v884
        %v949 = vmul.f32 %v276, %v885
        %v950 = vmul.f32 %v277, %v886
        %v951 = vmul.f32 %v278, %v887
        %v952 = vmul.f32 %v279, %v888
        %v953 = vmul.f32 %v280, %v889
        %v954 = vmul.f32 %v281, %v890
        %v955 = vmul.f32 %v282, %v891
        %v956 = vmul.f32 %v283, %v892
        %v957 = vmul.f32 %v284, %v893
        %v958 = vmul.f32 %v285, %v894
        %v959 = vmul.f32 %v286, %v895
        %v960 = vmul.f32 %v287, %v896
        %v961 = vmul.f32 %v288, %v897
        %v962 = vmul.f32 %v289, %v898
        %v963 = vmul.f32 %v290, %v899
        %v964 = vmul.f32 %v291, %v900
        %v965 = vmul.f32 %v292, %v901
        %v966 = vmul.f32 %v293, %v902
        %v967 = vmul.f32 %v294, %v903
        %v968 = vmul.f32 %v295, %v904
        %v969 = vmul.f32 %v296, %v905
        %v970 = vmul.f32 %v297, %v906
        %v971 = vmul.f32 %v298, %v907
        %v972 = vadd.f32 %v940, %v941
        %v973 = vadd.f32 %v972, %v942
        %v974 = vadd.f32 %v973, %v943
        %v975 = vadd.f32 %v974, %v944
        %v976 = vadd.f32 %v975, %v945
        %v977 = vadd.f32 %v976, %v946
        %v978 = vadd.f32 %v977, %v947
        %v979 = vadd.f32 %v978, %v948
        %v980 = vadd.f32 %v979, %v949
        %v981 = vadd.f32 %v980, %v950
        %v982 = vadd.f32 %v981, %v951
        %v983 = vadd.f32 %v982, %v952
        %v984 = vadd.f32 %v983, %v953
        %v985 = vadd.f32 %v984, %v954
        %v986 = vadd.f32 %v985, %v955
        %v987 = vadd.f32 %v986, %v956
        %v988 = vadd.f32 %v987, %v957
        %v989 = vadd.f32 %v988, %v958
        %v990 = vadd.f32 %v989, %v959
        %v991 = vadd.f32 %v990, %v960
        %v992 = vadd.f32 %v991, %v961
        %v993 = vadd.f32 %v992, %v962
        %v994 = vadd.f32 %v993, %v963
        %v995 = vadd.f32 %v994, %v964
        %v996 = vadd.f32 %v995, %v965
        %v997 = vadd.f32 %v996, %v966
        %v998 = vadd.f32 %v997, %v967
        %v999 = vadd.f32 %v998, %v968
        %v1000 = vadd.f32 %v999, %v969
        %v1001 = vadd.f32 %v1000, %v970
        %v1002 = vadd.f32 %v1001, %v971
        %v1003 = vrcp.pop 32.0
        %v1004 = vmul.f32 32.0, %v1003
        %v1005 = vsub.f32 1.0, %v1004
        %v1006 = vmul.f32 %v1003, %v1005
        %v1007 = vadd.f32 %v1003, %v1006
        %vm1008 = vweird.f32 %v1003
        %v1009 = vsel %vm1008, %v1003, %v1007
        %v1010 = vmul.f32 %v1002, %v1009
        %v1011 = vmax.f32 %v940, %v944
        %v1012 = vmax.f32 %v941, %v945
        %v1013 = vmax.f32 %v942, %v946
        %v1014 = vmax.f32 %v943, %v947
        %v1015 = vmax.f32 %v1011, %v948
        %v1016 = vmax.f32 %v1012, %v949
        %v1017 = vmax.f32 %v1013, %v950
        %v1018 = vmax.f32 %v1014, %v951
        %v1019 = vmax.f32 %v1015, %v952
        %v1020 = vmax.f32 %v1016, %v953
        %v1021 = vmax.f32 %v1017, %v954
        %v1022 = vmax.f32 %v1018, %v955
        %v1023 = vmax.f32 %v1019, %v956
        %v1024 = vmax.f32 %v1020, %v957
        %v1025 = vmax.f32 %v1021, %v958
        %v1026 = vmax.f32 %v1022, %v959
        %v1027 = vmax.f32 %v1023, %v960
        %v1028 = vmax.f32 %v1024, %v961
        %v1029 = vmax.f32 %v1025, %v962
        %v1030 = vmax.f32 %v1026, %v963
        %v1031 = vmax.f32 %v1027, %v964
        %v1032 = vmax.f32 %v1028, %v965
        %v1033 = vmax.f32 %v1029, %v966
        %v1034 = vmax.f32 %v1030, %v967
        %v1035 = vmax.f32 %v1031, %v968
        %v1036 = vmax.f32 %v1032, %v969
        %v1037 = vmax.f32 %v1033, %v970
        %v1038 = vmax.f32 %v1034, %v971
        %v1039 = vmax.f32 %v1035, %v1036
        %v1040 = vmax.f32 %v1037, %v1038
        %v1041 = vmax.f32 %v1039, %v1040
        %1042 = vst [vmem:[#allocation2] sm:$0x7] 0.0
        %1043 = vst [vmem:[#allocation2 + $0x8] sm:$0x7] 0.0
        %1044 = vst [vmem:[#allocation2 + $0x10] sm:$0x38] 0.0
        %1045 = vst [vmem:[#allocation2 + $0x18] sm:$0x38] 0.0
        %v1047 = vrot.slane %v1010, 5
        %1049 = vst [vmem:[#allocation2] sm:$0xf8] %v1047
        %1050 = vst [vmem:[#allocation2 + $0x10] sm:$0x7] %v1047
        %v1052 = vrot.slane %v1041, 5
        %1054 = vst [vmem:[#allocation2 + $0x8] sm:$0xf8] %v1052
        %1055 = vst [vmem:[#allocation2 + $0x18] sm:$0x7] %v1052
        %v1056 = vld [vmem:[#allocation2] sm:$0xff]
        %v1057 = vld [vmem:[#allocation2 + $0x8] sm:$0xff]
        %v1058 = vpack.c.bf16 %v1056, %v1056
        %v1059 = vpack.c.bf16 %v1057, %v1057
        %v1060 = vld [vmem:[#allocation6] sm:$0xf]
        %v1061 = vld [vmem:[#allocation6 + $0x4] sm:$0xf]
        %v1062 = vld [vmem:[#allocation6 + $0x8] sm:$0xf]
        %v1063 = vld [vmem:[#allocation6 + $0xc] sm:$0xf]
        %v1064 = vld [vmem:[#allocation6 + $0x10] sm:$0xf]
        %v1065 = vld [vmem:[#allocation6 + $0x14] sm:$0xf]
        %v1066 = vld [vmem:[#allocation6 + $0x18] sm:$0xf]
        %v1067 = vld [vmem:[#allocation6 + $0x1c] sm:$0xf]
        %v1068 = vld [vmem:[#allocation6 + $0x20] sm:$0xf]
        %v1069 = vld [vmem:[#allocation6 + $0x24] sm:$0xf]
        %v1070 = vld [vmem:[#allocation6 + $0x28] sm:$0xf]
        %v1071 = vld [vmem:[#allocation6 + $0x2c] sm:$0xf]
        %v1072 = vld [vmem:[#allocation6 + $0x30] sm:$0xf]
        %v1073 = vld [vmem:[#allocation6 + $0x34] sm:$0xf]
        %v1074 = vld [vmem:[#allocation6 + $0x38] sm:$0xf]
        %v1075 = vld [vmem:[#allocation6 + $0x3c] sm:$0xf]
        %v1076 = vld [vmem:[#allocation6 + $0x40] sm:$0xf]
        %v1077 = vld [vmem:[#allocation6 + $0x44] sm:$0xf]
        %v1078 = vld [vmem:[#allocation6 + $0x48] sm:$0xf]
        %v1079 = vld [vmem:[#allocation6 + $0x4c] sm:$0xf]
        %v1080 = vld [vmem:[#allocation6 + $0x50] sm:$0xf]
        %v1081 = vld [vmem:[#allocation6 + $0x54] sm:$0xf]
        %v1082 = vld [vmem:[#allocation6 + $0x58] sm:$0xf]
        %v1083 = vld [vmem:[#allocation6 + $0x5c] sm:$0xf]
        %v1084 = vld [vmem:[#allocation6 + $0x60] sm:$0xf]
        %v1085 = vld [vmem:[#allocation6 + $0x64] sm:$0xf]
        %v1086 = vld [vmem:[#allocation6 + $0x68] sm:$0xf]
        %v1087 = vld [vmem:[#allocation6 + $0x6c] sm:$0xf]
        %v1088 = vld [vmem:[#allocation6 + $0x70] sm:$0xf]
        %v1089 = vld [vmem:[#allocation6 + $0x74] sm:$0xf]
        %v1090 = vld [vmem:[#allocation6 + $0x78] sm:$0xf]
        %v1091 = vld [vmem:[#allocation6 + $0x7c] sm:$0xf]
        %v1092 = vld [vmem:[#allocation2] sm:$0xfe]
        %v1093 = vld [vmem:[#allocation2 + $0x8] sm:$0xfe]
        %v1094 = vld [vmem:[#allocation2 + $0x10] sm:$0x1]
        %v1095 = vld [vmem:[#allocation2 + $0x18] sm:$0x1]
        %v1096 = vpack.c.bf16 %v1094, %v1092
        %v1097 = vpack.c.bf16 %v1095, %v1093
        %s1098 = scalar_lea.vmem [#allocation6], 128
        %v1099 = vld [vmem:[%s1098] sm:$0xf]
        %v1100 = vld [vmem:[%s1098 + $0x4] sm:$0xf]
        %v1101 = vld [vmem:[%s1098 + $0x8] sm:$0xf]
        %v1102 = vld [vmem:[%s1098 + $0xc] sm:$0xf]
        %v1103 = vld [vmem:[%s1098 + $0x10] sm:$0xf]
        %v1104 = vld [vmem:[%s1098 + $0x14] sm:$0xf]
        %v1105 = vld [vmem:[%s1098 + $0x18] sm:$0xf]
        %v1106 = vld [vmem:[%s1098 + $0x1c] sm:$0xf]
        %v1107 = vld [vmem:[%s1098 + $0x20] sm:$0xf]
        %v1108 = vld [vmem:[%s1098 + $0x24] sm:$0xf]
        %v1109 = vld [vmem:[%s1098 + $0x28] sm:$0xf]
        %v1110 = vld [vmem:[%s1098 + $0x2c] sm:$0xf]
        %v1111 = vld [vmem:[%s1098 + $0x30] sm:$0xf]
        %v1112 = vld [vmem:[%s1098 + $0x34] sm:$0xf]
        %v1113 = vld [vmem:[%s1098 + $0x38] sm:$0xf]
        %v1114 = vld [vmem:[%s1098 + $0x3c] sm:$0xf]
        %v1115 = vld [vmem:[%s1098 + $0x40] sm:$0xf]
        %v1116 = vld [vmem:[%s1098 + $0x44] sm:$0xf]
        %v1117 = vld [vmem:[%s1098 + $0x48] sm:$0xf]
        %v1118 = vld [vmem:[%s1098 + $0x4c] sm:$0xf]
        %v1119 = vld [vmem:[%s1098 + $0x50] sm:$0xf]
        %v1120 = vld [vmem:[%s1098 + $0x54] sm:$0xf]
        %v1121 = vld [vmem:[%s1098 + $0x58] sm:$0xf]
        %v1122 = vld [vmem:[%s1098 + $0x5c] sm:$0xf]
        %v1123 = vld [vmem:[%s1098 + $0x60] sm:$0xf]
        %v1124 = vld [vmem:[%s1098 + $0x64] sm:$0xf]
        %v1125 = vld [vmem:[%s1098 + $0x68] sm:$0xf]
        %v1126 = vld [vmem:[%s1098 + $0x6c] sm:$0xf]
        %v1127 = vld [vmem:[%s1098 + $0x70] sm:$0xf]
        %v1128 = vld [vmem:[%s1098 + $0x74] sm:$0xf]
        %v1129 = vld [vmem:[%s1098 + $0x78] sm:$0xf]
        %v1130 = vld [vmem:[%s1098 + $0x7c] sm:$0xf]
        %v1132 = vshrl.u32 %v1096, 16
        %v1134 = vshll.u32 %v1096, 16
        %v1136 = vrot.slane %v1134, 1
        %v1137 = vor.u32 %v1132, %v1136
        %v1139 = vshrl.u32 %v1097, 16
        %v1141 = vshll.u32 %v1097, 16
        %v1143 = vrot.slane %v1141, 1
        %v1144 = vor.u32 %v1139, %v1143
        %v1179 = vunpack.c.l.b16 %v1099
        %v1180 = vunpack.c.l.b16 %v1100
        %v1181 = vunpack.c.l.b16 %v1101
        %v1182 = vunpack.c.l.b16 %v1102
        %v1183 = vunpack.c.l.b16 %v1103
        %v1184 = vunpack.c.l.b16 %v1104
        %v1185 = vunpack.c.l.b16 %v1105
        %v1186 = vunpack.c.l.b16 %v1106
        %v1187 = vunpack.c.l.b16 %v1107
        %v1188 = vunpack.c.l.b16 %v1108
        %v1189 = vunpack.c.l.b16 %v1109
        %v1190 = vunpack.c.l.b16 %v1110
        %v1191 = vunpack.c.l.b16 %v1111
        %v1192 = vunpack.c.l.b16 %v1112
        %v1193 = vunpack.c.l.b16 %v1113
        %v1194 = vunpack.c.l.b16 %v1114
        %v1195 = vunpack.c.l.b16 %v1115
        %v1196 = vunpack.c.l.b16 %v1116
        %v1197 = vunpack.c.l.b16 %v1117
        %v1198 = vunpack.c.l.b16 %v1118
        %v1199 = vunpack.c.l.b16 %v1119
        %v1200 = vunpack.c.l.b16 %v1120
        %v1201 = vunpack.c.l.b16 %v1121
        %v1202 = vunpack.c.l.b16 %v1122
        %v1203 = vunpack.c.l.b16 %v1123
        %v1204 = vunpack.c.l.b16 %v1124
        %v1205 = vunpack.c.l.b16 %v1125
        %v1206 = vunpack.c.l.b16 %v1126
        %v1207 = vunpack.c.l.b16 %v1127
        %v1208 = vunpack.c.l.b16 %v1128
        %v1209 = vunpack.c.l.b16 %v1129
        %v1210 = vunpack.c.l.b16 %v1130
        %v1211 = vpack.c.b16 %v1180, %v1179
        %v1212 = vpack.c.b16 %v1182, %v1181
        %v1213 = vpack.c.b16 %v1184, %v1183
        %v1214 = vpack.c.b16 %v1186, %v1185
        %v1215 = vpack.c.b16 %v1188, %v1187
        %v1216 = vpack.c.b16 %v1190, %v1189
        %v1217 = vpack.c.b16 %v1192, %v1191
        %v1218 = vpack.c.b16 %v1194, %v1193
        %v1219 = vpack.c.b16 %v1196, %v1195
        %v1220 = vpack.c.b16 %v1198, %v1197
        %v1221 = vpack.c.b16 %v1200, %v1199
        %v1222 = vpack.c.b16 %v1202, %v1201
        %v1223 = vpack.c.b16 %v1204, %v1203
        %v1224 = vpack.c.b16 %v1206, %v1205
        %v1225 = vpack.c.b16 %v1208, %v1207
        %v1226 = vpack.c.b16 %v1210, %v1209
        %1243 = vmatpush.bf16.msra.mxu0 %v1218
        %1244 = vmatpush.bf16.msra.mxu0 %v1217
        %1245 = vmatpush.bf16.msra.mxu0 %v1216
        %1246 = vmatpush.bf16.msra.mxu0 %v1215
        %1247 = vmatpush.bf16.msra.mxu0 %v1214
        %1248 = vmatpush.bf16.msra.mxu0 %v1213
        %1249 = vmatpush.bf16.msra.mxu0 %v1212
        %1250 = vmatpush.bf16.msra.mxu0 %v1211
        %1251 = vmatmul.bf16.gmra.mxu0 %v1137
        %v1252 = vpop.f32.mrf.mxu0
        %v1253 = vadd.f32 0.0, %v1252
        %v1254 = vpop.f32.mrf.mxu0
        %1255 = vdwg.mxu0
        %1256 = vmatpush.bf16.msra.mxu0 %v1226
        %1257 = vmatpush.bf16.msra.mxu0 %v1225
        %1258 = vmatpush.bf16.msra.mxu0 %v1224
        %1259 = vmatpush.bf16.msra.mxu0 %v1223
        %1260 = vmatpush.bf16.msra.mxu0 %v1222
        %1261 = vmatpush.bf16.msra.mxu0 %v1221
        %1262 = vmatpush.bf16.msra.mxu0 %v1220
        %1263 = vmatpush.bf16.msra.mxu0 %v1219
        %1264 = vmatmul.bf16.gmra.mxu0 %v1144
        %v1265 = vpop.f32.mrf.mxu0
        %v1266 = vadd.f32 %v1253, %v1265
        %v1267 = vpop.f32.mrf.mxu0
        %1268 = vdwg.mxu0
        %v1301 = vunpack.c.l.b16 %v1060
        %v1302 = vunpack.c.l.b16 %v1061
        %v1303 = vunpack.c.l.b16 %v1062
        %v1304 = vunpack.c.l.b16 %v1063
        %v1305 = vunpack.c.l.b16 %v1064
        %v1306 = vunpack.c.l.b16 %v1065
        %v1307 = vunpack.c.l.b16 %v1066
        %v1308 = vunpack.c.l.b16 %v1067
        %v1309 = vunpack.c.l.b16 %v1068
        %v1310 = vunpack.c.l.b16 %v1069
        %v1311 = vunpack.c.l.b16 %v1070
        %v1312 = vunpack.c.l.b16 %v1071
        %v1313 = vunpack.c.l.b16 %v1072
        %v1314 = vunpack.c.l.b16 %v1073
        %v1315 = vunpack.c.l.b16 %v1074
        %v1316 = vunpack.c.l.b16 %v1075
        %v1317 = vunpack.c.l.b16 %v1076
        %v1318 = vunpack.c.l.b16 %v1077
        %v1319 = vunpack.c.l.b16 %v1078
        %v1320 = vunpack.c.l.b16 %v1079
        %v1321 = vunpack.c.l.b16 %v1080
        %v1322 = vunpack.c.l.b16 %v1081
        %v1323 = vunpack.c.l.b16 %v1082
        %v1324 = vunpack.c.l.b16 %v1083
        %v1325 = vunpack.c.l.b16 %v1084
        %v1326 = vunpack.c.l.b16 %v1085
        %v1327 = vunpack.c.l.b16 %v1086
        %v1328 = vunpack.c.l.b16 %v1087
        %v1329 = vunpack.c.l.b16 %v1088
        %v1330 = vunpack.c.l.b16 %v1089
        %v1331 = vunpack.c.l.b16 %v1090
        %v1332 = vunpack.c.l.b16 %v1091
        %v1333 = vpack.c.b16 %v1302, %v1301
        %v1334 = vpack.c.b16 %v1304, %v1303
        %v1335 = vpack.c.b16 %v1306, %v1305
        %v1336 = vpack.c.b16 %v1308, %v1307
        %v1337 = vpack.c.b16 %v1310, %v1309
        %v1338 = vpack.c.b16 %v1312, %v1311
        %v1339 = vpack.c.b16 %v1314, %v1313
        %v1340 = vpack.c.b16 %v1316, %v1315
        %v1341 = vpack.c.b16 %v1318, %v1317
        %v1342 = vpack.c.b16 %v1320, %v1319
        %v1343 = vpack.c.b16 %v1322, %v1321
        %v1344 = vpack.c.b16 %v1324, %v1323
        %v1345 = vpack.c.b16 %v1326, %v1325
        %v1346 = vpack.c.b16 %v1328, %v1327
        %v1347 = vpack.c.b16 %v1330, %v1329
        %v1348 = vpack.c.b16 %v1332, %v1331
        %1365 = vmatpush.bf16.msra.mxu0 %v1340
        %1366 = vmatpush.bf16.msra.mxu0 %v1339
        %1367 = vmatpush.bf16.msra.mxu0 %v1338
        %1368 = vmatpush.bf16.msra.mxu0 %v1337
        %1369 = vmatpush.bf16.msra.mxu0 %v1336
        %1370 = vmatpush.bf16.msra.mxu0 %v1335
        %1371 = vmatpush.bf16.msra.mxu0 %v1334
        %1372 = vmatpush.bf16.msra.mxu0 %v1333
        %1373 = vmatmul.bf16.gmra.mxu0 %v1058
        %v1374 = vpop.f32.mrf.mxu0
        %v1375 = vadd.f32 %v1266, %v1374
        %v1376 = vpop.f32.mrf.mxu0
        %1377 = vdwg.mxu0
        %1378 = vmatpush.bf16.msra.mxu0 %v1348
        %1379 = vmatpush.bf16.msra.mxu0 %v1347
        %1380 = vmatpush.bf16.msra.mxu0 %v1346
        %1381 = vmatpush.bf16.msra.mxu0 %v1345
        %1382 = vmatpush.bf16.msra.mxu0 %v1344
        %1383 = vmatpush.bf16.msra.mxu0 %v1343
        %1384 = vmatpush.bf16.msra.mxu0 %v1342
        %1385 = vmatpush.bf16.msra.mxu0 %v1341
        %1386 = vmatmul.bf16.gmra.mxu0 %v1059
        %v1387 = vpop.f32.mrf.mxu0
        %v1388 = vadd.f32 %v1375, %v1387
        %v1389 = vpop.f32.mrf.mxu0
        %1390 = vdwg.mxu0
        %v1391 = vld [vmem:[#allocation2] sm:$0xfc]
        %v1392 = vld [vmem:[#allocation2 + $0x8] sm:$0xfc]
        %v1393 = vld [vmem:[#allocation2 + $0x10] sm:$0x3]
        %v1394 = vld [vmem:[#allocation2 + $0x18] sm:$0x3]
        %v1395 = vpack.c.bf16 %v1393, %v1391
        %v1396 = vpack.c.bf16 %v1394, %v1392
        %s1397 = scalar_lea.vmem [#allocation6], 256
        %v1398 = vld [vmem:[%s1397] sm:$0xf]
        %v1399 = vld [vmem:[%s1397 + $0x4] sm:$0xf]
        %v1400 = vld [vmem:[%s1397 + $0x8] sm:$0xf]
        %v1401 = vld [vmem:[%s1397 + $0xc] sm:$0xf]
        %v1402 = vld [vmem:[%s1397 + $0x10] sm:$0xf]
        %v1403 = vld [vmem:[%s1397 + $0x14] sm:$0xf]
        %v1404 = vld [vmem:[%s1397 + $0x18] sm:$0xf]
        %v1405 = vld [vmem:[%s1397 + $0x1c] sm:$0xf]
        %v1406 = vld [vmem:[%s1397 + $0x20] sm:$0xf]
        %v1407 = vld [vmem:[%s1397 + $0x24] sm:$0xf]
        %v1408 = vld [vmem:[%s1397 + $0x28] sm:$0xf]
        %v1409 = vld [vmem:[%s1397 + $0x2c] sm:$0xf]
        %v1410 = vld [vmem:[%s1397 + $0x30] sm:$0xf]
        %v1411 = vld [vmem:[%s1397 + $0x34] sm:$0xf]
        %v1412 = vld [vmem:[%s1397 + $0x38] sm:$0xf]
        %v1413 = vld [vmem:[%s1397 + $0x3c] sm:$0xf]
        %v1414 = vld [vmem:[%s1397 + $0x40] sm:$0xf]
        %v1415 = vld [vmem:[%s1397 + $0x44] sm:$0xf]
        %v1416 = vld [vmem:[%s1397 + $0x48] sm:$0xf]
        %v1417 = vld [vmem:[%s1397 + $0x4c] sm:$0xf]
        %v1418 = vld [vmem:[%s1397 + $0x50] sm:$0xf]
        %v1419 = vld [vmem:[%s1397 + $0x54] sm:$0xf]
        %v1420 = vld [vmem:[%s1397 + $0x58] sm:$0xf]
        %v1421 = vld [vmem:[%s1397 + $0x5c] sm:$0xf]
        %v1422 = vld [vmem:[%s1397 + $0x60] sm:$0xf]
        %v1423 = vld [vmem:[%s1397 + $0x64] sm:$0xf]
        %v1424 = vld [vmem:[%s1397 + $0x68] sm:$0xf]
        %v1425 = vld [vmem:[%s1397 + $0x6c] sm:$0xf]
        %v1426 = vld [vmem:[%s1397 + $0x70] sm:$0xf]
        %v1427 = vld [vmem:[%s1397 + $0x74] sm:$0xf]
        %v1428 = vld [vmem:[%s1397 + $0x78] sm:$0xf]
        %v1429 = vld [vmem:[%s1397 + $0x7c] sm:$0xf]
        %v1432 = vrot.slane %v1395, 1
        %v1433 = vrot.slane %v1396, 1
        %v1468 = vunpack.c.l.b16 %v1398
        %v1469 = vunpack.c.l.b16 %v1399
        %v1470 = vunpack.c.l.b16 %v1400
        %v1471 = vunpack.c.l.b16 %v1401
        %v1472 = vunpack.c.l.b16 %v1402
        %v1473 = vunpack.c.l.b16 %v1403
        %v1474 = vunpack.c.l.b16 %v1404
        %v1475 = vunpack.c.l.b16 %v1405
        %v1476 = vunpack.c.l.b16 %v1406
        %v1477 = vunpack.c.l.b16 %v1407
        %v1478 = vunpack.c.l.b16 %v1408
        %v1479 = vunpack.c.l.b16 %v1409
        %v1480 = vunpack.c.l.b16 %v1410
        %v1481 = vunpack.c.l.b16 %v1411
        %v1482 = vunpack.c.l.b16 %v1412
        %v1483 = vunpack.c.l.b16 %v1413
        %v1484 = vunpack.c.l.b16 %v1414
        %v1485 = vunpack.c.l.b16 %v1415
        %v1486 = vunpack.c.l.b16 %v1416
        %v1487 = vunpack.c.l.b16 %v1417
        %v1488 = vunpack.c.l.b16 %v1418
        %v1489 = vunpack.c.l.b16 %v1419
        %v1490 = vunpack.c.l.b16 %v1420
        %v1491 = vunpack.c.l.b16 %v1421
        %v1492 = vunpack.c.l.b16 %v1422
        %v1493 = vunpack.c.l.b16 %v1423
        %v1494 = vunpack.c.l.b16 %v1424
        %v1495 = vunpack.c.l.b16 %v1425
        %v1496 = vunpack.c.l.b16 %v1426
        %v1497 = vunpack.c.l.b16 %v1427
        %v1498 = vunpack.c.l.b16 %v1428
        %v1499 = vunpack.c.l.b16 %v1429
        %v1500 = vpack.c.b16 %v1469, %v1468
        %v1501 = vpack.c.b16 %v1471, %v1470
        %v1502 = vpack.c.b16 %v1473, %v1472
        %v1503 = vpack.c.b16 %v1475, %v1474
        %v1504 = vpack.c.b16 %v1477, %v1476
        %v1505 = vpack.c.b16 %v1479, %v1478
        %v1506 = vpack.c.b16 %v1481, %v1480
        %v1507 = vpack.c.b16 %v1483, %v1482
        %v1508 = vpack.c.b16 %v1485, %v1484
        %v1509 = vpack.c.b16 %v1487, %v1486
        %v1510 = vpack.c.b16 %v1489, %v1488
        %v1511 = vpack.c.b16 %v1491, %v1490
        %v1512 = vpack.c.b16 %v1493, %v1492
        %v1513 = vpack.c.b16 %v1495, %v1494
        %v1514 = vpack.c.b16 %v1497, %v1496
        %v1515 = vpack.c.b16 %v1499, %v1498
        %1532 = vmatpush.bf16.msra.mxu0 %v1507
        %1533 = vmatpush.bf16.msra.mxu0 %v1506
        %1534 = vmatpush.bf16.msra.mxu0 %v1505
        %1535 = vmatpush.bf16.msra.mxu0 %v1504
        %1536 = vmatpush.bf16.msra.mxu0 %v1503
        %1537 = vmatpush.bf16.msra.mxu0 %v1502
        %1538 = vmatpush.bf16.msra.mxu0 %v1501
        %1539 = vmatpush.bf16.msra.mxu0 %v1500
        %1540 = vmatmul.bf16.gmra.mxu0 %v1432
        %v1541 = vpop.f32.mrf.mxu0
        %v1542 = vadd.f32 0.0, %v1541
        %v1543 = vpop.f32.mrf.mxu0
        %1544 = vdwg.mxu0
        %1545 = vmatpush.bf16.msra.mxu0 %v1515
        %1546 = vmatpush.bf16.msra.mxu0 %v1514
        %1547 = vmatpush.bf16.msra.mxu0 %v1513
        %1548 = vmatpush.bf16.msra.mxu0 %v1512
        %1549 = vmatpush.bf16.msra.mxu0 %v1511
        %1550 = vmatpush.bf16.msra.mxu0 %v1510
        %1551 = vmatpush.bf16.msra.mxu0 %v1509
        %1552 = vmatpush.bf16.msra.mxu0 %v1508
        %1553 = vmatmul.bf16.gmra.mxu0 %v1433
        %v1554 = vpop.f32.mrf.mxu0
        %v1555 = vadd.f32 %v1542, %v1554
        %v1556 = vpop.f32.mrf.mxu0
        %1557 = vdwg.mxu0
        %v1558 = vadd.f32 %v1388, %v1555
        %v1559 = vld [vmem:[#allocation2] sm:$0xf8]
        %v1560 = vld [vmem:[#allocation2 + $0x8] sm:$0xf8]
        %v1561 = vld [vmem:[#allocation2 + $0x10] sm:$0x7]
        %v1562 = vld [vmem:[#allocation2 + $0x18] sm:$0x7]
        %v1563 = vpack.c.bf16 %v1561, %v1559
        %v1564 = vpack.c.bf16 %v1562, %v1560
        %s1565 = scalar_lea.vmem [#allocation6], 384
        %v1566 = vld [vmem:[%s1565] sm:$0xf]
        %v1567 = vld [vmem:[%s1565 + $0x4] sm:$0xf]
        %v1568 = vld [vmem:[%s1565 + $0x8] sm:$0xf]
        %v1569 = vld [vmem:[%s1565 + $0xc] sm:$0xf]
        %v1570 = vld [vmem:[%s1565 + $0x10] sm:$0xf]
        %v1571 = vld [vmem:[%s1565 + $0x14] sm:$0xf]
        %v1572 = vld [vmem:[%s1565 + $0x18] sm:$0xf]
        %v1573 = vld [vmem:[%s1565 + $0x1c] sm:$0xf]
        %v1574 = vld [vmem:[%s1565 + $0x20] sm:$0xf]
        %v1575 = vld [vmem:[%s1565 + $0x24] sm:$0xf]
        %v1576 = vld [vmem:[%s1565 + $0x28] sm:$0xf]
        %v1577 = vld [vmem:[%s1565 + $0x2c] sm:$0xf]
        %v1578 = vld [vmem:[%s1565 + $0x30] sm:$0xf]
        %v1579 = vld [vmem:[%s1565 + $0x34] sm:$0xf]
        %v1580 = vld [vmem:[%s1565 + $0x38] sm:$0xf]
        %v1581 = vld [vmem:[%s1565 + $0x3c] sm:$0xf]
        %v1582 = vld [vmem:[%s1565 + $0x40] sm:$0xf]
        %v1583 = vld [vmem:[%s1565 + $0x44] sm:$0xf]
        %v1584 = vld [vmem:[%s1565 + $0x48] sm:$0xf]
        %v1585 = vld [vmem:[%s1565 + $0x4c] sm:$0xf]
        %v1586 = vld [vmem:[%s1565 + $0x50] sm:$0xf]
        %v1587 = vld [vmem:[%s1565 + $0x54] sm:$0xf]
        %v1588 = vld [vmem:[%s1565 + $0x58] sm:$0xf]
        %v1589 = vld [vmem:[%s1565 + $0x5c] sm:$0xf]
        %v1590 = vld [vmem:[%s1565 + $0x60] sm:$0xf]
        %v1591 = vld [vmem:[%s1565 + $0x64] sm:$0xf]
        %v1592 = vld [vmem:[%s1565 + $0x68] sm:$0xf]
        %v1593 = vld [vmem:[%s1565 + $0x6c] sm:$0xf]
        %v1594 = vld [vmem:[%s1565 + $0x70] sm:$0xf]
        %v1595 = vld [vmem:[%s1565 + $0x74] sm:$0xf]
        %v1596 = vld [vmem:[%s1565 + $0x78] sm:$0xf]
        %v1597 = vld [vmem:[%s1565 + $0x7c] sm:$0xf]
        %v1599 = vshrl.u32 %v1563, 16
        %v1601 = vrot.slane %v1599, 1
        %v1602 = vshll.u32 %v1563, 16
        %v1604 = vrot.slane %v1602, 2
        %v1605 = vor.u32 %v1601, %v1604
        %v1607 = vshrl.u32 %v1564, 16
        %v1609 = vrot.slane %v1607, 1
        %v1610 = vshll.u32 %v1564, 16
        %v1612 = vrot.slane %v1610, 2
        %v1613 = vor.u32 %v1609, %v1612
        %v1648 = vunpack.c.l.b16 %v1566
        %v1649 = vunpack.c.l.b16 %v1567
        %v1650 = vunpack.c.l.b16 %v1568
        %v1651 = vunpack.c.l.b16 %v1569
        %v1652 = vunpack.c.l.b16 %v1570
        %v1653 = vunpack.c.l.b16 %v1571
        %v1654 = vunpack.c.l.b16 %v1572
        %v1655 = vunpack.c.l.b16 %v1573
        %v1656 = vunpack.c.l.b16 %v1574
        %v1657 = vunpack.c.l.b16 %v1575
        %v1658 = vunpack.c.l.b16 %v1576
        %v1659 = vunpack.c.l.b16 %v1577
        %v1660 = vunpack.c.l.b16 %v1578
        %v1661 = vunpack.c.l.b16 %v1579
        %v1662 = vunpack.c.l.b16 %v1580
        %v1663 = vunpack.c.l.b16 %v1581
        %v1664 = vunpack.c.l.b16 %v1582
        %v1665 = vunpack.c.l.b16 %v1583
        %v1666 = vunpack.c.l.b16 %v1584
        %v1667 = vunpack.c.l.b16 %v1585
        %v1668 = vunpack.c.l.b16 %v1586
        %v1669 = vunpack.c.l.b16 %v1587
        %v1670 = vunpack.c.l.b16 %v1588
        %v1671 = vunpack.c.l.b16 %v1589
        %v1672 = vunpack.c.l.b16 %v1590
        %v1673 = vunpack.c.l.b16 %v1591
        %v1674 = vunpack.c.l.b16 %v1592
        %v1675 = vunpack.c.l.b16 %v1593
        %v1676 = vunpack.c.l.b16 %v1594
        %v1677 = vunpack.c.l.b16 %v1595
        %v1678 = vunpack.c.l.b16 %v1596
        %v1679 = vunpack.c.l.b16 %v1597
        %v1680 = vpack.c.b16 %v1649, %v1648
        %v1681 = vpack.c.b16 %v1651, %v1650
        %v1682 = vpack.c.b16 %v1653, %v1652
        %v1683 = vpack.c.b16 %v1655, %v1654
        %v1684 = vpack.c.b16 %v1657, %v1656
        %v1685 = vpack.c.b16 %v1659, %v1658
        %v1686 = vpack.c.b16 %v1661, %v1660
        %v1687 = vpack.c.b16 %v1663, %v1662
        %v1688 = vpack.c.b16 %v1665, %v1664
        %v1689 = vpack.c.b16 %v1667, %v1666
        %v1690 = vpack.c.b16 %v1669, %v1668
        %v1691 = vpack.c.b16 %v1671, %v1670
        %v1692 = vpack.c.b16 %v1673, %v1672
        %v1693 = vpack.c.b16 %v1675, %v1674
        %v1694 = vpack.c.b16 %v1677, %v1676
        %v1695 = vpack.c.b16 %v1679, %v1678
        %1712 = vmatpush.bf16.msra.mxu0 %v1687
        %1713 = vmatpush.bf16.msra.mxu0 %v1686
        %1714 = vmatpush.bf16.msra.mxu0 %v1685
        %1715 = vmatpush.bf16.msra.mxu0 %v1684
        %1716 = vmatpush.bf16.msra.mxu0 %v1683
        %1717 = vmatpush.bf16.msra.mxu0 %v1682
        %1718 = vmatpush.bf16.msra.mxu0 %v1681
        %1719 = vmatpush.bf16.msra.mxu0 %v1680
        %1720 = vmatmul.bf16.gmra.mxu0 %v1605
        %v1721 = vpop.f32.mrf.mxu0
        %v1722 = vadd.f32 0.0, %v1721
        %v1723 = vpop.f32.mrf.mxu0
        %1724 = vdwg.mxu0
        %1725 = vmatpush.bf16.msra.mxu0 %v1695
        %1726 = vmatpush.bf16.msra.mxu0 %v1694
        %1727 = vmatpush.bf16.msra.mxu0 %v1693
        %1728 = vmatpush.bf16.msra.mxu0 %v1692
        %1729 = vmatpush.bf16.msra.mxu0 %v1691
        %1730 = vmatpush.bf16.msra.mxu0 %v1690
        %1731 = vmatpush.bf16.msra.mxu0 %v1689
        %1732 = vmatpush.bf16.msra.mxu0 %v1688
        %1733 = vmatmul.bf16.gmra.mxu0 %v1613
        %v1734 = vpop.f32.mrf.mxu0
        %v1735 = vadd.f32 %v1722, %v1734
        %v1736 = vpop.f32.mrf.mxu0
        %1737 = vdwg.mxu0
        %v1738 = vadd.f32 %v1558, %v1735
        %v1739 = vld [vmem:[#allocation2] sm:$0xf0]
        %v1740 = vld [vmem:[#allocation2 + $0x8] sm:$0xf0]
        %v1741 = vld [vmem:[#allocation2 + $0x10] sm:$0xf]
        %v1742 = vld [vmem:[#allocation2 + $0x18] sm:$0xf]
        %v1743 = vpack.c.bf16 %v1741, %v1739
        %v1744 = vpack.c.bf16 %v1742, %v1740
        %s1745 = scalar_lea.vmem [#allocation6], 512
        %v1746 = vld [vmem:[%s1745] sm:$0xf]
        %v1747 = vld [vmem:[%s1745 + $0x4] sm:$0xf]
        %v1748 = vld [vmem:[%s1745 + $0x8] sm:$0xf]
        %v1749 = vld [vmem:[%s1745 + $0xc] sm:$0xf]
        %v1750 = vld [vmem:[%s1745 + $0x10] sm:$0xf]
        %v1751 = vld [vmem:[%s1745 + $0x14] sm:$0xf]
        %v1752 = vld [vmem:[%s1745 + $0x18] sm:$0xf]
        %v1753 = vld [vmem:[%s1745 + $0x1c] sm:$0xf]
        %v1754 = vld [vmem:[%s1745 + $0x20] sm:$0xf]
        %v1755 = vld [vmem:[%s1745 + $0x24] sm:$0xf]
        %v1756 = vld [vmem:[%s1745 + $0x28] sm:$0xf]
        %v1757 = vld [vmem:[%s1745 + $0x2c] sm:$0xf]
        %v1758 = vld [vmem:[%s1745 + $0x30] sm:$0xf]
        %v1759 = vld [vmem:[%s1745 + $0x34] sm:$0xf]
        %v1760 = vld [vmem:[%s1745 + $0x38] sm:$0xf]
        %v1761 = vld [vmem:[%s1745 + $0x3c] sm:$0xf]
        %v1762 = vld [vmem:[%s1745 + $0x40] sm:$0xf]
        %v1763 = vld [vmem:[%s1745 + $0x44] sm:$0xf]
        %v1764 = vld [vmem:[%s1745 + $0x48] sm:$0xf]
        %v1765 = vld [vmem:[%s1745 + $0x4c] sm:$0xf]
        %v1766 = vld [vmem:[%s1745 + $0x50] sm:$0xf]
        %v1767 = vld [vmem:[%s1745 + $0x54] sm:$0xf]
        %v1768 = vld [vmem:[%s1745 + $0x58] sm:$0xf]
        %v1769 = vld [vmem:[%s1745 + $0x5c] sm:$0xf]
        %v1770 = vld [vmem:[%s1745 + $0x60] sm:$0xf]
        %v1771 = vld [vmem:[%s1745 + $0x64] sm:$0xf]
        %v1772 = vld [vmem:[%s1745 + $0x68] sm:$0xf]
        %v1773 = vld [vmem:[%s1745 + $0x6c] sm:$0xf]
        %v1774 = vld [vmem:[%s1745 + $0x70] sm:$0xf]
        %v1775 = vld [vmem:[%s1745 + $0x74] sm:$0xf]
        %v1776 = vld [vmem:[%s1745 + $0x78] sm:$0xf]
        %v1777 = vld [vmem:[%s1745 + $0x7c] sm:$0xf]
        %v1780 = vrot.slane %v1743, 2
        %v1781 = vrot.slane %v1744, 2
        %v1816 = vunpack.c.l.b16 %v1746
        %v1817 = vunpack.c.l.b16 %v1747
        %v1818 = vunpack.c.l.b16 %v1748
        %v1819 = vunpack.c.l.b16 %v1749
        %v1820 = vunpack.c.l.b16 %v1750
        %v1821 = vunpack.c.l.b16 %v1751
        %v1822 = vunpack.c.l.b16 %v1752
        %v1823 = vunpack.c.l.b16 %v1753
        %v1824 = vunpack.c.l.b16 %v1754
        %v1825 = vunpack.c.l.b16 %v1755
        %v1826 = vunpack.c.l.b16 %v1756
        %v1827 = vunpack.c.l.b16 %v1757
        %v1828 = vunpack.c.l.b16 %v1758
        %v1829 = vunpack.c.l.b16 %v1759
        %v1830 = vunpack.c.l.b16 %v1760
        %v1831 = vunpack.c.l.b16 %v1761
        %v1832 = vunpack.c.l.b16 %v1762
        %v1833 = vunpack.c.l.b16 %v1763
        %v1834 = vunpack.c.l.b16 %v1764
        %v1835 = vunpack.c.l.b16 %v1765
        %v1836 = vunpack.c.l.b16 %v1766
        %v1837 = vunpack.c.l.b16 %v1767
        %v1838 = vunpack.c.l.b16 %v1768
        %v1839 = vunpack.c.l.b16 %v1769
        %v1840 = vunpack.c.l.b16 %v1770
        %v1841 = vunpack.c.l.b16 %v1771
        %v1842 = vunpack.c.l.b16 %v1772
        %v1843 = vunpack.c.l.b16 %v1773
        %v1844 = vunpack.c.l.b16 %v1774
        %v1845 = vunpack.c.l.b16 %v1775
        %v1846 = vunpack.c.l.b16 %v1776
        %v1847 = vunpack.c.l.b16 %v1777
        %v1848 = vpack.c.b16 %v1817, %v1816
        %v1849 = vpack.c.b16 %v1819, %v1818
        %v1850 = vpack.c.b16 %v1821, %v1820
        %v1851 = vpack.c.b16 %v1823, %v1822
        %v1852 = vpack.c.b16 %v1825, %v1824
        %v1853 = vpack.c.b16 %v1827, %v1826
        %v1854 = vpack.c.b16 %v1829, %v1828
        %v1855 = vpack.c.b16 %v1831, %v1830
        %v1856 = vpack.c.b16 %v1833, %v1832
        %v1857 = vpack.c.b16 %v1835, %v1834
        %v1858 = vpack.c.b16 %v1837, %v1836
        %v1859 = vpack.c.b16 %v1839, %v1838
        %v1860 = vpack.c.b16 %v1841, %v1840
        %v1861 = vpack.c.b16 %v1843, %v1842
        %v1862 = vpack.c.b16 %v1845, %v1844
        %v1863 = vpack.c.b16 %v1847, %v1846
        %1880 = vmatpush.bf16.msra.mxu0 %v1855
        %1881 = vmatpush.bf16.msra.mxu0 %v1854
        %1882 = vmatpush.bf16.msra.mxu0 %v1853
        %1883 = vmatpush.bf16.msra.mxu0 %v1852
        %1884 = vmatpush.bf16.msra.mxu0 %v1851
        %1885 = vmatpush.bf16.msra.mxu0 %v1850
        %1886 = vmatpush.bf16.msra.mxu0 %v1849
        %1887 = vmatpush.bf16.msra.mxu0 %v1848
        %1888 = vmatmul.bf16.gmra.mxu0 %v1780
        %v1889 = vpop.f32.mrf.mxu0
        %v1890 = vadd.f32 0.0, %v1889
        %v1891 = vpop.f32.mrf.mxu0
        %1892 = vdwg.mxu0
        %1893 = vmatpush.bf16.msra.mxu0 %v1863
        %1894 = vmatpush.bf16.msra.mxu0 %v1862
        %1895 = vmatpush.bf16.msra.mxu0 %v1861
        %1896 = vmatpush.bf16.msra.mxu0 %v1860
        %1897 = vmatpush.bf16.msra.mxu0 %v1859
        %1898 = vmatpush.bf16.msra.mxu0 %v1858
        %1899 = vmatpush.bf16.msra.mxu0 %v1857
        %1900 = vmatpush.bf16.msra.mxu0 %v1856
        %1901 = vmatmul.bf16.gmra.mxu0 %v1781
        %v1902 = vpop.f32.mrf.mxu0
        %v1903 = vadd.f32 %v1890, %v1902
        %v1904 = vpop.f32.mrf.mxu0
        %1905 = vdwg.mxu0
        %v1906 = vadd.f32 %v1738, %v1903
        %v1907 = vld [vmem:[#allocation2] sm:$0xe0]
        %v1908 = vld [vmem:[#allocation2 + $0x8] sm:$0xe0]
        %v1909 = vld [vmem:[#allocation2 + $0x10] sm:$0x1f]
        %v1910 = vld [vmem:[#allocation2 + $0x18] sm:$0x1f]
        %v1911 = vpack.c.bf16 %v1909, %v1907
        %v1912 = vpack.c.bf16 %v1910, %v1908
        %s1913 = scalar_lea.vmem [#allocation6], 640
        %v1914 = vld [vmem:[%s1913] sm:$0xf]
        %v1915 = vld [vmem:[%s1913 + $0x4] sm:$0xf]
        %v1916 = vld [vmem:[%s1913 + $0x8] sm:$0xf]
        %v1917 = vld [vmem:[%s1913 + $0xc] sm:$0xf]
        %v1918 = vld [vmem:[%s1913 + $0x10] sm:$0xf]
        %v1919 = vld [vmem:[%s1913 + $0x14] sm:$0xf]
        %v1920 = vld [vmem:[%s1913 + $0x18] sm:$0xf]
        %v1921 = vld [vmem:[%s1913 + $0x1c] sm:$0xf]
        %v1922 = vld [vmem:[%s1913 + $0x20] sm:$0xf]
        %v1923 = vld [vmem:[%s1913 + $0x24] sm:$0xf]
        %v1924 = vld [vmem:[%s1913 + $0x28] sm:$0xf]
        %v1925 = vld [vmem:[%s1913 + $0x2c] sm:$0xf]
        %v1926 = vld [vmem:[%s1913 + $0x30] sm:$0xf]
        %v1927 = vld [vmem:[%s1913 + $0x34] sm:$0xf]
        %v1928 = vld [vmem:[%s1913 + $0x38] sm:$0xf]
        %v1929 = vld [vmem:[%s1913 + $0x3c] sm:$0xf]
        %v1930 = vld [vmem:[%s1913 + $0x40] sm:$0xf]
        %v1931 = vld [vmem:[%s1913 + $0x44] sm:$0xf]
        %v1932 = vld [vmem:[%s1913 + $0x48] sm:$0xf]
        %v1933 = vld [vmem:[%s1913 + $0x4c] sm:$0xf]
        %v1934 = vld [vmem:[%s1913 + $0x50] sm:$0xf]
        %v1935 = vld [vmem:[%s1913 + $0x54] sm:$0xf]
        %v1936 = vld [vmem:[%s1913 + $0x58] sm:$0xf]
        %v1937 = vld [vmem:[%s1913 + $0x5c] sm:$0xf]
        %v1938 = vld [vmem:[%s1913 + $0x60] sm:$0xf]
        %v1939 = vld [vmem:[%s1913 + $0x64] sm:$0xf]
        %v1940 = vld [vmem:[%s1913 + $0x68] sm:$0xf]
        %v1941 = vld [vmem:[%s1913 + $0x6c] sm:$0xf]
        %v1942 = vld [vmem:[%s1913 + $0x70] sm:$0xf]
        %v1943 = vld [vmem:[%s1913 + $0x74] sm:$0xf]
        %v1944 = vld [vmem:[%s1913 + $0x78] sm:$0xf]
        %v1945 = vld [vmem:[%s1913 + $0x7c] sm:$0xf]
        %v1947 = vshrl.u32 %v1911, 16
        %v1949 = vrot.slane %v1947, 2
        %v1950 = vshll.u32 %v1911, 16
        %v1952 = vrot.slane %v1950, 3
        %v1953 = vor.u32 %v1949, %v1952
        %v1955 = vshrl.u32 %v1912, 16
        %v1957 = vrot.slane %v1955, 2
        %v1958 = vshll.u32 %v1912, 16
        %v1960 = vrot.slane %v1958, 3
        %v1961 = vor.u32 %v1957, %v1960
        %v1996 = vunpack.c.l.b16 %v1914
        %v1997 = vunpack.c.l.b16 %v1915
        %v1998 = vunpack.c.l.b16 %v1916
        %v1999 = vunpack.c.l.b16 %v1917
        %v2000 = vunpack.c.l.b16 %v1918
        %v2001 = vunpack.c.l.b16 %v1919
        %v2002 = vunpack.c.l.b16 %v1920
        %v2003 = vunpack.c.l.b16 %v1921
        %v2004 = vunpack.c.l.b16 %v1922
        %v2005 = vunpack.c.l.b16 %v1923
        %v2006 = vunpack.c.l.b16 %v1924
        %v2007 = vunpack.c.l.b16 %v1925
        %v2008 = vunpack.c.l.b16 %v1926
        %v2009 = vunpack.c.l.b16 %v1927
        %v2010 = vunpack.c.l.b16 %v1928
        %v2011 = vunpack.c.l.b16 %v1929
        %v2012 = vunpack.c.l.b16 %v1930
        %v2013 = vunpack.c.l.b16 %v1931
        %v2014 = vunpack.c.l.b16 %v1932
        %v2015 = vunpack.c.l.b16 %v1933
        %v2016 = vunpack.c.l.b16 %v1934
        %v2017 = vunpack.c.l.b16 %v1935
        %v2018 = vunpack.c.l.b16 %v1936
        %v2019 = vunpack.c.l.b16 %v1937
        %v2020 = vunpack.c.l.b16 %v1938
        %v2021 = vunpack.c.l.b16 %v1939
        %v2022 = vunpack.c.l.b16 %v1940
        %v2023 = vunpack.c.l.b16 %v1941
        %v2024 = vunpack.c.l.b16 %v1942
        %v2025 = vunpack.c.l.b16 %v1943
        %v2026 = vunpack.c.l.b16 %v1944
        %v2027 = vunpack.c.l.b16 %v1945
        %v2028 = vpack.c.b16 %v1997, %v1996
        %v2029 = vpack.c.b16 %v1999, %v1998
        %v2030 = vpack.c.b16 %v2001, %v2000
        %v2031 = vpack.c.b16 %v2003, %v2002
        %v2032 = vpack.c.b16 %v2005, %v2004
        %v2033 = vpack.c.b16 %v2007, %v2006
        %v2034 = vpack.c.b16 %v2009, %v2008
        %v2035 = vpack.c.b16 %v2011, %v2010
        %v2036 = vpack.c.b16 %v2013, %v2012
        %v2037 = vpack.c.b16 %v2015, %v2014
        %v2038 = vpack.c.b16 %v2017, %v2016
        %v2039 = vpack.c.b16 %v2019, %v2018
        %v2040 = vpack.c.b16 %v2021, %v2020
        %v2041 = vpack.c.b16 %v2023, %v2022
        %v2042 = vpack.c.b16 %v2025, %v2024
        %v2043 = vpack.c.b16 %v2027, %v2026
        %2060 = vmatpush.bf16.msra.mxu0 %v2035
        %2061 = vmatpush.bf16.msra.mxu0 %v2034
        %2062 = vmatpush.bf16.msra.mxu0 %v2033
        %2063 = vmatpush.bf16.msra.mxu0 %v2032
        %2064 = vmatpush.bf16.msra.mxu0 %v2031
        %2065 = vmatpush.bf16.msra.mxu0 %v2030
        %2066 = vmatpush.bf16.msra.mxu0 %v2029
        %2067 = vmatpush.bf16.msra.mxu0 %v2028
        %2068 = vmatmul.bf16.gmra.mxu0 %v1953
        %v2069 = vpop.f32.mrf.mxu0
        %v2070 = vadd.f32 0.0, %v2069
        %v2071 = vpop.f32.mrf.mxu0
        %2072 = vdwg.mxu0
        %2073 = vmatpush.bf16.msra.mxu0 %v2043
        %2074 = vmatpush.bf16.msra.mxu0 %v2042
        %2075 = vmatpush.bf16.msra.mxu0 %v2041
        %2076 = vmatpush.bf16.msra.mxu0 %v2040
        %2077 = vmatpush.bf16.msra.mxu0 %v2039
        %2078 = vmatpush.bf16.msra.mxu0 %v2038
        %2079 = vmatpush.bf16.msra.mxu0 %v2037
        %2080 = vmatpush.bf16.msra.mxu0 %v2036
        %2081 = vmatmul.bf16.gmra.mxu0 %v1961
        %v2082 = vpop.f32.mrf.mxu0
        %v2083 = vadd.f32 %v2070, %v2082
        %v2084 = vpop.f32.mrf.mxu0
        %2085 = vdwg.mxu0
        %v2086 = vadd.f32 %v1906, %v2083
        %v2087 = vld [vmem:[#allocation2] sm:$0xc0]
        %v2088 = vld [vmem:[#allocation2 + $0x8] sm:$0xc0]
        %v2089 = vld [vmem:[#allocation2 + $0x10] sm:$0x3f]
        %v2090 = vld [vmem:[#allocation2 + $0x18] sm:$0x3f]
        %v2091 = vpack.c.bf16 %v2089, %v2087
        %v2092 = vpack.c.bf16 %v2090, %v2088
        %s2093 = scalar_lea.vmem [#allocation6], 768
        %v2094 = vld [vmem:[%s2093] sm:$0xf]
        %v2095 = vld [vmem:[%s2093 + $0x4] sm:$0xf]
        %v2096 = vld [vmem:[%s2093 + $0x8] sm:$0xf]
        %v2097 = vld [vmem:[%s2093 + $0xc] sm:$0xf]
        %v2098 = vld [vmem:[%s2093 + $0x10] sm:$0xf]
        %v2099 = vld [vmem:[%s2093 + $0x14] sm:$0xf]
        %v2100 = vld [vmem:[%s2093 + $0x18] sm:$0xf]
        %v2101 = vld [vmem:[%s2093 + $0x1c] sm:$0xf]
        %v2102 = vld [vmem:[%s2093 + $0x20] sm:$0xf]
        %v2103 = vld [vmem:[%s2093 + $0x24] sm:$0xf]
        %v2104 = vld [vmem:[%s2093 + $0x28] sm:$0xf]
        %v2105 = vld [vmem:[%s2093 + $0x2c] sm:$0xf]
        %v2106 = vld [vmem:[%s2093 + $0x30] sm:$0xf]
        %v2107 = vld [vmem:[%s2093 + $0x34] sm:$0xf]
        %v2108 = vld [vmem:[%s2093 + $0x38] sm:$0xf]
        %v2109 = vld [vmem:[%s2093 + $0x3c] sm:$0xf]
        %v2110 = vld [vmem:[%s2093 + $0x40] sm:$0xf]
        %v2111 = vld [vmem:[%s2093 + $0x44] sm:$0xf]
        %v2112 = vld [vmem:[%s2093 + $0x48] sm:$0xf]
        %v2113 = vld [vmem:[%s2093 + $0x4c] sm:$0xf]
        %v2114 = vld [vmem:[%s2093 + $0x50] sm:$0xf]
        %v2115 = vld [vmem:[%s2093 + $0x54] sm:$0xf]
        %v2116 = vld [vmem:[%s2093 + $0x58] sm:$0xf]
        %v2117 = vld [vmem:[%s2093 + $0x5c] sm:$0xf]
        %v2118 = vld [vmem:[%s2093 + $0x60] sm:$0xf]
        %v2119 = vld [vmem:[%s2093 + $0x64] sm:$0xf]
        %v2120 = vld [vmem:[%s2093 + $0x68] sm:$0xf]
        %v2121 = vld [vmem:[%s2093 + $0x6c] sm:$0xf]
        %v2122 = vld [vmem:[%s2093 + $0x70] sm:$0xf]
        %v2123 = vld [vmem:[%s2093 + $0x74] sm:$0xf]
        %v2124 = vld [vmem:[%s2093 + $0x78] sm:$0xf]
        %v2125 = vld [vmem:[%s2093 + $0x7c] sm:$0xf]
        %v2128 = vrot.slane %v2091, 3
        %v2129 = vrot.slane %v2092, 3
        %v2164 = vunpack.c.l.b16 %v2094
        %v2165 = vunpack.c.l.b16 %v2095
        %v2166 = vunpack.c.l.b16 %v2096
        %v2167 = vunpack.c.l.b16 %v2097
        %v2168 = vunpack.c.l.b16 %v2098
        %v2169 = vunpack.c.l.b16 %v2099
        %v2170 = vunpack.c.l.b16 %v2100
        %v2171 = vunpack.c.l.b16 %v2101
        %v2172 = vunpack.c.l.b16 %v2102
        %v2173 = vunpack.c.l.b16 %v2103
        %v2174 = vunpack.c.l.b16 %v2104
        %v2175 = vunpack.c.l.b16 %v2105
        %v2176 = vunpack.c.l.b16 %v2106
        %v2177 = vunpack.c.l.b16 %v2107
        %v2178 = vunpack.c.l.b16 %v2108
        %v2179 = vunpack.c.l.b16 %v2109
        %v2180 = vunpack.c.l.b16 %v2110
        %v2181 = vunpack.c.l.b16 %v2111
        %v2182 = vunpack.c.l.b16 %v2112
        %v2183 = vunpack.c.l.b16 %v2113
        %v2184 = vunpack.c.l.b16 %v2114
        %v2185 = vunpack.c.l.b16 %v2115
        %v2186 = vunpack.c.l.b16 %v2116
        %v2187 = vunpack.c.l.b16 %v2117
        %v2188 = vunpack.c.l.b16 %v2118
        %v2189 = vunpack.c.l.b16 %v2119
        %v2190 = vunpack.c.l.b16 %v2120
        %v2191 = vunpack.c.l.b16 %v2121
        %v2192 = vunpack.c.l.b16 %v2122
        %v2193 = vunpack.c.l.b16 %v2123
        %v2194 = vunpack.c.l.b16 %v2124
        %v2195 = vunpack.c.l.b16 %v2125
        %v2196 = vpack.c.b16 %v2165, %v2164
        %v2197 = vpack.c.b16 %v2167, %v2166
        %v2198 = vpack.c.b16 %v2169, %v2168
        %v2199 = vpack.c.b16 %v2171, %v2170
        %v2200 = vpack.c.b16 %v2173, %v2172
        %v2201 = vpack.c.b16 %v2175, %v2174
        %v2202 = vpack.c.b16 %v2177, %v2176
        %v2203 = vpack.c.b16 %v2179, %v2178
        %v2204 = vpack.c.b16 %v2181, %v2180
        %v2205 = vpack.c.b16 %v2183, %v2182
        %v2206 = vpack.c.b16 %v2185, %v2184
        %v2207 = vpack.c.b16 %v2187, %v2186
        %v2208 = vpack.c.b16 %v2189, %v2188
        %v2209 = vpack.c.b16 %v2191, %v2190
        %v2210 = vpack.c.b16 %v2193, %v2192
        %v2211 = vpack.c.b16 %v2195, %v2194
        %2228 = vmatpush.bf16.msra.mxu0 %v2203
        %2229 = vmatpush.bf16.msra.mxu0 %v2202
        %2230 = vmatpush.bf16.msra.mxu0 %v2201
        %2231 = vmatpush.bf16.msra.mxu0 %v2200
        %2232 = vmatpush.bf16.msra.mxu0 %v2199
        %2233 = vmatpush.bf16.msra.mxu0 %v2198
        %2234 = vmatpush.bf16.msra.mxu0 %v2197
        %2235 = vmatpush.bf16.msra.mxu0 %v2196
        %2236 = vmatmul.bf16.gmra.mxu0 %v2128
        %v2237 = vpop.f32.mrf.mxu0
        %v2238 = vadd.f32 0.0, %v2237
        %v2239 = vpop.f32.mrf.mxu0
        %2240 = vdwg.mxu0
        %2241 = vmatpush.bf16.msra.mxu0 %v2211
        %2242 = vmatpush.bf16.msra.mxu0 %v2210
        %2243 = vmatpush.bf16.msra.mxu0 %v2209
        %2244 = vmatpush.bf16.msra.mxu0 %v2208
        %2245 = vmatpush.bf16.msra.mxu0 %v2207
        %2246 = vmatpush.bf16.msra.mxu0 %v2206
        %2247 = vmatpush.bf16.msra.mxu0 %v2205
        %2248 = vmatpush.bf16.msra.mxu0 %v2204
        %2249 = vmatmul.bf16.gmra.mxu0 %v2129
        %v2250 = vpop.f32.mrf.mxu0
        %v2251 = vadd.f32 %v2238, %v2250
        %v2252 = vpop.f32.mrf.mxu0
        %2253 = vdwg.mxu0
        %v2254 = vadd.f32 %v2086, %v2251
        %v2255 = vxor.u32 %v2254, 2147483648
        %v2256 = vmul.f32 %v2255, 1.442695
        %v2257 = vpow.pop %v2256
        %v2258 = vadd.f32 %v2257, 1.0
        %v2259 = vrcp.pop %v2258
        %v2260 = vmul.f32 %v2258, %v2259
        %v2261 = vsub.f32 1.0, %v2260
        %v2262 = vmul.f32 %v2259, %v2261
        %v2263 = vadd.f32 %v2259, %v2262
        %vm2264 = vweird.f32 %v2258
        %vm2265 = vweird.f32 %v2259
        %vm2266 = vmor %vm2264, %vm2265
        %v2267 = vsel %vm2266, %v2259, %v2263
        %v2268 = vand.u32 2147483647, %v2258
        %vm2269 = vcmp.eq.f32.partialorder %v2268, 8.507059e+37
        %v2270 = vand.u32 %v2258, 2147483648
        %v2271 = vor.u32 1.1754944e-38, %v2270
        %v2272 = vsel %vm2269, %v2271, %v2267
        %v2273 = vmul.f32 1.0, %v2272
        %v2274 = vmul.f32 %v940, %v2273
        %v2275 = vmul.f32 %v941, %v2273
        %v2276 = vmul.f32 %v942, %v2273
        %v2277 = vmul.f32 %v943, %v2273
        %v2278 = vmul.f32 %v944, %v2273
        %v2279 = vmul.f32 %v945, %v2273
        %v2280 = vmul.f32 %v946, %v2273
        %v2281 = vmul.f32 %v947, %v2273
        %v2282 = vmul.f32 %v948, %v2273
        %v2283 = vmul.f32 %v949, %v2273
        %v2284 = vmul.f32 %v950, %v2273
        %v2285 = vmul.f32 %v951, %v2273
        %v2286 = vmul.f32 %v952, %v2273
        %v2287 = vmul.f32 %v953, %v2273
        %v2288 = vmul.f32 %v954, %v2273
        %v2289 = vmul.f32 %v955, %v2273
        %v2290 = vmul.f32 %v956, %v2273
        %v2291 = vmul.f32 %v957, %v2273
        %v2292 = vmul.f32 %v958, %v2273
        %v2293 = vmul.f32 %v959, %v2273
        %v2294 = vmul.f32 %v960, %v2273
        %v2295 = vmul.f32 %v961, %v2273
        %v2296 = vmul.f32 %v962, %v2273
        %v2297 = vmul.f32 %v963, %v2273
        %v2298 = vmul.f32 %v964, %v2273
        %v2299 = vmul.f32 %v965, %v2273
        %v2300 = vmul.f32 %v966, %v2273
        %v2301 = vmul.f32 %v967, %v2273
        %v2302 = vmul.f32 %v968, %v2273
        %v2303 = vmul.f32 %v969, %v2273
        %v2304 = vmul.f32 %v970, %v2273
        %v2305 = vmul.f32 %v971, %v2273
        %2306 = vst [vmem:[%s234] sm:$0xff] %v2274
        %2307 = vst [vmem:[%s234 + $0x8] sm:$0xff] %v2275
        %2308 = vst [vmem:[%s234 + $0x10] sm:$0xff] %v2276
        %2309 = vst [vmem:[%s234 + $0x18] sm:$0xff] %v2277
        %2310 = vst [vmem:[%s234 + $0x20] sm:$0xff] %v2278
        %2311 = vst [vmem:[%s234 + $0x28] sm:$0xff] %v2279
        %2312 = vst [vmem:[%s234 + $0x30] sm:$0xff] %v2280
        %2313 = vst [vmem:[%s234 + $0x38] sm:$0xff] %v2281
        %2314 = vst [vmem:[%s234 + $0x40] sm:$0xff] %v2282
        %2315 = vst [vmem:[%s234 + $0x48] sm:$0xff] %v2283
        %2316 = vst [vmem:[%s234 + $0x50] sm:$0xff] %v2284
        %2317 = vst [vmem:[%s234 + $0x58] sm:$0xff] %v2285
        %2318 = vst [vmem:[%s234 + $0x60] sm:$0xff] %v2286
        %2319 = vst [vmem:[%s234 + $0x68] sm:$0xff] %v2287
        %2320 = vst [vmem:[%s234 + $0x70] sm:$0xff] %v2288
        %2321 = vst [vmem:[%s234 + $0x78] sm:$0xff] %v2289
        %2322 = vst [vmem:[%s234 + $0x80] sm:$0xff] %v2290
        %2323 = vst [vmem:[%s234 + $0x88] sm:$0xff] %v2291
        %2324 = vst [vmem:[%s234 + $0x90] sm:$0xff] %v2292
        %2325 = vst [vmem:[%s234 + $0x98] sm:$0xff] %v2293
        %2326 = vst [vmem:[%s234 + $0xa0] sm:$0xff] %v2294
        %2327 = vst [vmem:[%s234 + $0xa8] sm:$0xff] %v2295
        %2328 = vst [vmem:[%s234 + $0xb0] sm:$0xff] %v2296
        %2329 = vst [vmem:[%s234 + $0xb8] sm:$0xff] %v2297
        %2330 = vst [vmem:[%s234 + $0xc0] sm:$0xff] %v2298
        %2331 = vst [vmem:[%s234 + $0xc8] sm:$0xff] %v2299
        %2332 = vst [vmem:[%s234 + $0xd0] sm:$0xff] %v2300
        %2333 = vst [vmem:[%s234 + $0xd8] sm:$0xff] %v2301
        %2334 = vst [vmem:[%s234 + $0xe0] sm:$0xff] %v2302
        %2335 = vst [vmem:[%s234 + $0xe8] sm:$0xff] %v2303
        %2336 = vst [vmem:[%s234 + $0xf0] sm:$0xff] %v2304
        %2337 = vst [vmem:[%s234 + $0xf8] sm:$0xff] %v2305
        %s2338 = sand.u32 %s119, 1
        %s2339 = scalar_lea.sflag [#allocation5], %s2338
        %s2340 = sand.u32 %s119, 1
        %s2341 = smul.addr %s2340, 256
        %s2342 = scalar_lea.vmem [#allocation8], %s2341
        // Predicated region
        $region45: #{tpu_custom_call.1} parent=35 // pred_check
          %p2343 = pneg %p129
        $region46: #{tpu_custom_call.1} parent=35 // pred_check_branch
          %2345 = sbr.rel (%p2343) target = $region48
        $region47: #{tpu_custom_call.1} parent=35 // pred_region
          %2347 = vsyncadd %s2339, 0
          %s2348 = smul.addr %s22, 32
          %s2349 = smul.addr %s2348, 8
          %s2350 = scalar_lea.hbm %s4, %s2349
          %s2351 = sshll.u32 %s2342, 4
          %s2352 = int_to_ptr.vmem [resolvable:$true] %s2351
          %s2353 = sshll.u32 %s2350, 4
          %s2354 = int_to_ptr.hbm [resolvable:$true] %s2353
          %2359 = dma.vmem_to_hbm [thread:$0]  %s2352, 4096, %s2354, %s2339, 128, 128, 8
        $region48: #{tpu_custom_call.1} parent=35 // pred_fallthru
          _
      $region36: #{tpu_custom_call.1} parent=5 // pred_fallthru
        _
      %p2360 = scmp.le.s32.totalorder 2, %s17
      // Predicated region
      $region49: #{tpu_custom_call.1} parent=5 // pred_check
        %p2361 = pneg %p2360
      $region50: #{tpu_custom_call.1} parent=5 // pred_check_branch
        %2363 = sbr.rel (%p2361) target = $region52
      $region51: #{tpu_custom_call.1} parent=5 // pred_region
        %s2364 = ssub.s32 %s17, 2
        // Predicated region
        $region53: #{tpu_custom_call.1} parent=51 // pred_check
          %p2365 = pneg %p135
        $region54: #{tpu_custom_call.1} parent=51 // pred_check_branch
          %2367 = sbr.rel (%p2365) target = $region56
        $region55: #{tpu_custom_call.1} parent=51 // pred_region
          %s2368 = sand.u32 %s120, 1
          %s2369 = scalar_lea.sflag [#allocation5], %s2368
          %s2370 = sand.u32 %s120, 1
          %s2371 = smul.addr %s2370, 256
          %s2372 = scalar_lea.vmem [#allocation8], %s2371
          %2374 = dma.done %s2369, 4096
        $region56: #{tpu_custom_call.1} parent=51 // pred_fallthru
          _
      $region52: #{tpu_custom_call.1} parent=5 // pred_fallthru
        _
    $region6: #{tpu_custom_call.1} parent=1 // loop_footer
      %s21 = sadd.s32 1, %s17
    $region7: #{tpu_custom_call.1} parent=1 // loop_footer_branch
      %16 = sbr.rel target = $region3
    $region8: #{tpu_custom_call.1} parent=1 // loop_exit
      _
    %2375 = vsyncpa [#allocation4], 1
    %s2376 = scalar_lea.sflag [#allocation4], 1
    %2377 = vsyncpa %s2376, 1
    %2378 = vsyncpa [#allocation7], 1
    %2379 = vsyncpa [#allocation5], 1
    %s2380 = scalar_lea.sflag [#allocation5], 1
    %2381 = vsyncpa %s2380, 1

// kernel: tpu_custom_call.1
$region0: #{tpu_custom_call.1}
  #allocation0 [shape = 'u32[]', space=smem, size = 0x4, offset = 0x4, fixed_abs, tag = 'smem constant byte address 0x4 - core index']
  #allocation1 [shape = 'u32[72,128]{1,0:T(1,128)}', space=vmem, size = 0x9000, scoped, tag = 'internal scratch']
  #allocation2 [shape = 'f32[14,256]{1,0:T(8,128)}', space=vmem, size = 0x4000, scoped, tag = 'scratch operand']
  %s0 = inlined_call_operand.hbm [shape: bf16[2,32,8,128], index: 0, kind: input, shape index: {}]
  %s1 = inlined_call_operand.vmem [shape: f32[2,32], index: 1, kind: input, shape index: {}]
  %s2 = inlined_call_operand.vmem [shape: f32[32,2], index: 2, kind: input, shape index: {}]
  %s3 = inlined_call_operand.hbm [shape: bf16[7,256,128], index: 3, kind: input, shape index: {}]
  %s4 = inlined_call_operand.hbm [shape: f32[2,32,8,128], index: 4, kind: output, shape index: {}]
  %s5 = sld [smem:[#allocation0]]
  $region57: #{tpu_custom_call.1} parent=0
    _
  %s7 = ssub.s32 1, %s5
  %s8 = scalar_select 0, %s7, %s5
  $region1: #{tpu_custom_call.1} parent=0
    #allocation3 [shape = 'u8[131072]{0}', space=vmem, size = 0x20000, scoped, tag = 'input window, operand 0']
    #allocation4 [shape = 's32[2]{0}', space=sflag, size = 0x8, scoped, tag = 'scoped memory for tpu_custom_call.1']
    #allocation5 [shape = 's32[2]{0}', space=sflag, size = 0x8, scoped, tag = 'scoped memory for tpu_custom_call.1']
    #allocation6 [shape = 'u8[458752]{0}', space=vmem, size = 0x70000, scoped, tag = 'input window, operand 3, single buffered']
    #allocation7 [shape = 's32[1]{0}', space=sflag, size = 0x4, scoped, tag = 'scoped memory for tpu_custom_call.1']
    #allocation8 [shape = 'u8[262144]{0}', space=vmem, size = 0x40000, scoped, tag = 'output window, operand 0']
    %9 = vsyncpa [#allocation4], 0
    %s10 = scalar_lea.sflag [#allocation4], 1
    %11 = vsyncpa %s10, 0
    %12 = vsyncpa [#allocation7], 0
    %13 = vsyncpa [#allocation5], 0
    %s14 = scalar_lea.sflag [#allocation5], 1
    %15 = vsyncpa %s14, 0
    loop: start=0, step=1, limit=4
    $region2: #{tpu_custom_call.1} parent=1 // loop_pre_header
      _
    $region3: #{tpu_custom_call.1} parent=1 // loop_header
      %s17 = sphi 0, %s21
      %p18 = scmp.ge.s32.totalorder %s17, 4
      %s27 = sphi 0, %s29
      %s30 = sphi 0, %s27
      %s31 = sphi 0, %s30
      %s47 = sphi 0, %s31
      %s51 = sphi 0, %s51
      %s53 = sphi 0, %s51
      %s54 = sphi 0, %s53
      %s68 = sphi 0, %s54
      %s72 = sphi 0, %s72
      %s74 = sphi 0, %s72
      %s75 = sphi 0, %s74
      %s89 = sphi 0, %s75
      %s93 = sphi 0, %s93
      %s95 = sphi 0, %s93
      %s96 = sphi 0, %s95
      %s110 = sphi 0, %s96
      %s116 = sphi 0, %s118
      %s119 = sphi 0, %s116
      %s120 = sphi 0, %s119
      %s136 = sphi 0, %s120
    $region4: #{tpu_custom_call.1} parent=1 // loop_header_branch
      %20 = sbr.rel (%p18) target = $region8
    $region5: #{tpu_custom_call.1} parent=1 // loop_body
      %s22 = ssub.s32 %s17, 1
      %s23 = ssub.s32 %s17, 2
      %s24 = sadd.s32 %s17, 1
      %s25 = ssub.s32 %s17, %s24
      %p26 = scmp.eq.s32.totalorder %s25, 0
      %s28 = sadd.s32 %s27, 1
      %s29 = scalar_select %p26, %s27, %s28
      %p32 = pneg %p26
      %p33 = scmp.eq.s32.totalorder %s17, 1
      %p34 = por %p32, %p33
      %p35 = scmp.ne.s32.totalorder %s27, %s30
      %p36 = scmp.eq.s32.totalorder %s17, 0
      %p37 = por %p35, %p36
      %p38 = scmp.ne.s32.totalorder %s27, %s30
      %p39 = scmp.eq.s32.totalorder %s22, 1
      %p40 = por %p38, %p39
      %p41 = scmp.ne.s32.totalorder %s30, %s31
      %p42 = scmp.eq.s32.totalorder %s22, 0
      %p43 = por %p41, %p42
      %p44 = scmp.ne.s32.totalorder %s30, %s31
      %p45 = scmp.eq.s32.totalorder %s23, 1
      %p46 = por %p44, %p45
      %p48 = scmp.ne.s32.totalorder %s31, %s47
      %p49 = scmp.eq.s32.totalorder %s23, 0
      %p50 = por %p48, %p49
      %s52 = sadd.s32 %s51, 1
      %p55 = scmp.eq.s32.totalorder %s17, 1
      %p56 = scmp.ne.s32.totalorder %s51, %s53
      %p57 = scmp.eq.s32.totalorder %s17, 0
      %p58 = por %p56, %p57
      %p59 = scmp.ne.s32.totalorder %s51, %s53
      %p60 = scmp.eq.s32.totalorder %s22, 1
      %p61 = por %p59, %p60
      %p62 = scmp.ne.s32.totalorder %s53, %s54
      %p63 = scmp.eq.s32.totalorder %s22, 0
      %p64 = por %p62, %p63
      %p65 = scmp.ne.s32.totalorder %s53, %s54
      %p66 = scmp.eq.s32.totalorder %s23, 1
      %p67 = por %p65, %p66
      %p69 = scmp.ne.s32.totalorder %s54, %s68
      %p70 = scmp.eq.s32.totalorder %s23, 0
      %p71 = por %p69, %p70
      %s73 = sadd.s32 %s72, 1
      %p76 = scmp.eq.s32.totalorder %s17, 1
      %p77 = scmp.ne.s32.totalorder %s72, %s74
      %p78 = scmp.eq.s32.totalorder %s17, 0
      %p79 = por %p77, %p78
      %p80 = scmp.ne.s32.totalorder %s72, %s74
      %p81 = scmp.eq.s32.totalorder %s22, 1
      %p82 = por %p80, %p81
      %p83 = scmp.ne.s32.totalorder %s74, %s75
      %p84 = scmp.eq.s32.totalorder %s22, 0
      %p85 = por %p83, %p84
      %p86 = scmp.ne.s32.totalorder %s74, %s75
      %p87 = scmp.eq.s32.totalorder %s23, 1
      %p88 = por %p86, %p87
      %p90 = scmp.ne.s32.totalorder %s75, %s89
      %p91 = scmp.eq.s32.totalorder %s23, 0
      %p92 = por %p90, %p91
      %s94 = sadd.s32 %s93, 1
      %p97 = scmp.eq.s32.totalorder %s17, 1
      %p98 = scmp.ne.s32.totalorder %s93, %s95
      %p99 = scmp.eq.s32.totalorder %s17, 0
      %p100 = por %p98, %p99
      %p101 = scmp.ne.s32.totalorder %s93, %s95
      %p102 = scmp.eq.s32.totalorder %s22, 1
      %p103 = por %p101, %p102
      %p104 = scmp.ne.s32.totalorder %s95, %s96
      %p105 = scmp.eq.s32.totalorder %s22, 0
      %p106 = por %p104, %p105
      %p107 = scmp.ne.s32.totalorder %s95, %s96
      %p108 = scmp.eq.s32.totalorder %s23, 1
      %p109 = por %p107, %p108
      %p111 = scmp.ne.s32.totalorder %s96, %s110
      %p112 = scmp.eq.s32.totalorder %s23, 0
      %p113 = por %p111, %p112
      %s114 = ssub.s32 %s17, %s24
      %p115 = scmp.eq.s32.totalorder %s114, 0
      %s117 = sadd.s32 %s116, 1
      %s118 = scalar_select %p115, %s116, %s117
      %p121 = pneg %p115
      %p122 = scmp.eq.s32.totalorder %s17, 1
      %p123 = por %p121, %p122
      %p124 = scmp.ne.s32.totalorder %s116, %s119
      %p125 = scmp.eq.s32.totalorder %s17, 0
      %p126 = por %p124, %p125
      %p127 = scmp.ne.s32.totalorder %s116, %s119
      %p128 = scmp.eq.s32.totalorder %s22, 1
      %p129 = por %p127, %p128
      %p130 = scmp.ne.s32.totalorder %s119, %s120
      %p131 = scmp.eq.s32.totalorder %s22, 0
      %p132 = por %p130, %p131
      %p133 = scmp.ne.s32.totalorder %s119, %s120
      %p134 = scmp.eq.s32.totalorder %s23, 1
      %p135 = por %p133, %p134
      %p137 = scmp.ne.s32.totalorder %s120, %s136
      %p138 = scmp.eq.s32.totalorder %s23, 0
      %p139 = por %p137, %p138
      %p140 = scmp.le.s32.totalorder 1, %s17
      %p141 = scmp.lt.s32.totalorder %s17, 3
      %p142 = pnand %p140, %p141
      %p143 = pneg %p142
      // Predicated region
      $region9: #{tpu_custom_call.1} parent=5 // pred_check
        _
      $region10: #{tpu_custom_call.1} parent=5 // pred_check_branch
        %145 = sbr.rel (%p142) target = $region12
      $region11: #{tpu_custom_call.1} parent=5 // pred_region
        %s146 = ssub.s32 %s17, 1
        // Predicated region
        $region13: #{tpu_custom_call.1} parent=11 // pred_check
          %p147 = pneg %p64
        $region14: #{tpu_custom_call.1} parent=11 // pred_check_branch
          %149 = sbr.rel (%p147) target = $region16
        $region15: #{tpu_custom_call.1} parent=11 // pred_region
          _
        $region16: #{tpu_custom_call.1} parent=11 // pred_fallthru
          _
        // Predicated region
        $region17: #{tpu_custom_call.1} parent=11 // pred_check
          %p150 = pneg %p85
        $region18: #{tpu_custom_call.1} parent=11 // pred_check_branch
          %152 = sbr.rel (%p150) target = $region20
        $region19: #{tpu_custom_call.1} parent=11 // pred_region
          _
        $region20: #{tpu_custom_call.1} parent=11 // pred_fallthru
          _
        // Predicated region
        $region21: #{tpu_custom_call.1} parent=11 // pred_check
          %p153 = pneg %p106
        $region22: #{tpu_custom_call.1} parent=11 // pred_check_branch
          %155 = sbr.rel (%p153) target = $region24
        $region23: #{tpu_custom_call.1} parent=11 // pred_region
          %157 = vsyncadd [#allocation7], 0
          %s158 = sshll.u32 %s3, 4
          %s159 = int_to_ptr.hbm [resolvable:$true] %s158
          %s160 = sshll.u32 [#allocation6], 4
          %s161 = int_to_ptr.vmem [resolvable:$true] %s160
          %166 = dma.hbm_to_vmem [thread:$0]  %s159, 14336, %s161, [#allocation7], 64, 64, 4
        $region24: #{tpu_custom_call.1} parent=11 // pred_fallthru
          _
      $region12: #{tpu_custom_call.1} parent=5 // pred_fallthru
        _
      %p167 = scmp.lt.s32.totalorder %s17, 2
      // Predicated region
      $region25: #{tpu_custom_call.1} parent=5 // pred_check
        %p168 = pneg %p167
      $region26: #{tpu_custom_call.1} parent=5 // pred_check_branch
        %170 = sbr.rel (%p168) target = $region28
      $region27: #{tpu_custom_call.1} parent=5 // pred_region
        // Predicated region
        $region29: #{tpu_custom_call.1} parent=27 // pred_check
          %p171 = pneg %p37
        $region30: #{tpu_custom_call.1} parent=27 // pred_check_branch
          %173 = sbr.rel (%p171) target = $region32
        $region31: #{tpu_custom_call.1} parent=27 // pred_region
          %s174 = sand.u32 %s27, 1
          %s175 = scalar_lea.sflag [#allocation4], %s174
          %s176 = sand.u32 %s27, 1
          %s177 = smul.addr %s176, 128
          %s178 = scalar_lea.vmem [#allocation3], %s177
          %180 = vsyncadd %s175, 0
          %s181 = smul.addr %s17, 32
          %s182 = smul.addr %s181, 4
          %s183 = scalar_lea.hbm %s0, %s182
          %s184 = sshll.u32 %s183, 4
          %s185 = int_to_ptr.hbm [resolvable:$true] %s184
          %s186 = sshll.u32 %s178, 4
          %s187 = int_to_ptr.vmem [resolvable:$true] %s186
          %192 = dma.hbm_to_vmem [thread:$0]  %s185, 2048, %s187, %s175, 64, 64, 4
        $region32: #{tpu_custom_call.1} parent=27 // pred_fallthru
          _
      $region28: #{tpu_custom_call.1} parent=5 // pred_fallthru
        _
      %p193 = scmp.le.s32.totalorder 1, %s17
      %p194 = scmp.lt.s32.totalorder %s17, 3
      %p195 = pnand %p193, %p194
      %p196 = pneg %p195
      // Predicated region
      $region33: #{tpu_custom_call.1} parent=5 // pred_check
        _
      $region34: #{tpu_custom_call.1} parent=5 // pred_check_branch
        %198 = sbr.rel (%p195) target = $region36
      $region35: #{tpu_custom_call.1} parent=5 // pred_region
        %s199 = ssub.s32 %s17, 1
        %s200 = sand.u32 %s30, 1
        %s201 = scalar_lea.sflag [#allocation4], %s200
        %s202 = sand.u32 %s30, 1
        %s203 = smul.addr %s202, 128
        %s204 = scalar_lea.vmem [#allocation3], %s203
        // Predicated region
        $region37: #{tpu_custom_call.1} parent=35 // pred_check
          %p205 = pneg %p43
        $region38: #{tpu_custom_call.1} parent=35 // pred_check_branch
          %207 = sbr.rel (%p205) target = $region40
        $region39: #{tpu_custom_call.1} parent=35 // pred_region
          %209 = dma.done %s201, 2048
        $region40: #{tpu_custom_call.1} parent=35 // pred_fallthru
          _
        // Predicated region
        $region41: #{tpu_custom_call.1} parent=35 // pred_check
          %p210 = pneg %p106
        $region42: #{tpu_custom_call.1} parent=35 // pred_check_branch
          %212 = sbr.rel (%p210) target = $region44
        $region43: #{tpu_custom_call.1} parent=35 // pred_region
          %214 = dma.done [#allocation7], 14336
        $region44: #{tpu_custom_call.1} parent=35 // pred_fallthru
          _
        %s215 = sand.u32 %s30, 1
        %s216 = scalar_lea.sflag [#allocation4], %s215
        %s217 = sand.u32 %s30, 1
        %s218 = smul.addr %s217, 128
        %s219 = scalar_lea.vmem [#allocation3], %s218
        %p220 = pneg %p43
        %p221 = pneg %p40
        %p222 = pneg %p64
        %p223 = pneg %p61
        %p224 = pneg %p85
        %p225 = pneg %p82
        %p226 = pneg %p106
        %p227 = pneg %p103
        %p228 = pneg %p132
        %p229 = pneg %p129
        %s230 = sand.u32 %s119, 1
        %s231 = scalar_lea.sflag [#allocation5], %s230
        %s232 = sand.u32 %s119, 1
        %s233 = smul.addr %s232, 256
        %s234 = scalar_lea.vmem [#allocation8], %s233
        %v235 = vld [vmem:[%s204] sm:$0xf]
        %v236 = vld [vmem:[%s204 + $0x4] sm:$0xf]
        %v237 = vld [vmem:[%s204 + $0x8] sm:$0xf]
        %v238 = vld [vmem:[%s204 + $0xc] sm:$0xf]
        %v239 = vld [vmem:[%s204 + $0x10] sm:$0xf]
        %v240 = vld [vmem:[%s204 + $0x14] sm:$0xf]
        %v241 = vld [vmem:[%s204 + $0x18] sm:$0xf]
        %v242 = vld [vmem:[%s204 + $0x1c] sm:$0xf]
        %v243 = vld [vmem:[%s204 + $0x20] sm:$0xf]
        %v244 = vld [vmem:[%s204 + $0x24] sm:$0xf]
        %v245 = vld [vmem:[%s204 + $0x28] sm:$0xf]
        %v246 = vld [vmem:[%s204 + $0x2c] sm:$0xf]
        %v247 = vld [vmem:[%s204 + $0x30] sm:$0xf]
        %v248 = vld [vmem:[%s204 + $0x34] sm:$0xf]
        %v249 = vld [vmem:[%s204 + $0x38] sm:$0xf]
        %v250 = vld [vmem:[%s204 + $0x3c] sm:$0xf]
        %v251 = vld [vmem:[%s204 + $0x40] sm:$0xf]
        %v252 = vld [vmem:[%s204 + $0x44] sm:$0xf]
        %v253 = vld [vmem:[%s204 + $0x48] sm:$0xf]
        %v254 = vld [vmem:[%s204 + $0x4c] sm:$0xf]
        %v255 = vld [vmem:[%s204 + $0x50] sm:$0xf]
        %v256 = vld [vmem:[%s204 + $0x54] sm:$0xf]
        %v257 = vld [vmem:[%s204 + $0x58] sm:$0xf]
        %v258 = vld [vmem:[%s204 + $0x5c] sm:$0xf]
        %v259 = vld [vmem:[%s204 + $0x60] sm:$0xf]
        %v260 = vld [vmem:[%s204 + $0x64] sm:$0xf]
        %v261 = vld [vmem:[%s204 + $0x68] sm:$0xf]
        %v262 = vld [vmem:[%s204 + $0x6c] sm:$0xf]
        %v263 = vld [vmem:[%s204 + $0x70] sm:$0xf]
        %v264 = vld [vmem:[%s204 + $0x74] sm:$0xf]
        %v265 = vld [vmem:[%s204 + $0x78] sm:$0xf]
        %v266 = vld [vmem:[%s204 + $0x7c] sm:$0xf]
        %v267 = vunpack.c.l.bf16 %v235
        %v268 = vunpack.c.l.bf16 %v236
        %v269 = vunpack.c.l.bf16 %v237
        %v270 = vunpack.c.l.bf16 %v238
        %v271 = vunpack.c.l.bf16 %v239
        %v272 = vunpack.c.l.bf16 %v240
        %v273 = vunpack.c.l.bf16 %v241
        %v274 = vunpack.c.l.bf16 %v242
        %v275 = vunpack.c.l.bf16 %v243
        %v276 = vunpack.c.l.bf16 %v244
        %v277 = vunpack.c.l.bf16 %v245
        %v278 = vunpack.c.l.bf16 %v246
        %v279 = vunpack.c.l.bf16 %v247
        %v280 = vunpack.c.l.bf16 %v248
        %v281 = vunpack.c.l.bf16 %v249
        %v282 = vunpack.c.l.bf16 %v250
        %v283 = vunpack.c.l.bf16 %v251
        %v284 = vunpack.c.l.bf16 %v252
        %v285 = vunpack.c.l.bf16 %v253
        %v286 = vunpack.c.l.bf16 %v254
        %v287 = vunpack.c.l.bf16 %v255
        %v288 = vunpack.c.l.bf16 %v256
        %v289 = vunpack.c.l.bf16 %v257
        %v290 = vunpack.c.l.bf16 %v258
        %v291 = vunpack.c.l.bf16 %v259
        %v292 = vunpack.c.l.bf16 %v260
        %v293 = vunpack.c.l.bf16 %v261
        %v294 = vunpack.c.l.bf16 %v262
        %v295 = vunpack.c.l.bf16 %v263
        %v296 = vunpack.c.l.bf16 %v264
        %v297 = vunpack.c.l.bf16 %v265
        %v298 = vunpack.c.l.bf16 %v266
        %299 = vadd.xlane.f32.xlu0 %v267
        %v300 = vpop.xlane.xlu0 %299
        %301 = vadd.xlane.f32.xlu0 %v268
        %v302 = vpop.xlane.xlu0 %301
        %303 = vadd.xlane.f32.xlu0 %v269
        %v304 = vpop.xlane.xlu0 %303
        %305 = vadd.xlane.f32.xlu0 %v270
        %v306 = vpop.xlane.xlu0 %305
        %307 = vadd.xlane.f32.xlu0 %v271
        %v308 = vpop.xlane.xlu0 %307
        %309 = vadd.xlane.f32.xlu0 %v272
        %v310 = vpop.xlane.xlu0 %309
        %311 = vadd.xlane.f32.xlu0 %v273
        %v312 = vpop.xlane.xlu0 %311
        %313 = vadd.xlane.f32.xlu0 %v274
        %v314 = vpop.xlane.xlu0 %313
        %315 = vadd.xlane.f32.xlu0 %v275
        %v316 = vpop.xlane.xlu0 %315
        %317 = vadd.xlane.f32.xlu0 %v276
        %v318 = vpop.xlane.xlu0 %317
        %319 = vadd.xlane.f32.xlu0 %v277
        %v320 = vpop.xlane.xlu0 %319
        %321 = vadd.xlane.f32.xlu0 %v278
        %v322 = vpop.xlane.xlu0 %321
        %323 = vadd.xlane.f32.xlu0 %v279
        %v324 = vpop.xlane.xlu0 %323
        %325 = vadd.xlane.f32.xlu0 %v280
        %v326 = vpop.xlane.xlu0 %325
        %327 = vadd.xlane.f32.xlu0 %v281
        %v328 = vpop.xlane.xlu0 %327
        %329 = vadd.xlane.f32.xlu0 %v282
        %v330 = vpop.xlane.xlu0 %329
        %331 = vadd.xlane.f32.xlu0 %v283
        %v332 = vpop.xlane.xlu0 %331
        %333 = vadd.xlane.f32.xlu0 %v284
        %v334 = vpop.xlane.xlu0 %333
        %335 = vadd.xlane.f32.xlu0 %v285
        %v336 = vpop.xlane.xlu0 %335
        %337 = vadd.xlane.f32.xlu0 %v286
        %v338 = vpop.xlane.xlu0 %337
        %339 = vadd.xlane.f32.xlu0 %v287
        %v340 = vpop.xlane.xlu0 %339
        %341 = vadd.xlane.f32.xlu0 %v288
        %v342 = vpop.xlane.xlu0 %341
        %343 = vadd.xlane.f32.xlu0 %v289
        %v344 = vpop.xlane.xlu0 %343
        %345 = vadd.xlane.f32.xlu0 %v290
        %v346 = vpop.xlane.xlu0 %345
        %347 = vadd.xlane.f32.xlu0 %v291
        %v348 = vpop.xlane.xlu0 %347
        %349 = vadd.xlane.f32.xlu0 %v292
        %v350 = vpop.xlane.xlu0 %349
        %351 = vadd.xlane.f32.xlu0 %v293
        %v352 = vpop.xlane.xlu0 %351
        %353 = vadd.xlane.f32.xlu0 %v294
        %v354 = vpop.xlane.xlu0 %353
        %355 = vadd.xlane.f32.xlu0 %v295
        %v356 = vpop.xlane.xlu0 %355
        %357 = vadd.xlane.f32.xlu0 %v296
        %v358 = vpop.xlane.xlu0 %357
        %359 = vadd.xlane.f32.xlu0 %v297
        %v360 = vpop.xlane.xlu0 %359
        %361 = vadd.xlane.f32.xlu0 %v298
        %v362 = vpop.xlane.xlu0 %361
        %v363 = vrcp.pop 128.0
        %v364 = vmul.f32 128.0, %v363
        %v365 = vsub.f32 1.0, %v364
        %v366 = vmul.f32 %v363, %v365
        %v367 = vadd.f32 %v363, %v366
        %vm368 = vweird.f32 %v363
        %v369 = vsel %vm368, %v363, %v367
        %v370 = vmul.f32 %v300, %v369
        %v371 = vmul.f32 %v302, %v369
        %v372 = vmul.f32 %v304, %v369
        %v373 = vmul.f32 %v306, %v369
        %v374 = vmul.f32 %v308, %v369
        %v375 = vmul.f32 %v310, %v369
        %v376 = vmul.f32 %v312, %v369
        %v377 = vmul.f32 %v314, %v369
        %v378 = vmul.f32 %v316, %v369
        %v379 = vmul.f32 %v318, %v369
        %v380 = vmul.f32 %v320, %v369
        %v381 = vmul.f32 %v322, %v369
        %v382 = vmul.f32 %v324, %v369
        %v383 = vmul.f32 %v326, %v369
        %v384 = vmul.f32 %v328, %v369
        %v385 = vmul.f32 %v330, %v369
        %v386 = vmul.f32 %v332, %v369
        %v387 = vmul.f32 %v334, %v369
        %v388 = vmul.f32 %v336, %v369
        %v389 = vmul.f32 %v338, %v369
        %v390 = vmul.f32 %v340, %v369
        %v391 = vmul.f32 %v342, %v369
        %v392 = vmul.f32 %v344, %v369
        %v393 = vmul.f32 %v346, %v369
        %v394 = vmul.f32 %v348, %v369
        %v395 = vmul.f32 %v350, %v369
        %v396 = vmul.f32 %v352, %v369
        %v397 = vmul.f32 %v354, %v369
        %v398 = vmul.f32 %v356, %v369
        %v399 = vmul.f32 %v358, %v369
        %v400 = vmul.f32 %v360, %v369
        %v401 = vmul.f32 %v362, %v369
        %v434 = vlaneseq
        %v435 = vand.u32 %v434, 127
        %v436 = vperm.slane %v370, %v435
        %v437 = vperm.slane %v371, %v435
        %v438 = vperm.slane %v372, %v435
        %v439 = vperm.slane %v373, %v435
        %v440 = vperm.slane %v374, %v435
        %v441 = vperm.slane %v375, %v435
        %v442 = vperm.slane %v376, %v435
        %v443 = vperm.slane %v377, %v435
        %v444 = vperm.slane %v378, %v435
        %v445 = vperm.slane %v379, %v435
        %v446 = vperm.slane %v380, %v435
        %v447 = vperm.slane %v381, %v435
        %v448 = vperm.slane %v382, %v435
        %v449 = vperm.slane %v383, %v435
        %v450 = vperm.slane %v384, %v435
        %v451 = vperm.slane %v385, %v435
        %v452 = vperm.slane %v386, %v435
        %v453 = vperm.slane %v387, %v435
        %v454 = vperm.slane %v388, %v435
        %v455 = vperm.slane %v389, %v435
        %v456 = vperm.slane %v390, %v435
        %v457 = vperm.slane %v391, %v435
        %v458 = vperm.slane %v392, %v435
        %v459 = vperm.slane %v393, %v435
        %v460 = vperm.slane %v394, %v435
        %v461 = vperm.slane %v395, %v435
        %v462 = vperm.slane %v396, %v435
        %v463 = vperm.slane %v397, %v435
        %v464 = vperm.slane %v398, %v435
        %v465 = vperm.slane %v399, %v435
        %v466 = vperm.slane %v400, %v435
        %v467 = vperm.slane %v401, %v435
        %vm468 = vcmask 1041409
        %v469 = vsel %vm468, %v437, %v436
        %vm470 = vcmask 1042434
        %v471 = vsel %vm470, %v438, %v469
        %vm472 = vcmask 1043459
        %v473 = vsel %vm472, %v439, %v471
        %vm474 = vcmask 1044484
        %v475 = vsel %vm474, %v440, %v473
        %vm476 = vcmask 1045509
        %v477 = vsel %vm476, %v441, %v475
        %vm478 = vcmask 1046534
        %v479 = vsel %vm478, %v442, %v477
        %vm480 = vcmask 1047559
        %v481 = vsel %vm480, %v443, %v479
        %v482 = vsel %vm468, %v445, %v444
        %v483 = vsel %vm470, %v446, %v482
        %v484 = vsel %vm472, %v447, %v483
        %v485 = vsel %vm474, %v448, %v484
        %v486 = vsel %vm476, %v449, %v485
        %v487 = vsel %vm478, %v450, %v486
        %v488 = vsel %vm480, %v451, %v487
        %v489 = vsel %vm468, %v453, %v452
        %v490 = vsel %vm470, %v454, %v489
        %v491 = vsel %vm472, %v455, %v490
        %v492 = vsel %vm474, %v456, %v491
        %v493 = vsel %vm476, %v457, %v492
        %v494 = vsel %vm478, %v458, %v493
        %v495 = vsel %vm480, %v459, %v494
        %v496 = vsel %vm468, %v461, %v460
        %v497 = vsel %vm470, %v462, %v496
        %v498 = vsel %vm472, %v463, %v497
        %v499 = vsel %vm474, %v464, %v498
        %v500 = vsel %vm476, %v465, %v499
        %v501 = vsel %vm478, %v466, %v500
        %v502 = vsel %vm480, %v467, %v501
        %vm507 = vcmask 64512
        %v508 = vsel %vm507, %v481, 0.0
        %509 = vadd.xlane.f32.xlu0 %v508
        %v510 = vpop.xlane.xlu0 %509
        %v511 = vsel %vm507, %v488, 0.0
        %512 = vadd.xlane.f32.xlu0 %v511
        %v513 = vpop.xlane.xlu0 %512
        %v514 = vsel %vm507, %v495, 0.0
        %515 = vadd.xlane.f32.xlu0 %v514
        %v516 = vpop.xlane.xlu0 %515
        %v517 = vsel %vm507, %v502, 0.0
        %518 = vadd.xlane.f32.xlu0 %v517
        %v519 = vpop.xlane.xlu0 %518
        %v520 = vrcp.pop 8.0
        %v521 = vmul.f32 8.0, %v520
        %v522 = vsub.f32 1.0, %v521
        %v523 = vmul.f32 %v520, %v522
        %v524 = vadd.f32 %v520, %v523
        %vm525 = vweird.f32 %v520
        %v526 = vsel %vm525, %v520, %v524
        %v527 = vmul.f32 %v510, %v526
        %v528 = vmul.f32 %v513, %v526
        %v529 = vmul.f32 %v516, %v526
        %v530 = vmul.f32 %v519, %v526
        %531 = vmax.xlane.f32.xlu0 %v267
        %v532 = vpop.xlane.xlu0 %531
        %533 = vmax.xlane.f32.xlu0 %v268
        %v534 = vpop.xlane.xlu0 %533
        %535 = vmax.xlane.f32.xlu0 %v269
        %v536 = vpop.xlane.xlu0 %535
        %537 = vmax.xlane.f32.xlu0 %v270
        %v538 = vpop.xlane.xlu0 %537
        %539 = vmax.xlane.f32.xlu0 %v271
        %v540 = vpop.xlane.xlu0 %539
        %541 = vmax.xlane.f32.xlu0 %v272
        %v542 = vpop.xlane.xlu0 %541
        %543 = vmax.xlane.f32.xlu0 %v273
        %v544 = vpop.xlane.xlu0 %543
        %545 = vmax.xlane.f32.xlu0 %v274
        %v546 = vpop.xlane.xlu0 %545
        %547 = vmax.xlane.f32.xlu0 %v275
        %v548 = vpop.xlane.xlu0 %547
        %549 = vmax.xlane.f32.xlu0 %v276
        %v550 = vpop.xlane.xlu0 %549
        %551 = vmax.xlane.f32.xlu0 %v277
        %v552 = vpop.xlane.xlu0 %551
        %553 = vmax.xlane.f32.xlu0 %v278
        %v554 = vpop.xlane.xlu0 %553
        %555 = vmax.xlane.f32.xlu0 %v279
        %v556 = vpop.xlane.xlu0 %555
        %557 = vmax.xlane.f32.xlu0 %v280
        %v558 = vpop.xlane.xlu0 %557
        %559 = vmax.xlane.f32.xlu0 %v281
        %v560 = vpop.xlane.xlu0 %559
        %561 = vmax.xlane.f32.xlu0 %v282
        %v562 = vpop.xlane.xlu0 %561
        %563 = vmax.xlane.f32.xlu0 %v283
        %v564 = vpop.xlane.xlu0 %563
        %565 = vmax.xlane.f32.xlu0 %v284
        %v566 = vpop.xlane.xlu0 %565
        %567 = vmax.xlane.f32.xlu0 %v285
        %v568 = vpop.xlane.xlu0 %567
        %569 = vmax.xlane.f32.xlu0 %v286
        %v570 = vpop.xlane.xlu0 %569
        %571 = vmax.xlane.f32.xlu0 %v287
        %v572 = vpop.xlane.xlu0 %571
        %573 = vmax.xlane.f32.xlu0 %v288
        %v574 = vpop.xlane.xlu0 %573
        %575 = vmax.xlane.f32.xlu0 %v289
        %v576 = vpop.xlane.xlu0 %575
        %577 = vmax.xlane.f32.xlu0 %v290
        %v578 = vpop.xlane.xlu0 %577
        %579 = vmax.xlane.f32.xlu0 %v291
        %v580 = vpop.xlane.xlu0 %579
        %581 = vmax.xlane.f32.xlu0 %v292
        %v582 = vpop.xlane.xlu0 %581
        %583 = vmax.xlane.f32.xlu0 %v293
        %v584 = vpop.xlane.xlu0 %583
        %585 = vmax.xlane.f32.xlu0 %v294
        %v586 = vpop.xlane.xlu0 %585
        %587 = vmax.xlane.f32.xlu0 %v295
        %v588 = vpop.xlane.xlu0 %587
        %589 = vmax.xlane.f32.xlu0 %v296
        %v590 = vpop.xlane.xlu0 %589
        %591 = vmax.xlane.f32.xlu0 %v297
        %v592 = vpop.xlane.xlu0 %591
        %593 = vmax.xlane.f32.xlu0 %v298
        %v594 = vpop.xlane.xlu0 %593
        %v627 = vperm.slane %v532, %v435
        %v628 = vperm.slane %v534, %v435
        %v629 = vperm.slane %v536, %v435
        %v630 = vperm.slane %v538, %v435
        %v631 = vperm.slane %v540, %v435
        %v632 = vperm.slane %v542, %v435
        %v633 = vperm.slane %v544, %v435
        %v634 = vperm.slane %v546, %v435
        %v635 = vperm.slane %v548, %v435
        %v636 = vperm.slane %v550, %v435
        %v637 = vperm.slane %v552, %v435
        %v638 = vperm.slane %v554, %v435
        %v639 = vperm.slane %v556, %v435
        %v640 = vperm.slane %v558, %v435
        %v641 = vperm.slane %v560, %v435
        %v642 = vperm.slane %v562, %v435
        %v643 = vperm.slane %v564, %v435
        %v644 = vperm.slane %v566, %v435
        %v645 = vperm.slane %v568, %v435
        %v646 = vperm.slane %v570, %v435
        %v647 = vperm.slane %v572, %v435
        %v648 = vperm.slane %v574, %v435
        %v649 = vperm.slane %v576, %v435
        %v650 = vperm.slane %v578, %v435
        %v651 = vperm.slane %v580, %v435
        %v652 = vperm.slane %v582, %v435
        %v653 = vperm.slane %v584, %v435
        %v654 = vperm.slane %v586, %v435
        %v655 = vperm.slane %v588, %v435
        %v656 = vperm.slane %v590, %v435
        %v657 = vperm.slane %v592, %v435
        %v658 = vperm.slane %v594, %v435
        %v659 = vsel %vm468, %v628, %v627
        %v660 = vsel %vm470, %v629, %v659
        %v661 = vsel %vm472, %v630, %v660
        %v662 = vsel %vm474, %v631, %v661
        %v663 = vsel %vm476, %v632, %v662
        %v664 = vsel %vm478, %v633, %v663
        %v665 = vsel %vm480, %v634, %v664
        %v666 = vsel %vm468, %v636, %v635
        %v667 = vsel %vm470, %v637, %v666
        %v668 = vsel %vm472, %v638, %v667
        %v669 = vsel %vm474, %v639, %v668
        %v670 = vsel %vm476, %v640, %v669
        %v671 = vsel %vm478, %v641, %v670
        %v672 = vsel %vm480, %v642, %v671
        %v673 = vsel %vm468, %v644, %v643
        %v674 = vsel %vm470, %v645, %v673
        %v675 = vsel %vm472, %v646, %v674
        %v676 = vsel %vm474, %v647, %v675
        %v677 = vsel %vm476, %v648, %v676
        %v678 = vsel %vm478, %v649, %v677
        %v679 = vsel %vm480, %v650, %v678
        %v680 = vsel %vm468, %v652, %v651
        %v681 = vsel %vm470, %v653, %v680
        %v682 = vsel %vm472, %v654, %v681
        %v683 = vsel %vm474, %v655, %v682
        %v684 = vsel %vm476, %v656, %v683
        %v685 = vsel %vm478, %v657, %v684
        %v686 = vsel %vm480, %v658, %v685
        %v691 = vsel %vm507, %v665, -inf
        %692 = vmax.xlane.f32.xlu0 %v691
        %v693 = vpop.xlane.xlu0 %692
        %v694 = vsel %vm507, %v672, -inf
        %695 = vmax.xlane.f32.xlu0 %v694
        %v696 = vpop.xlane.xlu0 %695
        %v697 = vsel %vm507, %v679, -inf
        %698 = vmax.xlane.f32.xlu0 %v697
        %v699 = vpop.xlane.xlu0 %698
        %v700 = vsel %vm507, %v686, -inf
        %701 = vmax.xlane.f32.xlu0 %v700
        %v702 = vpop.xlane.xlu0 %701
        %vm703 = vcmask 7168
        %v704 = vsel %vm703, %v527, %v693
        %v705 = vsel %vm703, %v528, %v696
        %v706 = vsel %vm703, %v529, %v699
        %v707 = vsel %vm703, %v530, %v702
        %v708 = vld [vmem:[%s1] sm:$0x3]
        %vm709 = vcmask 261120
        %v711 = vsel %vm709, %v708, 0
        %713 = vmatpush.msra.mxu0 0.0
        %714 = vmatpush.msra.mxu0 0.0
        %715 = vmatpush.msra.mxu0 0.0
        %716 = vmatpush.msra.mxu0 0.0
        %717 = vmatpush.msra.mxu0 0.0
        %718 = vmatpush.msra.mxu0 0.0
        %719 = vmatpush.msra.mxu0 0.0
        %720 = vmatpush.msra.mxu0 0.0
        %721 = vmatpush.msra.mxu0 0.0
        %722 = vmatpush.msra.mxu0 0.0
        %723 = vmatpush.msra.mxu0 0.0
        %724 = vmatpush.msra.mxu0 0.0
        %725 = vmatpush.msra.mxu0 %v707
        %726 = vmatpush.msra.mxu0 %v706
        %727 = vmatpush.msra.mxu0 %v705
        %728 = vmatpush.msra.mxu0 %v704
        %729 = vmatmul.f32.gmra.mxu0 %v711
        %v730 = vpop.f32.mrf.mxu0
        %v731 = vadd.f32 0.0, %v730
        %732 = vdwg.mxu0
        %v733 = vmax.f32 %v731, 0.0
        %v734 = vld [vmem:[%s2] sm:$0xff]
        %v735 = vld [vmem:[%s2 + $0x8] sm:$0xff]
        %v736 = vld [vmem:[%s2 + $0x10] sm:$0xff]
        %v737 = vld [vmem:[%s2 + $0x18] sm:$0xff]
        %vm738 = vcmask 15360
        %v740 = vsel %vm738, %v734, 0
        %v743 = vsel %vm738, %v735, 0
        %v746 = vsel %vm738, %v736, 0
        %v749 = vsel %vm738, %v737, 0
        %vm751 = vcmask 1041408
        %v753 = vsel %vm751, %v733, 0
        %755 = vmatpush.msra.mxu0 0.0
        %756 = vmatpush.msra.mxu0 0.0
        %757 = vmatpush.msra.mxu0 0.0
        %758 = vmatpush.msra.mxu0 0.0
        %759 = vmatpush.msra.mxu0 0.0
        %760 = vmatpush.msra.mxu0 0.0
        %761 = vmatpush.msra.mxu0 0.0
        %762 = vmatpush.msra.mxu0 0.0
        %763 = vmatpush.msra.mxu0 0.0
        %764 = vmatpush.msra.mxu0 0.0
        %765 = vmatpush.msra.mxu0 0.0
        %766 = vmatpush.msra.mxu0 0.0
        %767 = vmatpush.msra.mxu0 0.0
        %768 = vmatpush.msra.mxu0 0.0
        %769 = vmatpush.msra.mxu0 0.0
        %770 = vmatpush.msra.mxu0 %v753
        %771 = vmatmul.f32.gmra.mxu0 %v740
        %v772 = vpop.f32.mrf.mxu0
        %v773 = vadd.f32 0.0, %v772
        %774 = vmatmul.f32.gmra.mxu0 %v743
        %v775 = vpop.f32.mrf.mxu0
        %v776 = vadd.f32 0.0, %v775
        %777 = vmatmul.f32.gmra.mxu0 %v746
        %v778 = vpop.f32.mrf.mxu0
        %v779 = vadd.f32 0.0, %v778
        %780 = vmatmul.f32.gmra.mxu0 %v749
        %v781 = vpop.f32.mrf.mxu0
        %v782 = vadd.f32 0.0, %v781
        %783 = vdwg.mxu0
        %v784 = vsel %vm738, %v773, 0.0
        %785 = vadd.xlane.f32.xlu0 %v784
        %v786 = vpop.xlane.xlu0 %785
        %v787 = vsel %vm738, %v776, 0.0
        %788 = vadd.xlane.f32.xlu0 %v787
        %v789 = vpop.xlane.xlu0 %788
        %v790 = vsel %vm738, %v779, 0.0
        %791 = vadd.xlane.f32.xlu0 %v790
        %v792 = vpop.xlane.xlu0 %791
        %v793 = vsel %vm738, %v782, 0.0
        %794 = vadd.xlane.f32.xlu0 %v793
        %v795 = vpop.xlane.xlu0 %794
        %v796 = vxor.u32 %v786, 2147483648
        %v797 = vxor.u32 %v789, 2147483648
        %v798 = vxor.u32 %v792, 2147483648
        %v799 = vxor.u32 %v795, 2147483648
        %v800 = vmul.f32 %v796, 1.442695
        %v801 = vpow.pop %v800
        %v802 = vmul.f32 %v797, 1.442695
        %v803 = vpow.pop %v802
        %v804 = vmul.f32 %v798, 1.442695
        %v805 = vpow.pop %v804
        %v806 = vmul.f32 %v799, 1.442695
        %v807 = vpow.pop %v806
        %v808 = vadd.f32 %v801, 1.0
        %v809 = vadd.f32 %v803, 1.0
        %v810 = vadd.f32 %v805, 1.0
        %v811 = vadd.f32 %v807, 1.0
        %v812 = vrcp.pop %v808
        %v813 = vmul.f32 %v808, %v812
        %v814 = vsub.f32 1.0, %v813
        %v815 = vmul.f32 %v812, %v814
        %v816 = vadd.f32 %v812, %v815
        %vm817 = vweird.f32 %v808
        %vm818 = vweird.f32 %v812
        %vm819 = vmor %vm817, %vm818
        %v820 = vsel %vm819, %v812, %v816
        %v821 = vand.u32 2147483647, %v808
        %vm822 = vcmp.eq.f32.partialorder %v821, 8.507059e+37
        %v823 = vand.u32 %v808, 2147483648
        %v824 = vor.u32 1.1754944e-38, %v823
        %v825 = vsel %vm822, %v824, %v820
        %v826 = vmul.f32 1.0, %v825
        %v827 = vrcp.pop %v809
        %v828 = vmul.f32 %v809, %v827
        %v829 = vsub.f32 1.0, %v828
        %v830 = vmul.f32 %v827, %v829
        %v831 = vadd.f32 %v827, %v830
        %vm832 = vweird.f32 %v809
        %vm833 = vweird.f32 %v827
        %vm834 = vmor %vm832, %vm833
        %v835 = vsel %vm834, %v827, %v831
        %v836 = vand.u32 2147483647, %v809
        %vm837 = vcmp.eq.f32.partialorder %v836, 8.507059e+37
        %v838 = vand.u32 %v809, 2147483648
        %v839 = vor.u32 1.1754944e-38, %v838
        %v840 = vsel %vm837, %v839, %v835
        %v841 = vmul.f32 1.0, %v840
        %v842 = vrcp.pop %v810
        %v843 = vmul.f32 %v810, %v842
        %v844 = vsub.f32 1.0, %v843
        %v845 = vmul.f32 %v842, %v844
        %v846 = vadd.f32 %v842, %v845
        %vm847 = vweird.f32 %v810
        %vm848 = vweird.f32 %v842
        %vm849 = vmor %vm847, %vm848
        %v850 = vsel %vm849, %v842, %v846
        %v851 = vand.u32 2147483647, %v810
        %vm852 = vcmp.eq.f32.partialorder %v851, 8.507059e+37
        %v853 = vand.u32 %v810, 2147483648
        %v854 = vor.u32 1.1754944e-38, %v853
        %v855 = vsel %vm852, %v854, %v850
        %v856 = vmul.f32 1.0, %v855
        %v857 = vrcp.pop %v811
        %v858 = vmul.f32 %v811, %v857
        %v859 = vsub.f32 1.0, %v858
        %v860 = vmul.f32 %v857, %v859
        %v861 = vadd.f32 %v857, %v860
        %vm862 = vweird.f32 %v811
        %vm863 = vweird.f32 %v857
        %vm864 = vmor %vm862, %vm863
        %v865 = vsel %vm864, %v857, %v861
        %v866 = vand.u32 2147483647, %v811
        %vm867 = vcmp.eq.f32.partialorder %v866, 8.507059e+37
        %v868 = vand.u32 %v811, 2147483648
        %v869 = vor.u32 1.1754944e-38, %v868
        %v870 = vsel %vm867, %v869, %v865
        %v871 = vmul.f32 1.0, %v870
        %v876 = vperm.slane %v826, 0
        %v877 = vperm.slane %v826, 1
        %v878 = vperm.slane %v826, 2
        %v879 = vperm.slane %v826, 3
        %v880 = vperm.slane %v826, 4
        %v881 = vperm.slane %v826, 5
        %v882 = vperm.slane %v826, 6
        %v883 = vperm.slane %v826, 7
        %v884 = vperm.slane %v841, 0
        %v885 = vperm.slane %v841, 1
        %v886 = vperm.slane %v841, 2
        %v887 = vperm.slane %v841, 3
        %v888 = vperm.slane %v841, 4
        %v889 = vperm.slane %v841, 5
        %v890 = vperm.slane %v841, 6
        %v891 = vperm.slane %v841, 7
        %v892 = vperm.slane %v856, 0
        %v893 = vperm.slane %v856, 1
        %v894 = vperm.slane %v856, 2
        %v895 = vperm.slane %v856, 3
        %v896 = vperm.slane %v856, 4
        %v897 = vperm.slane %v856, 5
        %v898 = vperm.slane %v856, 6
        %v899 = vperm.slane %v856, 7
        %v900 = vperm.slane %v871, 0
        %v901 = vperm.slane %v871, 1
        %v902 = vperm.slane %v871, 2
        %v903 = vperm.slane %v871, 3
        %v904 = vperm.slane %v871, 4
        %v905 = vperm.slane %v871, 5
        %v906 = vperm.slane %v871, 6
        %v907 = vperm.slane %v871, 7
        %v940 = vmul.f32 %v267, %v876
        %v941 = vmul.f32 %v268, %v877
        %v942 = vmul.f32 %v269, %v878
        %v943 = vmul.f32 %v270, %v879
        %v944 = vmul.f32 %v271, %v880
        %v945 = vmul.f32 %v272, %v881
        %v946 = vmul.f32 %v273, %v882
        %v947 = vmul.f32 %v274, %v883
        %v948 = vmul.f32 %v275, %v884
        %v949 = vmul.f32 %v276, %v885
        %v950 = vmul.f32 %v277, %v886
        %v951 = vmul.f32 %v278, %v887
        %v952 = vmul.f32 %v279, %v888
        %v953 = vmul.f32 %v280, %v889
        %v954 = vmul.f32 %v281, %v890
        %v955 = vmul.f32 %v282, %v891
        %v956 = vmul.f32 %v283, %v892
        %v957 = vmul.f32 %v284, %v893
        %v958 = vmul.f32 %v285, %v894
        %v959 = vmul.f32 %v286, %v895
        %v960 = vmul.f32 %v287, %v896
        %v961 = vmul.f32 %v288, %v897
        %v962 = vmul.f32 %v289, %v898
        %v963 = vmul.f32 %v290, %v899
        %v964 = vmul.f32 %v291, %v900
        %v965 = vmul.f32 %v292, %v901
        %v966 = vmul.f32 %v293, %v902
        %v967 = vmul.f32 %v294, %v903
        %v968 = vmul.f32 %v295, %v904
        %v969 = vmul.f32 %v296, %v905
        %v970 = vmul.f32 %v297, %v906
        %v971 = vmul.f32 %v298, %v907
        %v972 = vadd.f32 %v940, %v941
        %v973 = vadd.f32 %v972, %v942
        %v974 = vadd.f32 %v973, %v943
        %v975 = vadd.f32 %v974, %v944
        %v976 = vadd.f32 %v975, %v945
        %v977 = vadd.f32 %v976, %v946
        %v978 = vadd.f32 %v977, %v947
        %v979 = vadd.f32 %v978, %v948
        %v980 = vadd.f32 %v979, %v949
        %v981 = vadd.f32 %v980, %v950
        %v982 = vadd.f32 %v981, %v951
        %v983 = vadd.f32 %v982, %v952
        %v984 = vadd.f32 %v983, %v953
        %v985 = vadd.f32 %v984, %v954
        %v986 = vadd.f32 %v985, %v955
        %v987 = vadd.f32 %v986, %v956
        %v988 = vadd.f32 %v987, %v957
        %v989 = vadd.f32 %v988, %v958
        %v990 = vadd.f32 %v989, %v959
        %v991 = vadd.f32 %v990, %v960
        %v992 = vadd.f32 %v991, %v961
        %v993 = vadd.f32 %v992, %v962
        %v994 = vadd.f32 %v993, %v963
        %v995 = vadd.f32 %v994, %v964
        %v996 = vadd.f32 %v995, %v965
        %v997 = vadd.f32 %v996, %v966
        %v998 = vadd.f32 %v997, %v967
        %v999 = vadd.f32 %v998, %v968
        %v1000 = vadd.f32 %v999, %v969
        %v1001 = vadd.f32 %v1000, %v970
        %v1002 = vadd.f32 %v1001, %v971
        %v1003 = vrcp.pop 32.0
        %v1004 = vmul.f32 32.0, %v1003
        %v1005 = vsub.f32 1.0, %v1004
        %v1006 = vmul.f32 %v1003, %v1005
        %v1007 = vadd.f32 %v1003, %v1006
        %vm1008 = vweird.f32 %v1003
        %v1009 = vsel %vm1008, %v1003, %v1007
        %v1010 = vmul.f32 %v1002, %v1009
        %v1011 = vmax.f32 %v940, %v944
        %v1012 = vmax.f32 %v941, %v945
        %v1013 = vmax.f32 %v942, %v946
        %v1014 = vmax.f32 %v943, %v947
        %v1015 = vmax.f32 %v1011, %v948
        %v1016 = vmax.f32 %v1012, %v949
        %v1017 = vmax.f32 %v1013, %v950
        %v1018 = vmax.f32 %v1014, %v951
        %v1019 = vmax.f32 %v1015, %v952
        %v1020 = vmax.f32 %v1016, %v953
        %v1021 = vmax.f32 %v1017, %v954
        %v1022 = vmax.f32 %v1018, %v955
        %v1023 = vmax.f32 %v1019, %v956
        %v1024 = vmax.f32 %v1020, %v957
        %v1025 = vmax.f32 %v1021, %v958
        %v1026 = vmax.f32 %v1022, %v959
        %v1027 = vmax.f32 %v1023, %v960
        %v1028 = vmax.f32 %v1024, %v961
        %v1029 = vmax.f32 %v1025, %v962
        %v1030 = vmax.f32 %v1026, %v963
        %v1031 = vmax.f32 %v1027, %v964
        %v1032 = vmax.f32 %v1028, %v965
        %v1033 = vmax.f32 %v1029, %v966
        %v1034 = vmax.f32 %v1030, %v967
        %v1035 = vmax.f32 %v1031, %v968
        %v1036 = vmax.f32 %v1032, %v969
        %v1037 = vmax.f32 %v1033, %v970
        %v1038 = vmax.f32 %v1034, %v971
        %v1039 = vmax.f32 %v1035, %v1036
        %v1040 = vmax.f32 %v1037, %v1038
        %v1041 = vmax.f32 %v1039, %v1040
        %1042 = vst [vmem:[#allocation2] sm:$0x7] 0.0
        %1043 = vst [vmem:[#allocation2 + $0x8] sm:$0x7] 0.0
        %1044 = vst [vmem:[#allocation2 + $0x10] sm:$0x38] 0.0
        %1045 = vst [vmem:[#allocation2 + $0x18] sm:$0x38] 0.0
        %v1047 = vrot.slane %v1010, 5
        %1049 = vst [vmem:[#allocation2] sm:$0xf8] %v1047
        %1050 = vst [vmem:[#allocation2 + $0x10] sm:$0x7] %v1047
        %v1052 = vrot.slane %v1041, 5
        %1054 = vst [vmem:[#allocation2 + $0x8] sm:$0xf8] %v1052
        %1055 = vst [vmem:[#allocation2 + $0x18] sm:$0x7] %v1052
        %v1056 = vld [vmem:[#allocation2] sm:$0xff]
        %v1057 = vld [vmem:[#allocation2 + $0x8] sm:$0xff]
        %v1058 = vpack.c.bf16 %v1056, %v1056
        %v1059 = vpack.c.bf16 %v1057, %v1057
        %v1060 = vld [vmem:[#allocation6] sm:$0xf]
        %v1061 = vld [vmem:[#allocation6 + $0x4] sm:$0xf]
        %v1062 = vld [vmem:[#allocation6 + $0x8] sm:$0xf]
        %v1063 = vld [vmem:[#allocation6 + $0xc] sm:$0xf]
        %v1064 = vld [vmem:[#allocation6 + $0x10] sm:$0xf]
        %v1065 = vld [vmem:[#allocation6 + $0x14] sm:$0xf]
        %v1066 = vld [vmem:[#allocation6 + $0x18] sm:$0xf]
        %v1067 = vld [vmem:[#allocation6 + $0x1c] sm:$0xf]
        %v1068 = vld [vmem:[#allocation6 + $0x20] sm:$0xf]
        %v1069 = vld [vmem:[#allocation6 + $0x24] sm:$0xf]
        %v1070 = vld [vmem:[#allocation6 + $0x28] sm:$0xf]
        %v1071 = vld [vmem:[#allocation6 + $0x2c] sm:$0xf]
        %v1072 = vld [vmem:[#allocation6 + $0x30] sm:$0xf]
        %v1073 = vld [vmem:[#allocation6 + $0x34] sm:$0xf]
        %v1074 = vld [vmem:[#allocation6 + $0x38] sm:$0xf]
        %v1075 = vld [vmem:[#allocation6 + $0x3c] sm:$0xf]
        %v1076 = vld [vmem:[#allocation6 + $0x40] sm:$0xf]
        %v1077 = vld [vmem:[#allocation6 + $0x44] sm:$0xf]
        %v1078 = vld [vmem:[#allocation6 + $0x48] sm:$0xf]
        %v1079 = vld [vmem:[#allocation6 + $0x4c] sm:$0xf]
        %v1080 = vld [vmem:[#allocation6 + $0x50] sm:$0xf]
        %v1081 = vld [vmem:[#allocation6 + $0x54] sm:$0xf]
        %v1082 = vld [vmem:[#allocation6 + $0x58] sm:$0xf]
        %v1083 = vld [vmem:[#allocation6 + $0x5c] sm:$0xf]
        %v1084 = vld [vmem:[#allocation6 + $0x60] sm:$0xf]
        %v1085 = vld [vmem:[#allocation6 + $0x64] sm:$0xf]
        %v1086 = vld [vmem:[#allocation6 + $0x68] sm:$0xf]
        %v1087 = vld [vmem:[#allocation6 + $0x6c] sm:$0xf]
        %v1088 = vld [vmem:[#allocation6 + $0x70] sm:$0xf]
        %v1089 = vld [vmem:[#allocation6 + $0x74] sm:$0xf]
        %v1090 = vld [vmem:[#allocation6 + $0x78] sm:$0xf]
        %v1091 = vld [vmem:[#allocation6 + $0x7c] sm:$0xf]
        %v1092 = vld [vmem:[#allocation2] sm:$0xfe]
        %v1093 = vld [vmem:[#allocation2 + $0x8] sm:$0xfe]
        %v1094 = vld [vmem:[#allocation2 + $0x10] sm:$0x1]
        %v1095 = vld [vmem:[#allocation2 + $0x18] sm:$0x1]
        %v1096 = vpack.c.bf16 %v1094, %v1092
        %v1097 = vpack.c.bf16 %v1095, %v1093
        %s1098 = scalar_lea.vmem [#allocation6], 128
        %v1099 = vld [vmem:[%s1098] sm:$0xf]
        %v1100 = vld [vmem:[%s1098 + $0x4] sm:$0xf]
        %v1101 = vld [vmem:[%s1098 + $0x8] sm:$0xf]
        %v1102 = vld [vmem:[%s1098 + $0xc] sm:$0xf]
        %v1103 = vld [vmem:[%s1098 + $0x10] sm:$0xf]
        %v1104 = vld [vmem:[%s1098 + $0x14] sm:$0xf]
        %v1105 = vld [vmem:[%s1098 + $0x18] sm:$0xf]
        %v1106 = vld [vmem:[%s1098 + $0x1c] sm:$0xf]
        %v1107 = vld [vmem:[%s1098 + $0x20] sm:$0xf]
        %v1108 = vld [vmem:[%s1098 + $0x24] sm:$0xf]
        %v1109 = vld [vmem:[%s1098 + $0x28] sm:$0xf]
        %v1110 = vld [vmem:[%s1098 + $0x2c] sm:$0xf]
        %v1111 = vld [vmem:[%s1098 + $0x30] sm:$0xf]
        %v1112 = vld [vmem:[%s1098 + $0x34] sm:$0xf]
        %v1113 = vld [vmem:[%s1098 + $0x38] sm:$0xf]
        %v1114 = vld [vmem:[%s1098 + $0x3c] sm:$0xf]
        %v1115 = vld [vmem:[%s1098 + $0x40] sm:$0xf]
        %v1116 = vld [vmem:[%s1098 + $0x44] sm:$0xf]
        %v1117 = vld [vmem:[%s1098 + $0x48] sm:$0xf]
        %v1118 = vld [vmem:[%s1098 + $0x4c] sm:$0xf]
        %v1119 = vld [vmem:[%s1098 + $0x50] sm:$0xf]
        %v1120 = vld [vmem:[%s1098 + $0x54] sm:$0xf]
        %v1121 = vld [vmem:[%s1098 + $0x58] sm:$0xf]
        %v1122 = vld [vmem:[%s1098 + $0x5c] sm:$0xf]
        %v1123 = vld [vmem:[%s1098 + $0x60] sm:$0xf]
        %v1124 = vld [vmem:[%s1098 + $0x64] sm:$0xf]
        %v1125 = vld [vmem:[%s1098 + $0x68] sm:$0xf]
        %v1126 = vld [vmem:[%s1098 + $0x6c] sm:$0xf]
        %v1127 = vld [vmem:[%s1098 + $0x70] sm:$0xf]
        %v1128 = vld [vmem:[%s1098 + $0x74] sm:$0xf]
        %v1129 = vld [vmem:[%s1098 + $0x78] sm:$0xf]
        %v1130 = vld [vmem:[%s1098 + $0x7c] sm:$0xf]
        %v1132 = vshrl.u32 %v1096, 16
        %v1134 = vshll.u32 %v1096, 16
        %v1136 = vrot.slane %v1134, 1
        %v1137 = vor.u32 %v1132, %v1136
        %v1139 = vshrl.u32 %v1097, 16
        %v1141 = vshll.u32 %v1097, 16
        %v1143 = vrot.slane %v1141, 1
        %v1144 = vor.u32 %v1139, %v1143
        %v1179 = vunpack.c.l.b16 %v1099
        %v1180 = vunpack.c.l.b16 %v1100
        %v1181 = vunpack.c.l.b16 %v1101
        %v1182 = vunpack.c.l.b16 %v1102
        %v1183 = vunpack.c.l.b16 %v1103
        %v1184 = vunpack.c.l.b16 %v1104
        %v1185 = vunpack.c.l.b16 %v1105
        %v1186 = vunpack.c.l.b16 %v1106
        %v1187 = vunpack.c.l.b16 %v1107
        %v1188 = vunpack.c.l.b16 %v1108
        %v1189 = vunpack.c.l.b16 %v1109
        %v1190 = vunpack.c.l.b16 %v1110
        %v1191 = vunpack.c.l.b16 %v1111
        %v1192 = vunpack.c.l.b16 %v1112
        %v1193 = vunpack.c.l.b16 %v1113
        %v1194 = vunpack.c.l.b16 %v1114
        %v1195 = vunpack.c.l.b16 %v1115
        %v1196 = vunpack.c.l.b16 %v1116
        %v1197 = vunpack.c.l.b16 %v1117
        %v1198 = vunpack.c.l.b16 %v1118
        %v1199 = vunpack.c.l.b16 %v1119
        %v1200 = vunpack.c.l.b16 %v1120
        %v1201 = vunpack.c.l.b16 %v1121
        %v1202 = vunpack.c.l.b16 %v1122
        %v1203 = vunpack.c.l.b16 %v1123
        %v1204 = vunpack.c.l.b16 %v1124
        %v1205 = vunpack.c.l.b16 %v1125
        %v1206 = vunpack.c.l.b16 %v1126
        %v1207 = vunpack.c.l.b16 %v1127
        %v1208 = vunpack.c.l.b16 %v1128
        %v1209 = vunpack.c.l.b16 %v1129
        %v1210 = vunpack.c.l.b16 %v1130
        %v1211 = vpack.c.b16 %v1180, %v1179
        %v1212 = vpack.c.b16 %v1182, %v1181
        %v1213 = vpack.c.b16 %v1184, %v1183
        %v1214 = vpack.c.b16 %v1186, %v1185
        %v1215 = vpack.c.b16 %v1188, %v1187
        %v1216 = vpack.c.b16 %v1190, %v1189
        %v1217 = vpack.c.b16 %v1192, %v1191
        %v1218 = vpack.c.b16 %v1194, %v1193
        %v1219 = vpack.c.b16 %v1196, %v1195
        %v1220 = vpack.c.b16 %v1198, %v1197
        %v1221 = vpack.c.b16 %v1200, %v1199
        %v1222 = vpack.c.b16 %v1202, %v1201
        %v1223 = vpack.c.b16 %v1204, %v1203
        %v1224 = vpack.c.b16 %v1206, %v1205
        %v1225 = vpack.c.b16 %v1208, %v1207
        %v1226 = vpack.c.b16 %v1210, %v1209
        %1243 = vmatpush.bf16.msra.mxu0 %v1218
        %1244 = vmatpush.bf16.msra.mxu0 %v1217
        %1245 = vmatpush.bf16.msra.mxu0 %v1216
        %1246 = vmatpush.bf16.msra.mxu0 %v1215
        %1247 = vmatpush.bf16.msra.mxu0 %v1214
        %1248 = vmatpush.bf16.msra.mxu0 %v1213
        %1249 = vmatpush.bf16.msra.mxu0 %v1212
        %1250 = vmatpush.bf16.msra.mxu0 %v1211
        %1251 = vmatmul.bf16.gmra.mxu0 %v1137
        %v1252 = vpop.f32.mrf.mxu0
        %v1253 = vadd.f32 0.0, %v1252
        %v1254 = vpop.f32.mrf.mxu0
        %1255 = vdwg.mxu0
        %1256 = vmatpush.bf16.msra.mxu0 %v1226
        %1257 = vmatpush.bf16.msra.mxu0 %v1225
        %1258 = vmatpush.bf16.msra.mxu0 %v1224
        %1259 = vmatpush.bf16.msra.mxu0 %v1223
        %1260 = vmatpush.bf16.msra.mxu0 %v1222
        %1261 = vmatpush.bf16.msra.mxu0 %v1221
        %1262 = vmatpush.bf16.msra.mxu0 %v1220
        %1263 = vmatpush.bf16.msra.mxu0 %v1219
        %1264 = vmatmul.bf16.gmra.mxu0 %v1144
        %v1265 = vpop.f32.mrf.mxu0
        %v1266 = vadd.f32 %v1253, %v1265
        %v1267 = vpop.f32.mrf.mxu0
        %1268 = vdwg.mxu0
        %v1301 = vunpack.c.l.b16 %v1060
        %v1302 = vunpack.c.l.b16 %v1061
        %v1303 = vunpack.c.l.b16 %v1062
        %v1304 = vunpack.c.l.b16 %v1063
        %v1305 = vunpack.c.l.b16 %v1064
        %v1306 = vunpack.c.l.b16 %v1065
        %v1307 = vunpack.c.l.b16 %v1066
        %v1308 = vunpack.c.l.b16 %v1067
        %v1309 = vunpack.c.l.b16 %v1068
        %v1310 = vunpack.c.l.b16 %v1069
        %v1311 = vunpack.c.l.b16 %v1070
        %v1312 = vunpack.c.l.b16 %v1071
        %v1313 = vunpack.c.l.b16 %v1072
        %v1314 = vunpack.c.l.b16 %v1073
        %v1315 = vunpack.c.l.b16 %v1074
        %v1316 = vunpack.c.l.b16 %v1075
        %v1317 = vunpack.c.l.b16 %v1076
        %v1318 = vunpack.c.l.b16 %v1077
        %v1319 = vunpack.c.l.b16 %v1078
        %v1320 = vunpack.c.l.b16 %v1079
        %v1321 = vunpack.c.l.b16 %v1080
        %v1322 = vunpack.c.l.b16 %v1081
        %v1323 = vunpack.c.l.b16 %v1082
        %v1324 = vunpack.c.l.b16 %v1083
        %v1325 = vunpack.c.l.b16 %v1084
        %v1326 = vunpack.c.l.b16 %v1085
        %v1327 = vunpack.c.l.b16 %v1086
        %v1328 = vunpack.c.l.b16 %v1087
        %v1329 = vunpack.c.l.b16 %v1088
        %v1330 = vunpack.c.l.b16 %v1089
        %v1331 = vunpack.c.l.b16 %v1090
        %v1332 = vunpack.c.l.b16 %v1091
        %v1333 = vpack.c.b16 %v1302, %v1301
        %v1334 = vpack.c.b16 %v1304, %v1303
        %v1335 = vpack.c.b16 %v1306, %v1305
        %v1336 = vpack.c.b16 %v1308, %v1307
        %v1337 = vpack.c.b16 %v1310, %v1309
        %v1338 = vpack.c.b16 %v1312, %v1311
        %v1339 = vpack.c.b16 %v1314, %v1313
        %v1340 = vpack.c.b16 %v1316, %v1315
        %v1341 = vpack.c.b16 %v1318, %v1317
        %v1342 = vpack.c.b16 %v1320, %v1319
        %v1343 = vpack.c.b16 %v1322, %v1321
        %v1344 = vpack.c.b16 %v1324, %v1323
        %v1345 = vpack.c.b16 %v1326, %v1325
        %v1346 = vpack.c.b16 %v1328, %v1327
        %v1347 = vpack.c.b16 %v1330, %v1329
        %v1348 = vpack.c.b16 %v1332, %v1331
        %1365 = vmatpush.bf16.msra.mxu0 %v1340
        %1366 = vmatpush.bf16.msra.mxu0 %v1339
        %1367 = vmatpush.bf16.msra.mxu0 %v1338
        %1368 = vmatpush.bf16.msra.mxu0 %v1337
        %1369 = vmatpush.bf16.msra.mxu0 %v1336
        %1370 = vmatpush.bf16.msra.mxu0 %v1335
        %1371 = vmatpush.bf16.msra.mxu0 %v1334
        %1372 = vmatpush.bf16.msra.mxu0 %v1333
        %1373 = vmatmul.bf16.gmra.mxu0 %v1058
        %v1374 = vpop.f32.mrf.mxu0
        %v1375 = vadd.f32 %v1266, %v1374
        %v1376 = vpop.f32.mrf.mxu0
        %1377 = vdwg.mxu0
        %1378 = vmatpush.bf16.msra.mxu0 %v1348
        %1379 = vmatpush.bf16.msra.mxu0 %v1347
        %1380 = vmatpush.bf16.msra.mxu0 %v1346
        %1381 = vmatpush.bf16.msra.mxu0 %v1345
        %1382 = vmatpush.bf16.msra.mxu0 %v1344
        %1383 = vmatpush.bf16.msra.mxu0 %v1343
        %1384 = vmatpush.bf16.msra.mxu0 %v1342
        %1385 = vmatpush.bf16.msra.mxu0 %v1341
        %1386 = vmatmul.bf16.gmra.mxu0 %v1059
        %v1387 = vpop.f32.mrf.mxu0
        %v1388 = vadd.f32 %v1375, %v1387
        %v1389 = vpop.f32.mrf.mxu0
        %1390 = vdwg.mxu0
        %v1391 = vld [vmem:[#allocation2] sm:$0xfc]
        %v1392 = vld [vmem:[#allocation2 + $0x8] sm:$0xfc]
        %v1393 = vld [vmem:[#allocation2 + $0x10] sm:$0x3]
        %v1394 = vld [vmem:[#allocation2 + $0x18] sm:$0x3]
        %v1395 = vpack.c.bf16 %v1393, %v1391
        %v1396 = vpack.c.bf16 %v1394, %v1392
        %s1397 = scalar_lea.vmem [#allocation6], 256
        %v1398 = vld [vmem:[%s1397] sm:$0xf]
        %v1399 = vld [vmem:[%s1397 + $0x4] sm:$0xf]
        %v1400 = vld [vmem:[%s1397 + $0x8] sm:$0xf]
        %v1401 = vld [vmem:[%s1397 + $0xc] sm:$0xf]
        %v1402 = vld [vmem:[%s1397 + $0x10] sm:$0xf]
        %v1403 = vld [vmem:[%s1397 + $0x14] sm:$0xf]
        %v1404 = vld [vmem:[%s1397 + $0x18] sm:$0xf]
        %v1405 = vld [vmem:[%s1397 + $0x1c] sm:$0xf]
        %v1406 = vld [vmem:[%s1397 + $0x20] sm:$0xf]
        %v1407 = vld [vmem:[%s1397 + $0x24] sm:$0xf]
        %v1408 = vld [vmem:[%s1397 + $0x28] sm:$0xf]
        %v1409 = vld [vmem:[%s1397 + $0x2c] sm:$0xf]
        %v1410 = vld [vmem:[%s1397 + $0x30] sm:$0xf]
        %v1411 = vld [vmem:[%s1397 + $0x34] sm:$0xf]
        %v1412 = vld [vmem:[%s1397 + $0x38] sm:$0xf]
        %v1413 = vld [vmem:[%s1397 + $0x3c] sm:$0xf]
        %v1414 = vld [vmem:[%s1397 + $0x40] sm:$0xf]
        %v1415 = vld [vmem:[%s1397 + $0x44] sm:$0xf]
        %v1416 = vld [vmem:[%s1397 + $0x48] sm:$0xf]
        %v1417 = vld [vmem:[%s1397 + $0x4c] sm:$0xf]
        %v1418 = vld [vmem:[%s1397 + $0x50] sm:$0xf]
        %v1419 = vld [vmem:[%s1397 + $0x54] sm:$0xf]
        %v1420 = vld [vmem:[%s1397 + $0x58] sm:$0xf]
        %v1421 = vld [vmem:[%s1397 + $0x5c] sm:$0xf]
        %v1422 = vld [vmem:[%s1397 + $0x60] sm:$0xf]
        %v1423 = vld [vmem:[%s1397 + $0x64] sm:$0xf]
        %v1424 = vld [vmem:[%s1397 + $0x68] sm:$0xf]
        %v1425 = vld [vmem:[%s1397 + $0x6c] sm:$0xf]
        %v1426 = vld [vmem:[%s1397 + $0x70] sm:$0xf]
        %v1427 = vld [vmem:[%s1397 + $0x74] sm:$0xf]
        %v1428 = vld [vmem:[%s1397 + $0x78] sm:$0xf]
        %v1429 = vld [vmem:[%s1397 + $0x7c] sm:$0xf]
        %v1432 = vrot.slane %v1395, 1
        %v1433 = vrot.slane %v1396, 1
        %v1468 = vunpack.c.l.b16 %v1398
        %v1469 = vunpack.c.l.b16 %v1399
        %v1470 = vunpack.c.l.b16 %v1400
        %v1471 = vunpack.c.l.b16 %v1401
        %v1472 = vunpack.c.l.b16 %v1402
        %v1473 = vunpack.c.l.b16 %v1403
        %v1474 = vunpack.c.l.b16 %v1404
        %v1475 = vunpack.c.l.b16 %v1405
        %v1476 = vunpack.c.l.b16 %v1406
        %v1477 = vunpack.c.l.b16 %v1407
        %v1478 = vunpack.c.l.b16 %v1408
        %v1479 = vunpack.c.l.b16 %v1409
        %v1480 = vunpack.c.l.b16 %v1410
        %v1481 = vunpack.c.l.b16 %v1411
        %v1482 = vunpack.c.l.b16 %v1412
        %v1483 = vunpack.c.l.b16 %v1413
        %v1484 = vunpack.c.l.b16 %v1414
        %v1485 = vunpack.c.l.b16 %v1415
        %v1486 = vunpack.c.l.b16 %v1416
        %v1487 = vunpack.c.l.b16 %v1417
        %v1488 = vunpack.c.l.b16 %v1418
        %v1489 = vunpack.c.l.b16 %v1419
        %v1490 = vunpack.c.l.b16 %v1420
        %v1491 = vunpack.c.l.b16 %v1421
        %v1492 = vunpack.c.l.b16 %v1422
        %v1493 = vunpack.c.l.b16 %v1423
        %v1494 = vunpack.c.l.b16 %v1424
        %v1495 = vunpack.c.l.b16 %v1425
        %v1496 = vunpack.c.l.b16 %v1426
        %v1497 = vunpack.c.l.b16 %v1427
        %v1498 = vunpack.c.l.b16 %v1428
        %v1499 = vunpack.c.l.b16 %v1429
        %v1500 = vpack.c.b16 %v1469, %v1468
        %v1501 = vpack.c.b16 %v1471, %v1470
        %v1502 = vpack.c.b16 %v1473, %v1472
        %v1503 = vpack.c.b16 %v1475, %v1474
        %v1504 = vpack.c.b16 %v1477, %v1476
        %v1505 = vpack.c.b16 %v1479, %v1478
        %v1506 = vpack.c.b16 %v1481, %v1480
        %v1507 = vpack.c.b16 %v1483, %v1482
        %v1508 = vpack.c.b16 %v1485, %v1484
        %v1509 = vpack.c.b16 %v1487, %v1486
        %v1510 = vpack.c.b16 %v1489, %v1488
        %v1511 = vpack.c.b16 %v1491, %v1490
        %v1512 = vpack.c.b16 %v1493, %v1492
        %v1513 = vpack.c.b16 %v1495, %v1494
        %v1514 = vpack.c.b16 %v1497, %v1496
        %v1515 = vpack.c.b16 %v1499, %v1498
        %1532 = vmatpush.bf16.msra.mxu0 %v1507
        %1533 = vmatpush.bf16.msra.mxu0 %v1506
        %1534 = vmatpush.bf16.msra.mxu0 %v1505
        %1535 = vmatpush.bf16.msra.mxu0 %v1504
        %1536 = vmatpush.bf16.msra.mxu0 %v1503
        %1537 = vmatpush.bf16.msra.mxu0 %v1502
        %1538 = vmatpush.bf16.msra.mxu0 %v1501
        %1539 = vmatpush.bf16.msra.mxu0 %v1500
        %1540 = vmatmul.bf16.gmra.mxu0 %v1432
        %v1541 = vpop.f32.mrf.mxu0
        %v1542 = vadd.f32 0.0, %v1541
        %v1543 = vpop.f32.mrf.mxu0
        %1544 = vdwg.mxu0
        %1545 = vmatpush.bf16.msra.mxu0 %v1515
        %1546 = vmatpush.bf16.msra.mxu0 %v1514
        %1547 = vmatpush.bf16.msra.mxu0 %v1513
        %1548 = vmatpush.bf16.msra.mxu0 %v1512
        %1549 = vmatpush.bf16.msra.mxu0 %v1511
        %1550 = vmatpush.bf16.msra.mxu0 %v1510
        %1551 = vmatpush.bf16.msra.mxu0 %v1509
        %1552 = vmatpush.bf16.msra.mxu0 %v1508
        %1553 = vmatmul.bf16.gmra.mxu0 %v1433
        %v1554 = vpop.f32.mrf.mxu0
        %v1555 = vadd.f32 %v1542, %v1554
        %v1556 = vpop.f32.mrf.mxu0
        %1557 = vdwg.mxu0
        %v1558 = vadd.f32 %v1388, %v1555
        %v1559 = vld [vmem:[#allocation2] sm:$0xf8]
        %v1560 = vld [vmem:[#allocation2 + $0x8] sm:$0xf8]
        %v1561 = vld [vmem:[#allocation2 + $0x10] sm:$0x7]
        %v1562 = vld [vmem:[#allocation2 + $0x18] sm:$0x7]
        %v1563 = vpack.c.bf16 %v1561, %v1559
        %v1564 = vpack.c.bf16 %v1562, %v1560
        %s1565 = scalar_lea.vmem [#allocation6], 384
        %v1566 = vld [vmem:[%s1565] sm:$0xf]
        %v1567 = vld [vmem:[%s1565 + $0x4] sm:$0xf]
        %v1568 = vld [vmem:[%s1565 + $0x8] sm:$0xf]
        %v1569 = vld [vmem:[%s1565 + $0xc] sm:$0xf]
        %v1570 = vld [vmem:[%s1565 + $0x10] sm:$0xf]
        %v1571 = vld [vmem:[%s1565 + $0x14] sm:$0xf]
        %v1572 = vld [vmem:[%s1565 + $0x18] sm:$0xf]
        %v1573 = vld [vmem:[%s1565 + $0x1c] sm:$0xf]
        %v1574 = vld [vmem:[%s1565 + $0x20] sm:$0xf]
        %v1575 = vld [vmem:[%s1565 + $0x24] sm:$0xf]
        %v1576 = vld [vmem:[%s1565 + $0x28] sm:$0xf]
        %v1577 = vld [vmem:[%s1565 + $0x2c] sm:$0xf]
        %v1578 = vld [vmem:[%s1565 + $0x30] sm:$0xf]
        %v1579 = vld [vmem:[%s1565 + $0x34] sm:$0xf]
        %v1580 = vld [vmem:[%s1565 + $0x38] sm:$0xf]
        %v1581 = vld [vmem:[%s1565 + $0x3c] sm:$0xf]
        %v1582 = vld [vmem:[%s1565 + $0x40] sm:$0xf]
        %v1583 = vld [vmem:[%s1565 + $0x44] sm:$0xf]
        %v1584 = vld [vmem:[%s1565 + $0x48] sm:$0xf]
        %v1585 = vld [vmem:[%s1565 + $0x4c] sm:$0xf]
        %v1586 = vld [vmem:[%s1565 + $0x50] sm:$0xf]
        %v1587 = vld [vmem:[%s1565 + $0x54] sm:$0xf]
        %v1588 = vld [vmem:[%s1565 + $0x58] sm:$0xf]
        %v1589 = vld [vmem:[%s1565 + $0x5c] sm:$0xf]
        %v1590 = vld [vmem:[%s1565 + $0x60] sm:$0xf]
        %v1591 = vld [vmem:[%s1565 + $0x64] sm:$0xf]
        %v1592 = vld [vmem:[%s1565 + $0x68] sm:$0xf]
        %v1593 = vld [vmem:[%s1565 + $0x6c] sm:$0xf]
        %v1594 = vld [vmem:[%s1565 + $0x70] sm:$0xf]
        %v1595 = vld [vmem:[%s1565 + $0x74] sm:$0xf]
        %v1596 = vld [vmem:[%s1565 + $0x78] sm:$0xf]
        %v1597 = vld [vmem:[%s1565 + $0x7c] sm:$0xf]
        %v1599 = vshrl.u32 %v1563, 16
        %v1601 = vrot.slane %v1599, 1
        %v1602 = vshll.u32 %v1563, 16
        %v1604 = vrot.slane %v1602, 2
        %v1605 = vor.u32 %v1601, %v1604
        %v1607 = vshrl.u32 %v1564, 16
        %v1609 = vrot.slane %v1607, 1
        %v1610 = vshll.u32 %v1564, 16
        %v1612 = vrot.slane %v1610, 2
        %v1613 = vor.u32 %v1609, %v1612
        %v1648 = vunpack.c.l.b16 %v1566
        %v1649 = vunpack.c.l.b16 %v1567
        %v1650 = vunpack.c.l.b16 %v1568
        %v1651 = vunpack.c.l.b16 %v1569
        %v1652 = vunpack.c.l.b16 %v1570
        %v1653 = vunpack.c.l.b16 %v1571
        %v1654 = vunpack.c.l.b16 %v1572
        %v1655 = vunpack.c.l.b16 %v1573
        %v1656 = vunpack.c.l.b16 %v1574
        %v1657 = vunpack.c.l.b16 %v1575
        %v1658 = vunpack.c.l.b16 %v1576
        %v1659 = vunpack.c.l.b16 %v1577
        %v1660 = vunpack.c.l.b16 %v1578
        %v1661 = vunpack.c.l.b16 %v1579
        %v1662 = vunpack.c.l.b16 %v1580
        %v1663 = vunpack.c.l.b16 %v1581
        %v1664 = vunpack.c.l.b16 %v1582
        %v1665 = vunpack.c.l.b16 %v1583
        %v1666 = vunpack.c.l.b16 %v1584
        %v1667 = vunpack.c.l.b16 %v1585
        %v1668 = vunpack.c.l.b16 %v1586
        %v1669 = vunpack.c.l.b16 %v1587
        %v1670 = vunpack.c.l.b16 %v1588
        %v1671 = vunpack.c.l.b16 %v1589
        %v1672 = vunpack.c.l.b16 %v1590
        %v1673 = vunpack.c.l.b16 %v1591
        %v1674 = vunpack.c.l.b16 %v1592
        %v1675 = vunpack.c.l.b16 %v1593
        %v1676 = vunpack.c.l.b16 %v1594
        %v1677 = vunpack.c.l.b16 %v1595
        %v1678 = vunpack.c.l.b16 %v1596
        %v1679 = vunpack.c.l.b16 %v1597
        %v1680 = vpack.c.b16 %v1649, %v1648
        %v1681 = vpack.c.b16 %v1651, %v1650
        %v1682 = vpack.c.b16 %v1653, %v1652
        %v1683 = vpack.c.b16 %v1655, %v1654
        %v1684 = vpack.c.b16 %v1657, %v1656
        %v1685 = vpack.c.b16 %v1659, %v1658
        %v1686 = vpack.c.b16 %v1661, %v1660
        %v1687 = vpack.c.b16 %v1663, %v1662
        %v1688 = vpack.c.b16 %v1665, %v1664
        %v1689 = vpack.c.b16 %v1667, %v1666
        %v1690 = vpack.c.b16 %v1669, %v1668
        %v1691 = vpack.c.b16 %v1671, %v1670
        %v1692 = vpack.c.b16 %v1673, %v1672
        %v1693 = vpack.c.b16 %v1675, %v1674
        %v1694 = vpack.c.b16 %v1677, %v1676
        %v1695 = vpack.c.b16 %v1679, %v1678
        %1712 = vmatpush.bf16.msra.mxu0 %v1687
        %1713 = vmatpush.bf16.msra.mxu0 %v1686
        %1714 = vmatpush.bf16.msra.mxu0 %v1685
        %1715 = vmatpush.bf16.msra.mxu0 %v1684
        %1716 = vmatpush.bf16.msra.mxu0 %v1683
        %1717 = vmatpush.bf16.msra.mxu0 %v1682
        %1718 = vmatpush.bf16.msra.mxu0 %v1681
        %1719 = vmatpush.bf16.msra.mxu0 %v1680
        %1720 = vmatmul.bf16.gmra.mxu0 %v1605
        %v1721 = vpop.f32.mrf.mxu0
        %v1722 = vadd.f32 0.0, %v1721
        %v1723 = vpop.f32.mrf.mxu0
        %1724 = vdwg.mxu0
        %1725 = vmatpush.bf16.msra.mxu0 %v1695
        %1726 = vmatpush.bf16.msra.mxu0 %v1694
        %1727 = vmatpush.bf16.msra.mxu0 %v1693
        %1728 = vmatpush.bf16.msra.mxu0 %v1692
        %1729 = vmatpush.bf16.msra.mxu0 %v1691
        %1730 = vmatpush.bf16.msra.mxu0 %v1690
        %1731 = vmatpush.bf16.msra.mxu0 %v1689
        %1732 = vmatpush.bf16.msra.mxu0 %v1688
        %1733 = vmatmul.bf16.gmra.mxu0 %v1613
        %v1734 = vpop.f32.mrf.mxu0
        %v1735 = vadd.f32 %v1722, %v1734
        %v1736 = vpop.f32.mrf.mxu0
        %1737 = vdwg.mxu0
        %v1738 = vadd.f32 %v1558, %v1735
        %v1739 = vld [vmem:[#allocation2] sm:$0xf0]
        %v1740 = vld [vmem:[#allocation2 + $0x8] sm:$0xf0]
        %v1741 = vld [vmem:[#allocation2 + $0x10] sm:$0xf]
        %v1742 = vld [vmem:[#allocation2 + $0x18] sm:$0xf]
        %v1743 = vpack.c.bf16 %v1741, %v1739
        %v1744 = vpack.c.bf16 %v1742, %v1740
        %s1745 = scalar_lea.vmem [#allocation6], 512
        %v1746 = vld [vmem:[%s1745] sm:$0xf]
        %v1747 = vld [vmem:[%s1745 + $0x4] sm:$0xf]
        %v1748 = vld [vmem:[%s1745 + $0x8] sm:$0xf]
        %v1749 = vld [vmem:[%s1745 + $0xc] sm:$0xf]
        %v1750 = vld [vmem:[%s1745 + $0x10] sm:$0xf]
        %v1751 = vld [vmem:[%s1745 + $0x14] sm:$0xf]
        %v1752 = vld [vmem:[%s1745 + $0x18] sm:$0xf]
        %v1753 = vld [vmem:[%s1745 + $0x1c] sm:$0xf]
        %v1754 = vld [vmem:[%s1745 + $0x20] sm:$0xf]
        %v1755 = vld [vmem:[%s1745 + $0x24] sm:$0xf]
        %v1756 = vld [vmem:[%s1745 + $0x28] sm:$0xf]
        %v1757 = vld [vmem:[%s1745 + $0x2c] sm:$0xf]
        %v1758 = vld [vmem:[%s1745 + $0x30] sm:$0xf]
        %v1759 = vld [vmem:[%s1745 + $0x34] sm:$0xf]
        %v1760 = vld [vmem:[%s1745 + $0x38] sm:$0xf]
        %v1761 = vld [vmem:[%s1745 + $0x3c] sm:$0xf]
        %v1762 = vld [vmem:[%s1745 + $0x40] sm:$0xf]
        %v1763 = vld [vmem:[%s1745 + $0x44] sm:$0xf]
        %v1764 = vld [vmem:[%s1745 + $0x48] sm:$0xf]
        %v1765 = vld [vmem:[%s1745 + $0x4c] sm:$0xf]
        %v1766 = vld [vmem:[%s1745 + $0x50] sm:$0xf]
        %v1767 = vld [vmem:[%s1745 + $0x54] sm:$0xf]
        %v1768 = vld [vmem:[%s1745 + $0x58] sm:$0xf]
        %v1769 = vld [vmem:[%s1745 + $0x5c] sm:$0xf]
        %v1770 = vld [vmem:[%s1745 + $0x60] sm:$0xf]
        %v1771 = vld [vmem:[%s1745 + $0x64] sm:$0xf]
        %v1772 = vld [vmem:[%s1745 + $0x68] sm:$0xf]
        %v1773 = vld [vmem:[%s1745 + $0x6c] sm:$0xf]
        %v1774 = vld [vmem:[%s1745 + $0x70] sm:$0xf]
        %v1775 = vld [vmem:[%s1745 + $0x74] sm:$0xf]
        %v1776 = vld [vmem:[%s1745 + $0x78] sm:$0xf]
        %v1777 = vld [vmem:[%s1745 + $0x7c] sm:$0xf]
        %v1780 = vrot.slane %v1743, 2
        %v1781 = vrot.slane %v1744, 2
        %v1816 = vunpack.c.l.b16 %v1746
        %v1817 = vunpack.c.l.b16 %v1747
        %v1818 = vunpack.c.l.b16 %v1748
        %v1819 = vunpack.c.l.b16 %v1749
        %v1820 = vunpack.c.l.b16 %v1750
        %v1821 = vunpack.c.l.b16 %v1751
        %v1822 = vunpack.c.l.b16 %v1752
        %v1823 = vunpack.c.l.b16 %v1753
        %v1824 = vunpack.c.l.b16 %v1754
        %v1825 = vunpack.c.l.b16 %v1755
        %v1826 = vunpack.c.l.b16 %v1756
        %v1827 = vunpack.c.l.b16 %v1757
        %v1828 = vunpack.c.l.b16 %v1758
        %v1829 = vunpack.c.l.b16 %v1759
        %v1830 = vunpack.c.l.b16 %v1760
        %v1831 = vunpack.c.l.b16 %v1761
        %v1832 = vunpack.c.l.b16 %v1762
        %v1833 = vunpack.c.l.b16 %v1763
        %v1834 = vunpack.c.l.b16 %v1764
        %v1835 = vunpack.c.l.b16 %v1765
        %v1836 = vunpack.c.l.b16 %v1766
        %v1837 = vunpack.c.l.b16 %v1767
        %v1838 = vunpack.c.l.b16 %v1768
        %v1839 = vunpack.c.l.b16 %v1769
        %v1840 = vunpack.c.l.b16 %v1770
        %v1841 = vunpack.c.l.b16 %v1771
        %v1842 = vunpack.c.l.b16 %v1772
        %v1843 = vunpack.c.l.b16 %v1773
        %v1844 = vunpack.c.l.b16 %v1774
        %v1845 = vunpack.c.l.b16 %v1775
        %v1846 = vunpack.c.l.b16 %v1776
        %v1847 = vunpack.c.l.b16 %v1777
        %v1848 = vpack.c.b16 %v1817, %v1816
        %v1849 = vpack.c.b16 %v1819, %v1818
        %v1850 = vpack.c.b16 %v1821, %v1820
        %v1851 = vpack.c.b16 %v1823, %v1822
        %v1852 = vpack.c.b16 %v1825, %v1824
        %v1853 = vpack.c.b16 %v1827, %v1826
        %v1854 = vpack.c.b16 %v1829, %v1828
        %v1855 = vpack.c.b16 %v1831, %v1830
        %v1856 = vpack.c.b16 %v1833, %v1832
        %v1857 = vpack.c.b16 %v1835, %v1834
        %v1858 = vpack.c.b16 %v1837, %v1836
        %v1859 = vpack.c.b16 %v1839, %v1838
        %v1860 = vpack.c.b16 %v1841, %v1840
        %v1861 = vpack.c.b16 %v1843, %v1842
        %v1862 = vpack.c.b16 %v1845, %v1844
        %v1863 = vpack.c.b16 %v1847, %v1846
        %1880 = vmatpush.bf16.msra.mxu0 %v1855
        %1881 = vmatpush.bf16.msra.mxu0 %v1854
        %1882 = vmatpush.bf16.msra.mxu0 %v1853
        %1883 = vmatpush.bf16.msra.mxu0 %v1852
        %1884 = vmatpush.bf16.msra.mxu0 %v1851
        %1885 = vmatpush.bf16.msra.mxu0 %v1850
        %1886 = vmatpush.bf16.msra.mxu0 %v1849
        %1887 = vmatpush.bf16.msra.mxu0 %v1848
        %1888 = vmatmul.bf16.gmra.mxu0 %v1780
        %v1889 = vpop.f32.mrf.mxu0
        %v1890 = vadd.f32 0.0, %v1889
        %v1891 = vpop.f32.mrf.mxu0
        %1892 = vdwg.mxu0
        %1893 = vmatpush.bf16.msra.mxu0 %v1863
        %1894 = vmatpush.bf16.msra.mxu0 %v1862
        %1895 = vmatpush.bf16.msra.mxu0 %v1861
        %1896 = vmatpush.bf16.msra.mxu0 %v1860
        %1897 = vmatpush.bf16.msra.mxu0 %v1859
        %1898 = vmatpush.bf16.msra.mxu0 %v1858
        %1899 = vmatpush.bf16.msra.mxu0 %v1857
        %1900 = vmatpush.bf16.msra.mxu0 %v1856
        %1901 = vmatmul.bf16.gmra.mxu0 %v1781
        %v1902 = vpop.f32.mrf.mxu0
        %v1903 = vadd.f32 %v1890, %v1902
        %v1904 = vpop.f32.mrf.mxu0
        %1905 = vdwg.mxu0
        %v1906 = vadd.f32 %v1738, %v1903
        %v1907 = vld [vmem:[#allocation2] sm:$0xe0]
        %v1908 = vld [vmem:[#allocation2 + $0x8] sm:$0xe0]
        %v1909 = vld [vmem:[#allocation2 + $0x10] sm:$0x1f]
        %v1910 = vld [vmem:[#allocation2 + $0x18] sm:$0x1f]
        %v1911 = vpack.c.bf16 %v1909, %v1907
        %v1912 = vpack.c.bf16 %v1910, %v1908
        %s1913 = scalar_lea.vmem [#allocation6], 640
        %v1914 = vld [vmem:[%s1913] sm:$0xf]
        %v1915 = vld [vmem:[%s1913 + $0x4] sm:$0xf]
        %v1916 = vld [vmem:[%s1913 + $0x8] sm:$0xf]
        %v1917 = vld [vmem:[%s1913 + $0xc] sm:$0xf]
        %v1918 = vld [vmem:[%s1913 + $0x10] sm:$0xf]
        %v1919 = vld [vmem:[%s1913 + $0x14] sm:$0xf]
        %v1920 = vld [vmem:[%s1913 + $0x18] sm:$0xf]
        %v1921 = vld [vmem:[%s1913 + $0x1c] sm:$0xf]
        %v1922 = vld [vmem:[%s1913 + $0x20] sm:$0xf]
        %v1923 = vld [vmem:[%s1913 + $0x24] sm:$0xf]
        %v1924 = vld [vmem:[%s1913 + $0x28] sm:$0xf]
        %v1925 = vld [vmem:[%s1913 + $0x2c] sm:$0xf]
        %v1926 = vld [vmem:[%s1913 + $0x30] sm:$0xf]
        %v1927 = vld [vmem:[%s1913 + $0x34] sm:$0xf]
        %v1928 = vld [vmem:[%s1913 + $0x38] sm:$0xf]
        %v1929 = vld [vmem:[%s1913 + $0x3c] sm:$0xf]
        %v1930 = vld [vmem:[%s1913 + $0x40] sm:$0xf]
        %v1931 = vld [vmem:[%s1913 + $0x44] sm:$0xf]
        %v1932 = vld [vmem:[%s1913 + $0x48] sm:$0xf]
        %v1933 = vld [vmem:[%s1913 + $0x4c] sm:$0xf]
        %v1934 = vld [vmem:[%s1913 + $0x50] sm:$0xf]
        %v1935 = vld [vmem:[%s1913 + $0x54] sm:$0xf]
        %v1936 = vld [vmem:[%s1913 + $0x58] sm:$0xf]
        %v1937 = vld [vmem:[%s1913 + $0x5c] sm:$0xf]
        %v1938 = vld [vmem:[%s1913 + $0x60] sm:$0xf]
        %v1939 = vld [vmem:[%s1913 + $0x64] sm:$0xf]
        %v1940 = vld [vmem:[%s1913 + $0x68] sm:$0xf]
        %v1941 = vld [vmem:[%s1913 + $0x6c] sm:$0xf]
        %v1942 = vld [vmem:[%s1913 + $0x70] sm:$0xf]
        %v1943 = vld [vmem:[%s1913 + $0x74] sm:$0xf]
        %v1944 = vld [vmem:[%s1913 + $0x78] sm:$0xf]
        %v1945 = vld [vmem:[%s1913 + $0x7c] sm:$0xf]
        %v1947 = vshrl.u32 %v1911, 16
        %v1949 = vrot.slane %v1947, 2
        %v1950 = vshll.u32 %v1911, 16
        %v1952 = vrot.slane %v1950, 3
        %v1953 = vor.u32 %v1949, %v1952
        %v1955 = vshrl.u32 %v1912, 16
        %v1957 = vrot.slane %v1955, 2
        %v1958 = vshll.u32 %v1912, 16
        %v1960 = vrot.slane %v1958, 3
        %v1961 = vor.u32 %v1957, %v1960
        %v1996 = vunpack.c.l.b16 %v1914
        %v1997 = vunpack.c.l.b16 %v1915
        %v1998 = vunpack.c.l.b16 %v1916
        %v1999 = vunpack.c.l.b16 %v1917
        %v2000 = vunpack.c.l.b16 %v1918
        %v2001 = vunpack.c.l.b16 %v1919
        %v2002 = vunpack.c.l.b16 %v1920
        %v2003 = vunpack.c.l.b16 %v1921
        %v2004 = vunpack.c.l.b16 %v1922
        %v2005 = vunpack.c.l.b16 %v1923
        %v2006 = vunpack.c.l.b16 %v1924
        %v2007 = vunpack.c.l.b16 %v1925
        %v2008 = vunpack.c.l.b16 %v1926
        %v2009 = vunpack.c.l.b16 %v1927
        %v2010 = vunpack.c.l.b16 %v1928
        %v2011 = vunpack.c.l.b16 %v1929
        %v2012 = vunpack.c.l.b16 %v1930
        %v2013 = vunpack.c.l.b16 %v1931
        %v2014 = vunpack.c.l.b16 %v1932
        %v2015 = vunpack.c.l.b16 %v1933
        %v2016 = vunpack.c.l.b16 %v1934
        %v2017 = vunpack.c.l.b16 %v1935
        %v2018 = vunpack.c.l.b16 %v1936
        %v2019 = vunpack.c.l.b16 %v1937
        %v2020 = vunpack.c.l.b16 %v1938
        %v2021 = vunpack.c.l.b16 %v1939
        %v2022 = vunpack.c.l.b16 %v1940
        %v2023 = vunpack.c.l.b16 %v1941
        %v2024 = vunpack.c.l.b16 %v1942
        %v2025 = vunpack.c.l.b16 %v1943
        %v2026 = vunpack.c.l.b16 %v1944
        %v2027 = vunpack.c.l.b16 %v1945
        %v2028 = vpack.c.b16 %v1997, %v1996
        %v2029 = vpack.c.b16 %v1999, %v1998
        %v2030 = vpack.c.b16 %v2001, %v2000
        %v2031 = vpack.c.b16 %v2003, %v2002
        %v2032 = vpack.c.b16 %v2005, %v2004
        %v2033 = vpack.c.b16 %v2007, %v2006
        %v2034 = vpack.c.b16 %v2009, %v2008
        %v2035 = vpack.c.b16 %v2011, %v2010
        %v2036 = vpack.c.b16 %v2013, %v2012
        %v2037 = vpack.c.b16 %v2015, %v2014
        %v2038 = vpack.c.b16 %v2017, %v2016
        %v2039 = vpack.c.b16 %v2019, %v2018
        %v2040 = vpack.c.b16 %v2021, %v2020
        %v2041 = vpack.c.b16 %v2023, %v2022
        %v2042 = vpack.c.b16 %v2025, %v2024
        %v2043 = vpack.c.b16 %v2027, %v2026
        %2060 = vmatpush.bf16.msra.mxu0 %v2035
        %2061 = vmatpush.bf16.msra.mxu0 %v2034
        %2062 = vmatpush.bf16.msra.mxu0 %v2033
        %2063 = vmatpush.bf16.msra.mxu0 %v2032
        %2064 = vmatpush.bf16.msra.mxu0 %v2031
        %2065 = vmatpush.bf16.msra.mxu0 %v2030
        %2066 = vmatpush.bf16.msra.mxu0 %v2029
        %2067 = vmatpush.bf16.msra.mxu0 %v2028
        %2068 = vmatmul.bf16.gmra.mxu0 %v1953
        %v2069 = vpop.f32.mrf.mxu0
        %v2070 = vadd.f32 0.0, %v2069
        %v2071 = vpop.f32.mrf.mxu0
        %2072 = vdwg.mxu0
        %2073 = vmatpush.bf16.msra.mxu0 %v2043
        %2074 = vmatpush.bf16.msra.mxu0 %v2042
        %2075 = vmatpush.bf16.msra.mxu0 %v2041
        %2076 = vmatpush.bf16.msra.mxu0 %v2040
        %2077 = vmatpush.bf16.msra.mxu0 %v2039
        %2078 = vmatpush.bf16.msra.mxu0 %v2038
        %2079 = vmatpush.bf16.msra.mxu0 %v2037
        %2080 = vmatpush.bf16.msra.mxu0 %v2036
        %2081 = vmatmul.bf16.gmra.mxu0 %v1961
        %v2082 = vpop.f32.mrf.mxu0
        %v2083 = vadd.f32 %v2070, %v2082
        %v2084 = vpop.f32.mrf.mxu0
        %2085 = vdwg.mxu0
        %v2086 = vadd.f32 %v1906, %v2083
        %v2087 = vld [vmem:[#allocation2] sm:$0xc0]
        %v2088 = vld [vmem:[#allocation2 + $0x8] sm:$0xc0]
        %v2089 = vld [vmem:[#allocation2 + $0x10] sm:$0x3f]
        %v2090 = vld [vmem:[#allocation2 + $0x18] sm:$0x3f]
        %v2091 = vpack.c.bf16 %v2089, %v2087
        %v2092 = vpack.c.bf16 %v2090, %v2088
        %s2093 = scalar_lea.vmem [#allocation6], 768
        %v2094 = vld [vmem:[%s2093] sm:$0xf]
        %v2095 = vld [vmem:[%s2093 + $0x4] sm:$0xf]
        %v2096 = vld [vmem:[%s2093 + $0x8] sm:$0xf]
        %v2097 = vld [vmem:[%s2093 + $0xc] sm:$0xf]
        %v2098 = vld [vmem:[%s2093 + $0x10] sm:$0xf]
        %v2099 = vld [vmem:[%s2093 + $0x14] sm:$0xf]
        %v2100 = vld [vmem:[%s2093 + $0x18] sm:$0xf]
        %v2101 = vld [vmem:[%s2093 + $0x1c] sm:$0xf]
        %v2102 = vld [vmem:[%s2093 + $0x20] sm:$0xf]
        %v2103 = vld [vmem:[%s2093 + $0x24] sm:$0xf]
        %v2104 = vld [vmem:[%s2093 + $0x28] sm:$0xf]
        %v2105 = vld [vmem:[%s2093 + $0x2c] sm:$0xf]
        %v2106 = vld [vmem:[%s2093 + $0x30] sm:$0xf]
        %v2107 = vld [vmem:[%s2093 + $0x34] sm:$0xf]
        %v2108 = vld [vmem:[%s2093 + $0x38] sm:$0xf]
        %v2109 = vld [vmem:[%s2093 + $0x3c] sm:$0xf]
        %v2110 = vld [vmem:[%s2093 + $0x40] sm:$0xf]
        %v2111 = vld [vmem:[%s2093 + $0x44] sm:$0xf]
        %v2112 = vld [vmem:[%s2093 + $0x48] sm:$0xf]
        %v2113 = vld [vmem:[%s2093 + $0x4c] sm:$0xf]
        %v2114 = vld [vmem:[%s2093 + $0x50] sm:$0xf]
        %v2115 = vld [vmem:[%s2093 + $0x54] sm:$0xf]
        %v2116 = vld [vmem:[%s2093 + $0x58] sm:$0xf]
        %v2117 = vld [vmem:[%s2093 + $0x5c] sm:$0xf]
        %v2118 = vld [vmem:[%s2093 + $0x60] sm:$0xf]
        %v2119 = vld [vmem:[%s2093 + $0x64] sm:$0xf]
        %v2120 = vld [vmem:[%s2093 + $0x68] sm:$0xf]
        %v2121 = vld [vmem:[%s2093 + $0x6c] sm:$0xf]
        %v2122 = vld [vmem:[%s2093 + $0x70] sm:$0xf]
        %v2123 = vld [vmem:[%s2093 + $0x74] sm:$0xf]
        %v2124 = vld [vmem:[%s2093 + $0x78] sm:$0xf]
        %v2125 = vld [vmem:[%s2093 + $0x7c] sm:$0xf]
        %v2128 = vrot.slane %v2091, 3
        %v2129 = vrot.slane %v2092, 3
        %v2164 = vunpack.c.l.b16 %v2094
        %v2165 = vunpack.c.l.b16 %v2095
        %v2166 = vunpack.c.l.b16 %v2096
        %v2167 = vunpack.c.l.b16 %v2097
        %v2168 = vunpack.c.l.b16 %v2098
        %v2169 = vunpack.c.l.b16 %v2099
        %v2170 = vunpack.c.l.b16 %v2100
        %v2171 = vunpack.c.l.b16 %v2101
        %v2172 = vunpack.c.l.b16 %v2102
        %v2173 = vunpack.c.l.b16 %v2103
        %v2174 = vunpack.c.l.b16 %v2104
        %v2175 = vunpack.c.l.b16 %v2105
        %v2176 = vunpack.c.l.b16 %v2106
        %v2177 = vunpack.c.l.b16 %v2107
        %v2178 = vunpack.c.l.b16 %v2108
        %v2179 = vunpack.c.l.b16 %v2109
        %v2180 = vunpack.c.l.b16 %v2110
        %v2181 = vunpack.c.l.b16 %v2111
        %v2182 = vunpack.c.l.b16 %v2112
        %v2183 = vunpack.c.l.b16 %v2113
        %v2184 = vunpack.c.l.b16 %v2114
        %v2185 = vunpack.c.l.b16 %v2115
        %v2186 = vunpack.c.l.b16 %v2116
        %v2187 = vunpack.c.l.b16 %v2117
        %v2188 = vunpack.c.l.b16 %v2118
        %v2189 = vunpack.c.l.b16 %v2119
        %v2190 = vunpack.c.l.b16 %v2120
        %v2191 = vunpack.c.l.b16 %v2121
        %v2192 = vunpack.c.l.b16 %v2122
        %v2193 = vunpack.c.l.b16 %v2123
        %v2194 = vunpack.c.l.b16 %v2124
        %v2195 = vunpack.c.l.b16 %v2125
        %v2196 = vpack.c.b16 %v2165, %v2164
        %v2197 = vpack.c.b16 %v2167, %v2166
        %v2198 = vpack.c.b16 %v2169, %v2168
        %v2199 = vpack.c.b16 %v2171, %v2170
        %v2200 = vpack.c.b16 %v2173, %v2172
        %v2201 = vpack.c.b16 %v2175, %v2174
        %v2202 = vpack.c.b16 %v2177, %v2176
        %v2203 = vpack.c.b16 %v2179, %v2178
        %v2204 = vpack.c.b16 %v2181, %v2180
        %v2205 = vpack.c.b16 %v2183, %v2182
        %v2206 = vpack.c.b16 %v2185, %v2184
        %v2207 = vpack.c.b16 %v2187, %v2186
        %v2208 = vpack.c.b16 %v2189, %v2188
        %v2209 = vpack.c.b16 %v2191, %v2190
        %v2210 = vpack.c.b16 %v2193, %v2192
        %v2211 = vpack.c.b16 %v2195, %v2194
        %2228 = vmatpush.bf16.msra.mxu0 %v2203
        %2229 = vmatpush.bf16.msra.mxu0 %v2202
        %2230 = vmatpush.bf16.msra.mxu0 %v2201
        %2231 = vmatpush.bf16.msra.mxu0 %v2200
        %2232 = vmatpush.bf16.msra.mxu0 %v2199
        %2233 = vmatpush.bf16.msra.mxu0 %v2198
        %2234 = vmatpush.bf16.msra.mxu0 %v2197
        %2235 = vmatpush.bf16.msra.mxu0 %v2196
        %2236 = vmatmul.bf16.gmra.mxu0 %v2128
        %v2237 = vpop.f32.mrf.mxu0
        %v2238 = vadd.f32 0.0, %v2237
        %v2239 = vpop.f32.mrf.mxu0
        %2240 = vdwg.mxu0
        %2241 = vmatpush.bf16.msra.mxu0 %v2211
        %2242 = vmatpush.bf16.msra.mxu0 %v2210
        %2243 = vmatpush.bf16.msra.mxu0 %v2209
        %2244 = vmatpush.bf16.msra.mxu0 %v2208
        %2245 = vmatpush.bf16.msra.mxu0 %v2207
        %2246 = vmatpush.bf16.msra.mxu0 %v2206
        %2247 = vmatpush.bf16.msra.mxu0 %v2205
        %2248 = vmatpush.bf16.msra.mxu0 %v2204
        %2249 = vmatmul.bf16.gmra.mxu0 %v2129
        %v2250 = vpop.f32.mrf.mxu0
        %v2251 = vadd.f32 %v2238, %v2250
        %v2252 = vpop.f32.mrf.mxu0
        %2253 = vdwg.mxu0
        %v2254 = vadd.f32 %v2086, %v2251
        %v2255 = vxor.u32 %v2254, 2147483648
        %v2256 = vmul.f32 %v2255, 1.442695
        %v2257 = vpow.pop %v2256
        %v2258 = vadd.f32 %v2257, 1.0
        %v2259 = vrcp.pop %v2258
        %v2260 = vmul.f32 %v2258, %v2259
        %v2261 = vsub.f32 1.0, %v2260
        %v2262 = vmul.f32 %v2259, %v2261
        %v2263 = vadd.f32 %v2259, %v2262
        %vm2264 = vweird.f32 %v2258
        %vm2265 = vweird.f32 %v2259
        %vm2266 = vmor %vm2264, %vm2265
        %v2267 = vsel %vm2266, %v2259, %v2263
        %v2268 = vand.u32 2147483647, %v2258
        %vm2269 = vcmp.eq.f32.partialorder %v2268, 8.507059e+37
        %v2270 = vand.u32 %v2258, 2147483648
        %v2271 = vor.u32 1.1754944e-38, %v2270
        %v2272 = vsel %vm2269, %v2271, %v2267
        %v2273 = vmul.f32 1.0, %v2272
        %v2274 = vmul.f32 %v940, %v2273
        %v2275 = vmul.f32 %v941, %v2273
        %v2276 = vmul.f32 %v942, %v2273
        %v2277 = vmul.f32 %v943, %v2273
        %v2278 = vmul.f32 %v944, %v2273
        %v2279 = vmul.f32 %v945, %v2273
        %v2280 = vmul.f32 %v946, %v2273
        %v2281 = vmul.f32 %v947, %v2273
        %v2282 = vmul.f32 %v948, %v2273
        %v2283 = vmul.f32 %v949, %v2273
        %v2284 = vmul.f32 %v950, %v2273
        %v2285 = vmul.f32 %v951, %v2273
        %v2286 = vmul.f32 %v952, %v2273
        %v2287 = vmul.f32 %v953, %v2273
        %v2288 = vmul.f32 %v954, %v2273
        %v2289 = vmul.f32 %v955, %v2273
        %v2290 = vmul.f32 %v956, %v2273
        %v2291 = vmul.f32 %v957, %v2273
        %v2292 = vmul.f32 %v958, %v2273
        %v2293 = vmul.f32 %v959, %v2273
        %v2294 = vmul.f32 %v960, %v2273
        %v2295 = vmul.f32 %v961, %v2273
        %v2296 = vmul.f32 %v962, %v2273
        %v2297 = vmul.f32 %v963, %v2273
        %v2298 = vmul.f32 %v964, %v2273
        %v2299 = vmul.f32 %v965, %v2273
        %v2300 = vmul.f32 %v966, %v2273
        %v2301 = vmul.f32 %v967, %v2273
        %v2302 = vmul.f32 %v968, %v2273
        %v2303 = vmul.f32 %v969, %v2273
        %v2304 = vmul.f32 %v970, %v2273
        %v2305 = vmul.f32 %v971, %v2273
        %2306 = vst [vmem:[%s234] sm:$0xff] %v2274
        %2307 = vst [vmem:[%s234 + $0x8] sm:$0xff] %v2275
        %2308 = vst [vmem:[%s234 + $0x10] sm:$0xff] %v2276
        %2309 = vst [vmem:[%s234 + $0x18] sm:$0xff] %v2277
        %2310 = vst [vmem:[%s234 + $0x20] sm:$0xff] %v2278
        %2311 = vst [vmem:[%s234 + $0x28] sm:$0xff] %v2279
        %2312 = vst [vmem:[%s234 + $0x30] sm:$0xff] %v2280
        %2313 = vst [vmem:[%s234 + $0x38] sm:$0xff] %v2281
        %2314 = vst [vmem:[%s234 + $0x40] sm:$0xff] %v2282
        %2315 = vst [vmem:[%s234 + $0x48] sm:$0xff] %v2283
        %2316 = vst [vmem:[%s234 + $0x50] sm:$0xff] %v2284
        %2317 = vst [vmem:[%s234 + $0x58] sm:$0xff] %v2285
        %2318 = vst [vmem:[%s234 + $0x60] sm:$0xff] %v2286
        %2319 = vst [vmem:[%s234 + $0x68] sm:$0xff] %v2287
        %2320 = vst [vmem:[%s234 + $0x70] sm:$0xff] %v2288
        %2321 = vst [vmem:[%s234 + $0x78] sm:$0xff] %v2289
        %2322 = vst [vmem:[%s234 + $0x80] sm:$0xff] %v2290
        %2323 = vst [vmem:[%s234 + $0x88] sm:$0xff] %v2291
        %2324 = vst [vmem:[%s234 + $0x90] sm:$0xff] %v2292
        %2325 = vst [vmem:[%s234 + $0x98] sm:$0xff] %v2293
        %2326 = vst [vmem:[%s234 + $0xa0] sm:$0xff] %v2294
        %2327 = vst [vmem:[%s234 + $0xa8] sm:$0xff] %v2295
        %2328 = vst [vmem:[%s234 + $0xb0] sm:$0xff] %v2296
        %2329 = vst [vmem:[%s234 + $0xb8] sm:$0xff] %v2297
        %2330 = vst [vmem:[%s234 + $0xc0] sm:$0xff] %v2298
        %2331 = vst [vmem:[%s234 + $0xc8] sm:$0xff] %v2299
        %2332 = vst [vmem:[%s234 + $0xd0] sm:$0xff] %v2300
        %2333 = vst [vmem:[%s234 + $0xd8] sm:$0xff] %v2301
        %2334 = vst [vmem:[%s234 + $0xe0] sm:$0xff] %v2302
        %2335 = vst [vmem:[%s234 + $0xe8] sm:$0xff] %v2303
        %2336 = vst [vmem:[%s234 + $0xf0] sm:$0xff] %v2304
        %2337 = vst [vmem:[%s234 + $0xf8] sm:$0xff] %v2305
        %s2338 = sand.u32 %s119, 1
        %s2339 = scalar_lea.sflag [#allocation5], %s2338
        %s2340 = sand.u32 %s119, 1
        %s2341 = smul.addr %s2340, 256
        %s2342 = scalar_lea.vmem [#allocation8], %s2341
        // Predicated region
        $region45: #{tpu_custom_call.1} parent=35 // pred_check
          %p2343 = pneg %p129
        $region46: #{tpu_custom_call.1} parent=35 // pred_check_branch
          %2345 = sbr.rel (%p2343) target = $region48
        $region47: #{tpu_custom_call.1} parent=35 // pred_region
          %2347 = vsyncadd %s2339, 0
          %s2348 = smul.addr %s22, 32
          %s2349 = smul.addr %s2348, 8
          %s2350 = scalar_lea.hbm %s4, %s2349
          %s2351 = sshll.u32 %s2342, 4
          %s2352 = int_to_ptr.vmem [resolvable:$true] %s2351
          %s2353 = sshll.u32 %s2350, 4
          %s2354 = int_to_ptr.hbm [resolvable:$true] %s2353
          %2359 = dma.vmem_to_hbm [thread:$0]  %s2352, 4096, %s2354, %s2339, 128, 128, 8
        $region48: #{tpu_custom_call.1} parent=35 // pred_fallthru
          _
      $region36: #{tpu_custom_call.1} parent=5 // pred_fallthru
        _
      %p2360 = scmp.le.s32.totalorder 2, %s17
      // Predicated region
      $region49: #{tpu_custom_call.1} parent=5 // pred_check
        %p2361 = pneg %p2360
      $region50: #{tpu_custom_call.1} parent=5 // pred_check_branch
        %2363 = sbr.rel (%p2361) target = $region52
      $region51: #{tpu_custom_call.1} parent=5 // pred_region
        %s2364 = ssub.s32 %s17, 2
        // Predicated region
        $region53: #{tpu_custom_call.1} parent=51 // pred_check
          %p2365 = pneg %p135
        $region54: #{tpu_custom_call.1} parent=51 // pred_check_branch
          %2367 = sbr.rel (%p2365) target = $region56
        $region55: #{tpu_custom_call.1} parent=51 // pred_region
          %s2368 = sand.u32 %s120, 1
          %s2369 = scalar_lea.sflag [#allocation5], %s2368
          %s2370 = sand.u32 %s120, 1
          %s2371 = smul.addr %s2370, 256
          %s2372 = scalar_lea.vmem [#allocation8], %s2371
          %2374 = dma.done %s2369, 4096
        $region56: #{tpu_custom_call.1} parent=51 // pred_fallthru
          _
      $region52: #{tpu_custom_call.1} parent=5 // pred_fallthru
        _
    $region6: #{tpu_custom_call.1} parent=1 // loop_footer
      %s21 = sadd.s32 1, %s17
    $region7: #{tpu_custom_call.1} parent=1 // loop_footer_branch
      %16 = sbr.rel target = $region3
    $region8: #{tpu_custom_call.1} parent=1 // loop_exit
      _
    %2375 = vsyncpa [#allocation4], 1
    %s2376 = scalar_lea.sflag [#allocation4], 1
    %2377 = vsyncpa %s2376, 1
    %2378 = vsyncpa [#allocation7], 1
    %2379 = vsyncpa [#allocation5], 1
    %s2380 = scalar_lea.sflag [#allocation5], 1
    %2381 = vsyncpa %s2380, 1

</llo_original>
